<compile_context>
chip_gen: v6e
topology: v6e:2x2x1
jax: 0.10.0
libtpu: 0.0.40
codegen_flags: <defaults>
</compile_context>

<pallas_src>
from functools import partial

import jax
import jax.numpy as jnp
from jax.experimental import pallas as pl
from jax.experimental.pallas import tpu as pltpu


def _attention1d_kernel(x_ref, wqkv_ref, wo_ref, bo_ref, out_ref, *,
                        heads, dim_head, ncl_in_kernel):
    hidden = heads * dim_head
    cdt = wqkv_ref.dtype                    # MXU operand dtype (bf16); accum is f32

    if ncl_in_kernel:
        tb, dim, L = x_ref.shape
        # NCL -> NLC on the small VMEM tile (XLU); no wrapper-side HBM transpose.
        x_nlc = jnp.swapaxes(x_ref[...], 1, 2)                 # (tb, L, C) f32
    else:
        tb, L, dim = x_ref.shape
        x_nlc = x_ref[...]

    x2d = x_nlc.reshape(tb * L, dim).astype(cdt)

    # Fused q/k/v projection: 1x1 Conv1d == per-position Linear. One lane-dense
    # MXU pass; the softmax scale is pre-folded into the q columns of the weight.
    qkv = jnp.dot(x2d, wqkv_ref[...],
                  preferred_element_type=jnp.float32)          # (tb*L, 3*hidden) f32

    # `heads` is small & static -> unrolled. sim/p of one head die before the
    # next head's are built; per-head outputs are collected and folded into a
    # single full-depth output projection below.
    o_heads = []
    for h in range(heads):
        lo = h * dim_head
        q_h = qkv[:, lo:lo + dim_head].reshape(tb, L, dim_head).astype(cdt)
        k_h = qkv[:, hidden + lo:hidden + lo + dim_head] \
            .reshape(tb, L, dim_head).astype(cdt)
        v_h = qkv[:, 2 * hidden + lo:2 * hidden + lo + dim_head] \
            .reshape(tb, L, dim_head).astype(cdt)

        # sim[b,i,j] = sum_d q[b,i,d] * k[b,j,d]   (scale pre-folded into Wq)
        sim = jnp.einsum('bid,bjd->bij', q_h, k_h,
                         preferred_element_type=jnp.float32)   # (tb, L, L) f32

        # Numerically stable softmax over keys, f32 throughout (v5e-safe), with
        # the normalization deferred past the PV matmul.
        sim_max = jnp.max(sim, axis=-1, keepdims=True)
        p = jnp.exp(sim - sim_max)
        denom = jnp.sum(p, axis=-1, keepdims=True)             # (tb, L, 1)

        o_h = jnp.einsum('bij,bjd->bid', p.astype(cdt), v_h,
                         preferred_element_type=jnp.float32)   # (tb, L, Dh) f32
        o_heads.append(o_h * pl.reciprocal(denom, approx=True))

    # 'b h l c -> b (h c) l' channel order == heads concatenated along the
    # feature axis; ONE (tb*L, hidden) @ (hidden, C) projection (contraction
    # depth = hidden fills the MXU instead of `heads` shallow K=Dh passes).
    o_all = jnp.concatenate(o_heads, axis=-1).reshape(tb * L, hidden)
    y = jnp.dot(o_all.astype(cdt), wo_ref[...],
                preferred_element_type=jnp.float32)            # (tb*L, C) f32
    y = y + bo_ref[...].astype(jnp.float32)                    # to_out bias

    y = y.reshape(tb, L, dim)
    if ncl_in_kernel:
        y = jnp.swapaxes(y, 1, 2)                              # NLC -> NCL
    out_ref[...] = y.astype(out_ref.dtype)


def _pick_batch_block(B, L, dim, hidden, *, target_rows=512,
                      vmem_budget_bytes=16 * 1024 * 1024):
    """How many batch elements to fold per grid step.

    Goals: (a) never a single grid step when B >= 2, so the 'parallel' batch
    axis can feed v7x's two TensorCores and keep input/output DMA pipelining
    alive; (b) present ~512 rows to the projection matmuls (fills a 256x256
    MXU pass on v6e/v7x, amortizes per-step overhead); (c) keep the per-step
    VMEM footprint well inside v7x's 64 MiB.
    """
    divisors = [d for d in range(1, B + 1) if B % d == 0]
    candidates = [d for d in divisors if d < B] or [B]     # grid >= 2 when B >= 2

    def vmem_bytes(tb):
        rows = tb * L
        return (2 * tb * dim * L * 4          # x block (f32, double-buffered)
                + rows * 3 * hidden * 6       # fused qkv f32 + bf16 per-head views
                + 2 * tb * L * L * 4          # sim / p (one head live at a time)
                + rows * hidden * 6           # concatenated head outputs f32 + bf16
                + 2 * tb * dim * L * 8)       # y f32 + output block (double-buffered)

    fitting = [d for d in candidates if vmem_bytes(d) <= vmem_budget_bytes]
    if not fitting:
        # TODO(synk): flash-style key tiling of `sim` for very long sequences;
        # until then fall back to one batch element per grid step.
        return 1
    hit = [d for d in fitting if d * L >= target_rows]
    return hit[0] if hit else fitting[-1]


def attention1d(x, w_qkv, w_out, b_out, *, heads=4, dim_head=32,
                compute_dtype=jnp.bfloat16):
    """Attention1d forward.

    x:      (B, C, L)               -- NCL, like the PyTorch module
    w_qkv:  (3*heads*dim_head, C)   -- to_qkv.weight[:, :, 0]  (Conv1d, k=1, no bias)
    w_out:  (C, heads*dim_head)     -- to_out.weight[:, :, 0]
    b_out:  (C,)                    -- to_out.bias
    """
    B, C, L = x.shape
    hidden = heads * dim_head
    assert w_qkv.shape == (3 * hidden, C)
    assert w_out.shape == (C, hidden)
    scale = dim_head ** (-0.5)

    # Parameter prep: fold scale into Wq exactly once; transpose to (in, out).
    wqkv_t = jnp.concatenate([w_qkv[:hidden] * scale, w_qkv[hidden:]], axis=0)
    wqkv_t = wqkv_t.T.astype(compute_dtype)                # (C, 3*hidden)
    wo_t = w_out.T.astype(compute_dtype)                   # (hidden, C)
    bo = b_out.reshape(1, C).astype(jnp.float32)           # bias kept in f32

    tb = _pick_batch_block(B, L, C, hidden)
    grid = (B // tb,)
    cparams = pltpu.CompilerParams(dimension_semantics=("parallel",))
    weight_specs = [
        pl.BlockSpec((C, 3 * hidden), lambda b: (0, 0)),   # fused Wqkv^T (scaled)
        pl.BlockSpec((hidden, C), lambda b: (0, 0)),       # Wo^T
        pl.BlockSpec((1, C), lambda b: (0, 0)),            # to_out bias
    ]

    def run(ncl_in_kernel):
        kernel = partial(_attention1d_kernel, heads=heads, dim_head=dim_head,
                         ncl_in_kernel=ncl_in_kernel)
        if ncl_in_kernel:
            # Kernel consumes and produces the module's NCL layout directly;
            # the (C, L) <-> (L, C) flip happens on the small VMEM tile.
            x_in, blk = x, (tb, C, L)
            out_shape = jax.ShapeDtypeStruct((B, C, L), x.dtype)
        else:
            # Fallback: previously verified wrapper-transposed NLC layout.
            x_in, blk = jnp.transpose(x, (0, 2, 1)), (tb, L, C)
            out_shape = jax.ShapeDtypeStruct((B, L, C), x.dtype)
        y = pl.pallas_call(
            kernel,
            out_shape=out_shape,
            grid=grid,
            in_specs=[pl.BlockSpec(blk, lambda b: (b, 0, 0))] + weight_specs,
            out_specs=pl.BlockSpec(blk, lambda b: (b, 0, 0)),
            compiler_params=cparams,
        )(x_in, wqkv_t, wo_t, bo)
        if not ncl_in_kernel:
            y = jnp.transpose(y, (0, 2, 1))                # back to (B, C, L)
        return jax.block_until_ready(y)

    try:
        return run(ncl_in_kernel=True)
    except Exception:
        # TODO(synk): drop this fallback once in-kernel small-tile (C, L)
        # transposes are guaranteed by the deployed Mosaic version.
        return run(ncl_in_kernel=False)


def _reference(x, w_qkv, w_out, b_out, *, heads, dim_head):
    """Pure-JAX mirror of the PyTorch Attention1d.forward (f32 throughout)."""
    scale = dim_head ** (-0.5)
    hidden = heads * dim_head
    B, C, L = x.shape

    qkv = jnp.einsum('oc,bcl->bol', w_qkv, x)              # Conv1d k=1, no bias
    q, k, v = jnp.split(qkv, 3, axis=1)                    # (B, hidden, L) each

    def split_heads(t):                                    # 'b (h c) l -> b h c l'
        return t.reshape(B, heads, dim_head, L)

    q, k, v = map(split_heads, (q, k, v))
    q = q * scale
    sim = jnp.einsum('bhdi,bhdj->bhij', q, k)
    attn = jax.nn.softmax(sim, axis=-1)
    out = jnp.einsum('bhij,bhdj->bhid', attn, v)           # (B, h, L, d)
    out = out.transpose(0, 1, 3, 2).reshape(B, hidden, L)  # 'b h l c -> b (h c) l'
    return jnp.einsum('oc,bcl->bol', w_out, out) + b_out[None, :, None]


if __name__ == "__main__":
    # Small shapes consistent with the module: x is (batch, channels, length);
    # module defaults heads=4, dim_head=32 -> hidden_dim = 128.
    B, C, L = 4, 32, 16
    heads, dim_head = 4, 32
    hidden = heads * dim_head

    key = jax.random.PRNGKey(0)
    kx, kqkv, ko, kb = jax.random.split(key, 4)

    x = jax.random.normal(kx, (B, C, L), dtype=jnp.float32)
    s = 0.05
    w_qkv = s * jax.random.normal(kqkv, (3 * hidden, C), dtype=jnp.float32)
    w_out = s * jax.random.normal(ko, (C, hidden), dtype=jnp.float32)
    b_out = s * jax.random.normal(kb, (C,), dtype=jnp.float32)

    out = attention1d(x, w_qkv, w_out, b_out, heads=heads, dim_head=dim_head)
    out = jax.block_until_ready(out)

    ref = _reference(x, w_qkv, w_out, b_out, heads=heads, dim_head=dim_head)
    assert out.shape == (B, C, L)
    err = float(jnp.max(jnp.abs(out.astype(jnp.float32) - ref)))
    # bf16 MXU operands + approx reciprocal -> relaxed (but still tight) tolerance.
    assert jnp.allclose(out.astype(jnp.float32), ref, atol=1e-2, rtol=1e-2), \
        f"mismatch vs reference, max abs err={err}"

    print("KERNEL_OK")
</pallas_src>

<mosaic_0001>
module attributes {stable_mosaic.version = 11 : i64} {
  func.func @_attention1d_kernel(%arg0: i32, %arg1: memref<2x32x16xf32, #tpu.memory_space<vmem>>, %arg2: memref<32x384xbf16, #tpu.memory_space<vmem>>, %arg3: memref<128x32xbf16, #tpu.memory_space<vmem>>, %arg4: memref<1x32xf32, #tpu.memory_space<vmem>>, %arg5: memref<2x32x16xf32, #tpu.memory_space<vmem>>) attributes {dimension_semantics = [#tpu.dimension_semantics<parallel>], iteration_bounds = array<i64: 2>, scalar_prefetch = 0 : i64, scratch_operands = 0 : i64, tpu.core_type = #tpu.core_type<tc>, window_params = [{transform_indices = @transform_0, window_bounds = array<i64: 2, 32, 16>}, {pipeline_mode = #tpu.pipeline_mode<synchronous>, transform_indices = @transform_1, window_bounds = array<i64: 32, 384>}, {pipeline_mode = #tpu.pipeline_mode<synchronous>, transform_indices = @transform_2, window_bounds = array<i64: 128, 32>}, {pipeline_mode = #tpu.pipeline_mode<synchronous>, transform_indices = @transform_3, window_bounds = array<i64: 1, 32>}, {transform_indices = @transform_4, window_bounds = array<i64: 2, 32, 16>}]} {
    %c0 = arith.constant 0 : index
    %c0_0 = arith.constant 0 : index
    %c0_1 = arith.constant 0 : index
    %0 = vector.load %arg1[%c0, %c0_0, %c0_1] : memref<2x32x16xf32, #tpu.memory_space<vmem>>, vector<2x32x16xf32>
    %1 = tpu.transpose %0, [0, 2, 1] : vector<2x32x16xf32> -> vector<2x16x32xf32>
    %2 = vector.shape_cast %1 : vector<2x16x32xf32> to vector<32x32xf32>
    %3 = arith.truncf %2 : vector<32x32xf32> to vector<32x32xbf16>
    %c0_2 = arith.constant 0 : index
    %c0_3 = arith.constant 0 : index
    %4 = vector.load %arg2[%c0_2, %c0_3] : memref<32x384xbf16, #tpu.memory_space<vmem>>, vector<32x384xbf16>
    %cst = arith.constant dense<0.000000e+00> : vector<32x384xf32>
    %5 = tpu.matmul %3, %4, %cst {dimension_numbers = #tpu.dot_dimension_numbers<[1], [0], [0], [1], [0, 0, 1, 1], [], []>} : vector<32x32xbf16>, vector<32x384xbf16>, vector<32x384xf32> -> vector<32x384xf32>
    %6 = vector.extract_strided_slice %5 {offsets = [0, 0], sizes = [32, 32], strides = [1, 1]} : vector<32x384xf32> to vector<32x32xf32>
    %7 = vector.shape_cast %6 : vector<32x32xf32> to vector<2x16x32xf32>
    %8 = arith.truncf %7 : vector<2x16x32xf32> to vector<2x16x32xbf16>
    %9 = vector.extract_strided_slice %5 {offsets = [0, 128], sizes = [32, 32], strides = [1, 1]} : vector<32x384xf32> to vector<32x32xf32>
    %10 = vector.shape_cast %9 : vector<32x32xf32> to vector<2x16x32xf32>
    %11 = arith.truncf %10 : vector<2x16x32xf32> to vector<2x16x32xbf16>
    %12 = vector.extract_strided_slice %5 {offsets = [0, 256], sizes = [32, 32], strides = [1, 1]} : vector<32x384xf32> to vector<32x32xf32>
    %13 = vector.shape_cast %12 : vector<32x32xf32> to vector<2x16x32xf32>
    %14 = arith.truncf %13 : vector<2x16x32xf32> to vector<2x16x32xbf16>
    "tpu.trace_start"() <{level = 10 : i32, message = "bid,bjd->bij"}> : () -> ()
    %cst_4 = arith.constant dense<0.000000e+00> : vector<2x16x16xf32>
    %15 = tpu.matmul %8, %11, %cst_4 {dimension_numbers = #tpu.dot_dimension_numbers<[2], [2], [1], [1], [0, 0, 0, 1, 1, 1], [0], [0]>} : vector<2x16x32xbf16>, vector<2x16x32xbf16>, vector<2x16x16xf32> -> vector<2x16x16xf32>
    "tpu.trace_stop"() : () -> ()
    %cst_5 = arith.constant dense<0xFF800000> : vector<2x16xf32>
    %16 = vector.multi_reduction <maximumf>, %15, %cst_5 [2] : vector<2x16x16xf32> to vector<2x16xf32>
    %17 = vector.shape_cast %16 : vector<2x16xf32> to vector<2x16x1xf32>
    %18 = vector.broadcast %17 : vector<2x16x1xf32> to vector<2x16x16xf32>
    %19 = arith.subf %15, %18 : vector<2x16x16xf32>
    %20 = math.exp %19 : vector<2x16x16xf32>
    %cst_6 = arith.constant dense<0.000000e+00> : vector<2x16xf32>
    %21 = vector.multi_reduction <add>, %20, %cst_6 [2] : vector<2x16x16xf32> to vector<2x16xf32>
    %22 = vector.shape_cast %21 : vector<2x16xf32> to vector<2x16x1xf32>
    %23 = arith.truncf %20 : vector<2x16x16xf32> to vector<2x16x16xbf16>
    "tpu.trace_start"() <{level = 10 : i32, message = "bij,bjd->bid"}> : () -> ()
    %cst_7 = arith.constant dense<0.000000e+00> : vector<2x16x32xf32>
    %24 = tpu.matmul %23, %14, %cst_7 {dimension_numbers = #tpu.dot_dimension_numbers<[2], [1], [1], [2], [0, 0, 0, 1, 1, 2], [0], [0]>} : vector<2x16x16xbf16>, vector<2x16x32xbf16>, vector<2x16x32xf32> -> vector<2x16x32xf32>
    "tpu.trace_stop"() : () -> ()
    %25 = tpu.reciprocal %22 {approx = true} : vector<2x16x1xf32> -> vector<2x16x1xf32>
    %26 = vector.broadcast %25 : vector<2x16x1xf32> to vector<2x16x32xf32>
    %27 = arith.mulf %24, %26 : vector<2x16x32xf32>
    %28 = vector.extract_strided_slice %5 {offsets = [0, 32], sizes = [32, 32], strides = [1, 1]} : vector<32x384xf32> to vector<32x32xf32>
    %29 = vector.shape_cast %28 : vector<32x32xf32> to vector<2x16x32xf32>
    %30 = arith.truncf %29 : vector<2x16x32xf32> to vector<2x16x32xbf16>
    %31 = vector.extract_strided_slice %5 {offsets = [0, 160], sizes = [32, 32], strides = [1, 1]} : vector<32x384xf32> to vector<32x32xf32>
    %32 = vector.shape_cast %31 : vector<32x32xf32> to vector<2x16x32xf32>
    %33 = arith.truncf %32 : vector<2x16x32xf32> to vector<2x16x32xbf16>
    %34 = vector.extract_strided_slice %5 {offsets = [0, 288], sizes = [32, 32], strides = [1, 1]} : vector<32x384xf32> to vector<32x32xf32>
    %35 = vector.shape_cast %34 : vector<32x32xf32> to vector<2x16x32xf32>
    %36 = arith.truncf %35 : vector<2x16x32xf32> to vector<2x16x32xbf16>
    "tpu.trace_start"() <{level = 10 : i32, message = "bid,bjd->bij"}> : () -> ()
    %cst_8 = arith.constant dense<0.000000e+00> : vector<2x16x16xf32>
    %37 = tpu.matmul %30, %33, %cst_8 {dimension_numbers = #tpu.dot_dimension_numbers<[2], [2], [1], [1], [0, 0, 0, 1, 1, 1], [0], [0]>} : vector<2x16x32xbf16>, vector<2x16x32xbf16>, vector<2x16x16xf32> -> vector<2x16x16xf32>
    "tpu.trace_stop"() : () -> ()
    %cst_9 = arith.constant dense<0xFF800000> : vector<2x16xf32>
    %38 = vector.multi_reduction <maximumf>, %37, %cst_9 [2] : vector<2x16x16xf32> to vector<2x16xf32>
    %39 = vector.shape_cast %38 : vector<2x16xf32> to vector<2x16x1xf32>
    %40 = vector.broadcast %39 : vector<2x16x1xf32> to vector<2x16x16xf32>
    %41 = arith.subf %37, %40 : vector<2x16x16xf32>
    %42 = math.exp %41 : vector<2x16x16xf32>
    %cst_10 = arith.constant dense<0.000000e+00> : vector<2x16xf32>
    %43 = vector.multi_reduction <add>, %42, %cst_10 [2] : vector<2x16x16xf32> to vector<2x16xf32>
    %44 = vector.shape_cast %43 : vector<2x16xf32> to vector<2x16x1xf32>
    %45 = arith.truncf %42 : vector<2x16x16xf32> to vector<2x16x16xbf16>
    "tpu.trace_start"() <{level = 10 : i32, message = "bij,bjd->bid"}> : () -> ()
    %cst_11 = arith.constant dense<0.000000e+00> : vector<2x16x32xf32>
    %46 = tpu.matmul %45, %36, %cst_11 {dimension_numbers = #tpu.dot_dimension_numbers<[2], [1], [1], [2], [0, 0, 0, 1, 1, 2], [0], [0]>} : vector<2x16x16xbf16>, vector<2x16x32xbf16>, vector<2x16x32xf32> -> vector<2x16x32xf32>
    "tpu.trace_stop"() : () -> ()
    %47 = tpu.reciprocal %44 {approx = true} : vector<2x16x1xf32> -> vector<2x16x1xf32>
    %48 = vector.broadcast %47 : vector<2x16x1xf32> to vector<2x16x32xf32>
    %49 = arith.mulf %46, %48 : vector<2x16x32xf32>
    %50 = vector.extract_strided_slice %5 {offsets = [0, 64], sizes = [32, 32], strides = [1, 1]} : vector<32x384xf32> to vector<32x32xf32>
    %51 = vector.shape_cast %50 : vector<32x32xf32> to vector<2x16x32xf32>
    %52 = arith.truncf %51 : vector<2x16x32xf32> to vector<2x16x32xbf16>
    %53 = vector.extract_strided_slice %5 {offsets = [0, 192], sizes = [32, 32], strides = [1, 1]} : vector<32x384xf32> to vector<32x32xf32>
    %54 = vector.shape_cast %53 : vector<32x32xf32> to vector<2x16x32xf32>
    %55 = arith.truncf %54 : vector<2x16x32xf32> to vector<2x16x32xbf16>
    %56 = vector.extract_strided_slice %5 {offsets = [0, 320], sizes = [32, 32], strides = [1, 1]} : vector<32x384xf32> to vector<32x32xf32>
    %57 = vector.shape_cast %56 : vector<32x32xf32> to vector<2x16x32xf32>
    %58 = arith.truncf %57 : vector<2x16x32xf32> to vector<2x16x32xbf16>
    "tpu.trace_start"() <{level = 10 : i32, message = "bid,bjd->bij"}> : () -> ()
    %cst_12 = arith.constant dense<0.000000e+00> : vector<2x16x16xf32>
    %59 = tpu.matmul %52, %55, %cst_12 {dimension_numbers = #tpu.dot_dimension_numbers<[2], [2], [1], [1], [0, 0, 0, 1, 1, 1], [0], [0]>} : vector<2x16x32xbf16>, vector<2x16x32xbf16>, vector<2x16x16xf32> -> vector<2x16x16xf32>
    "tpu.trace_stop"() : () -> ()
    %cst_13 = arith.constant dense<0xFF800000> : vector<2x16xf32>
    %60 = vector.multi_reduction <maximumf>, %59, %cst_13 [2] : vector<2x16x16xf32> to vector<2x16xf32>
    %61 = vector.shape_cast %60 : vector<2x16xf32> to vector<2x16x1xf32>
    %62 = vector.broadcast %61 : vector<2x16x1xf32> to vector<2x16x16xf32>
    %63 = arith.subf %59, %62 : vector<2x16x16xf32>
    %64 = math.exp %63 : vector<2x16x16xf32>
    %cst_14 = arith.constant dense<0.000000e+00> : vector<2x16xf32>
    %65 = vector.multi_reduction <add>, %64, %cst_14 [2] : vector<2x16x16xf32> to vector<2x16xf32>
    %66 = vector.shape_cast %65 : vector<2x16xf32> to vector<2x16x1xf32>
    %67 = arith.truncf %64 : vector<2x16x16xf32> to vector<2x16x16xbf16>
    "tpu.trace_start"() <{level = 10 : i32, message = "bij,bjd->bid"}> : () -> ()
    %cst_15 = arith.constant dense<0.000000e+00> : vector<2x16x32xf32>
    %68 = tpu.matmul %67, %58, %cst_15 {dimension_numbers = #tpu.dot_dimension_numbers<[2], [1], [1], [2], [0, 0, 0, 1, 1, 2], [0], [0]>} : vector<2x16x16xbf16>, vector<2x16x32xbf16>, vector<2x16x32xf32> -> vector<2x16x32xf32>
    "tpu.trace_stop"() : () -> ()
    %69 = tpu.reciprocal %66 {approx = true} : vector<2x16x1xf32> -> vector<2x16x1xf32>
    %70 = vector.broadcast %69 : vector<2x16x1xf32> to vector<2x16x32xf32>
    %71 = arith.mulf %68, %70 : vector<2x16x32xf32>
    %72 = vector.extract_strided_slice %5 {offsets = [0, 96], sizes = [32, 32], strides = [1, 1]} : vector<32x384xf32> to vector<32x32xf32>
    %73 = vector.shape_cast %72 : vector<32x32xf32> to vector<2x16x32xf32>
    %74 = arith.truncf %73 : vector<2x16x32xf32> to vector<2x16x32xbf16>
    %75 = vector.extract_strided_slice %5 {offsets = [0, 224], sizes = [32, 32], strides = [1, 1]} : vector<32x384xf32> to vector<32x32xf32>
    %76 = vector.shape_cast %75 : vector<32x32xf32> to vector<2x16x32xf32>
    %77 = arith.truncf %76 : vector<2x16x32xf32> to vector<2x16x32xbf16>
    %78 = vector.extract_strided_slice %5 {offsets = [0, 352], sizes = [32, 32], strides = [1, 1]} : vector<32x384xf32> to vector<32x32xf32>
    %79 = vector.shape_cast %78 : vector<32x32xf32> to vector<2x16x32xf32>
    %80 = arith.truncf %79 : vector<2x16x32xf32> to vector<2x16x32xbf16>
    "tpu.trace_start"() <{level = 10 : i32, message = "bid,bjd->bij"}> : () -> ()
    %cst_16 = arith.constant dense<0.000000e+00> : vector<2x16x16xf32>
    %81 = tpu.matmul %74, %77, %cst_16 {dimension_numbers = #tpu.dot_dimension_numbers<[2], [2], [1], [1], [0, 0, 0, 1, 1, 1], [0], [0]>} : vector<2x16x32xbf16>, vector<2x16x32xbf16>, vector<2x16x16xf32> -> vector<2x16x16xf32>
    "tpu.trace_stop"() : () -> ()
    %cst_17 = arith.constant dense<0xFF800000> : vector<2x16xf32>
    %82 = vector.multi_reduction <maximumf>, %81, %cst_17 [2] : vector<2x16x16xf32> to vector<2x16xf32>
    %83 = vector.shape_cast %82 : vector<2x16xf32> to vector<2x16x1xf32>
    %84 = vector.broadcast %83 : vector<2x16x1xf32> to vector<2x16x16xf32>
    %85 = arith.subf %81, %84 : vector<2x16x16xf32>
    %86 = math.exp %85 : vector<2x16x16xf32>
    %cst_18 = arith.constant dense<0.000000e+00> : vector<2x16xf32>
    %87 = vector.multi_reduction <add>, %86, %cst_18 [2] : vector<2x16x16xf32> to vector<2x16xf32>
    %88 = vector.shape_cast %87 : vector<2x16xf32> to vector<2x16x1xf32>
    %89 = arith.truncf %86 : vector<2x16x16xf32> to vector<2x16x16xbf16>
    "tpu.trace_start"() <{level = 10 : i32, message = "bij,bjd->bid"}> : () -> ()
    %cst_19 = arith.constant dense<0.000000e+00> : vector<2x16x32xf32>
    %90 = tpu.matmul %89, %80, %cst_19 {dimension_numbers = #tpu.dot_dimension_numbers<[2], [1], [1], [2], [0, 0, 0, 1, 1, 2], [0], [0]>} : vector<2x16x16xbf16>, vector<2x16x32xbf16>, vector<2x16x32xf32> -> vector<2x16x32xf32>
    "tpu.trace_stop"() : () -> ()
    %91 = tpu.reciprocal %88 {approx = true} : vector<2x16x1xf32> -> vector<2x16x1xf32>
    %92 = vector.broadcast %91 : vector<2x16x1xf32> to vector<2x16x32xf32>
    %93 = arith.mulf %90, %92 : vector<2x16x32xf32>
    %94 = tpu.concatenate %27, %49, %71, %93 in 2 : vector<2x16x32xf32>, vector<2x16x32xf32>, vector<2x16x32xf32>, vector<2x16x32xf32> -> vector<2x16x128xf32>
    %95 = vector.shape_cast %94 : vector<2x16x128xf32> to vector<32x128xf32>
    %96 = arith.truncf %95 : vector<32x128xf32> to vector<32x128xbf16>
    %c0_20 = arith.constant 0 : index
    %c0_21 = arith.constant 0 : index
    %97 = vector.load %arg3[%c0_20, %c0_21] : memref<128x32xbf16, #tpu.memory_space<vmem>>, vector<128x32xbf16>
    %cst_22 = arith.constant dense<0.000000e+00> : vector<32x32xf32>
    %98 = tpu.matmul %96, %97, %cst_22 {dimension_numbers = #tpu.dot_dimension_numbers<[1], [0], [0], [1], [0, 0, 1, 1], [], []>} : vector<32x128xbf16>, vector<128x32xbf16>, vector<32x32xf32> -> vector<32x32xf32>
    %c0_23 = arith.constant 0 : index
    %c0_24 = arith.constant 0 : index
    %99 = vector.load %arg4[%c0_23, %c0_24] : memref<1x32xf32, #tpu.memory_space<vmem>>, vector<1x32xf32>
    %100 = vector.broadcast %99 : vector<1x32xf32> to vector<32x32xf32>
    %101 = arith.addf %98, %100 : vector<32x32xf32>
    %102 = vector.shape_cast %101 : vector<32x32xf32> to vector<2x16x32xf32>
    %103 = tpu.transpose %102, [0, 2, 1] : vector<2x16x32xf32> -> vector<2x32x16xf32>
    %c0_25 = arith.constant 0 : index
    %c0_26 = arith.constant 0 : index
    %c0_27 = arith.constant 0 : index
    %104 = vector.load %arg5[%c0_25, %c0_26, %c0_27] : memref<2x32x16xf32, #tpu.memory_space<vmem>>, vector<2x32x16xf32>
    tpu.vector_store %arg5[%c0_25, %c0_26, %c0_27], %103 {strides = array<i32>} : memref<2x32x16xf32, #tpu.memory_space<vmem>>, vector<2x32x16xf32>,
    return
  }
  func.func @transform_0(%arg0: i32) -> (i32, i32, i32) {
    %c0_i32 = arith.constant 0 : i32
    %c0_i32_0 = arith.constant 0 : i32
    %c0_i32_1 = arith.constant 0 : i32
    return %arg0, %c0_i32, %c0_i32_0 : i32, i32, i32
  }
  func.func @transform_1(%arg0: i32) -> (i32, i32) {
    %c0_i32 = arith.constant 0 : i32
    %c0_i32_0 = arith.constant 0 : i32
    %c0_i32_1 = arith.constant 0 : i32
    return %c0_i32, %c0_i32_0 : i32, i32
  }
  func.func @transform_2(%arg0: i32) -> (i32, i32) {
    %c0_i32 = arith.constant 0 : i32
    %c0_i32_0 = arith.constant 0 : i32
    %c0_i32_1 = arith.constant 0 : i32
    return %c0_i32, %c0_i32_0 : i32, i32
  }
  func.func @transform_3(%arg0: i32) -> (i32, i32) {
    %c0_i32 = arith.constant 0 : i32
    %c0_i32_0 = arith.constant 0 : i32
    %c0_i32_1 = arith.constant 0 : i32
    return %c0_i32, %c0_i32_0 : i32, i32
  }
  func.func @transform_4(%arg0: i32) -> (i32, i32, i32) {
    %c0_i32 = arith.constant 0 : i32
    %c0_i32_0 = arith.constant 0 : i32
    %c0_i32_1 = arith.constant 0 : i32
    return %arg0, %c0_i32, %c0_i32_0 : i32, i32, i32
  }
}

module attributes {stable_mosaic.version = 11 : i64} {
  func.func @_attention1d_kernel(%arg0: i32, %arg1: memref<2x16x32xf32, #tpu.memory_space<vmem>>, %arg2: memref<32x384xbf16, #tpu.memory_space<vmem>>, %arg3: memref<128x32xbf16, #tpu.memory_space<vmem>>, %arg4: memref<1x32xf32, #tpu.memory_space<vmem>>, %arg5: memref<2x16x32xf32, #tpu.memory_space<vmem>>) attributes {dimension_semantics = [#tpu.dimension_semantics<parallel>], iteration_bounds = array<i64: 2>, scalar_prefetch = 0 : i64, scratch_operands = 0 : i64, tpu.core_type = #tpu.core_type<tc>, window_params = [{transform_indices = @transform_0, window_bounds = array<i64: 2, 16, 32>}, {pipeline_mode = #tpu.pipeline_mode<synchronous>, transform_indices = @transform_1, window_bounds = array<i64: 32, 384>}, {pipeline_mode = #tpu.pipeline_mode<synchronous>, transform_indices = @transform_2, window_bounds = array<i64: 128, 32>}, {pipeline_mode = #tpu.pipeline_mode<synchronous>, transform_indices = @transform_3, window_bounds = array<i64: 1, 32>}, {transform_indices = @transform_4, window_bounds = array<i64: 2, 16, 32>}]} {
    %c0 = arith.constant 0 : index
    %c0_0 = arith.constant 0 : index
    %c0_1 = arith.constant 0 : index
    %0 = vector.load %arg1[%c0, %c0_0, %c0_1] : memref<2x16x32xf32, #tpu.memory_space<vmem>>, vector<2x16x32xf32>
    %1 = vector.shape_cast %0 : vector<2x16x32xf32> to vector<32x32xf32>
    %2 = arith.truncf %1 : vector<32x32xf32> to vector<32x32xbf16>
    %c0_2 = arith.constant 0 : index
    %c0_3 = arith.constant 0 : index
    %3 = vector.load %arg2[%c0_2, %c0_3] : memref<32x384xbf16, #tpu.memory_space<vmem>>, vector<32x384xbf16>
    %cst = arith.constant dense<0.000000e+00> : vector<32x384xf32>
    %4 = tpu.matmul %2, %3, %cst {dimension_numbers = #tpu.dot_dimension_numbers<[1], [0], [0], [1], [0, 0, 1, 1], [], []>} : vector<32x32xbf16>, vector<32x384xbf16>, vector<32x384xf32> -> vector<32x384xf32>
    %5 = vector.extract_strided_slice %4 {offsets = [0, 0], sizes = [32, 32], strides = [1, 1]} : vector<32x384xf32> to vector<32x32xf32>
    %6 = vector.shape_cast %5 : vector<32x32xf32> to vector<2x16x32xf32>
    %7 = arith.truncf %6 : vector<2x16x32xf32> to vector<2x16x32xbf16>
    %8 = vector.extract_strided_slice %4 {offsets = [0, 128], sizes = [32, 32], strides = [1, 1]} : vector<32x384xf32> to vector<32x32xf32>
    %9 = vector.shape_cast %8 : vector<32x32xf32> to vector<2x16x32xf32>
    %10 = arith.truncf %9 : vector<2x16x32xf32> to vector<2x16x32xbf16>
    %11 = vector.extract_strided_slice %4 {offsets = [0, 256], sizes = [32, 32], strides = [1, 1]} : vector<32x384xf32> to vector<32x32xf32>
    %12 = vector.shape_cast %11 : vector<32x32xf32> to vector<2x16x32xf32>
    %13 = arith.truncf %12 : vector<2x16x32xf32> to vector<2x16x32xbf16>
    "tpu.trace_start"() <{level = 10 : i32, message = "bid,bjd->bij"}> : () -> ()
    %cst_4 = arith.constant dense<0.000000e+00> : vector<2x16x16xf32>
    %14 = tpu.matmul %7, %10, %cst_4 {dimension_numbers = #tpu.dot_dimension_numbers<[2], [2], [1], [1], [0, 0, 0, 1, 1, 1], [0], [0]>} : vector<2x16x32xbf16>, vector<2x16x32xbf16>, vector<2x16x16xf32> -> vector<2x16x16xf32>
    "tpu.trace_stop"() : () -> ()
    %cst_5 = arith.constant dense<0xFF800000> : vector<2x16xf32>
    %15 = vector.multi_reduction <maximumf>, %14, %cst_5 [2] : vector<2x16x16xf32> to vector<2x16xf32>
    %16 = vector.shape_cast %15 : vector<2x16xf32> to vector<2x16x1xf32>
    %17 = vector.broadcast %16 : vector<2x16x1xf32> to vector<2x16x16xf32>
    %18 = arith.subf %14, %17 : vector<2x16x16xf32>
    %19 = math.exp %18 : vector<2x16x16xf32>
    %cst_6 = arith.constant dense<0.000000e+00> : vector<2x16xf32>
    %20 = vector.multi_reduction <add>, %19, %cst_6 [2] : vector<2x16x16xf32> to vector<2x16xf32>
    %21 = vector.shape_cast %20 : vector<2x16xf32> to vector<2x16x1xf32>
    %22 = arith.truncf %19 : vector<2x16x16xf32> to vector<2x16x16xbf16>
    "tpu.trace_start"() <{level = 10 : i32, message = "bij,bjd->bid"}> : () -> ()
    %cst_7 = arith.constant dense<0.000000e+00> : vector<2x16x32xf32>
    %23 = tpu.matmul %22, %13, %cst_7 {dimension_numbers = #tpu.dot_dimension_numbers<[2], [1], [1], [2], [0, 0, 0, 1, 1, 2], [0], [0]>} : vector<2x16x16xbf16>, vector<2x16x32xbf16>, vector<2x16x32xf32> -> vector<2x16x32xf32>
    "tpu.trace_stop"() : () -> ()
    %24 = tpu.reciprocal %21 {approx = true} : vector<2x16x1xf32> -> vector<2x16x1xf32>
    %25 = vector.broadcast %24 : vector<2x16x1xf32> to vector<2x16x32xf32>
    %26 = arith.mulf %23, %25 : vector<2x16x32xf32>
    %27 = vector.extract_strided_slice %4 {offsets = [0, 32], sizes = [32, 32], strides = [1, 1]} : vector<32x384xf32> to vector<32x32xf32>
    %28 = vector.shape_cast %27 : vector<32x32xf32> to vector<2x16x32xf32>
    %29 = arith.truncf %28 : vector<2x16x32xf32> to vector<2x16x32xbf16>
    %30 = vector.extract_strided_slice %4 {offsets = [0, 160], sizes = [32, 32], strides = [1, 1]} : vector<32x384xf32> to vector<32x32xf32>
    %31 = vector.shape_cast %30 : vector<32x32xf32> to vector<2x16x32xf32>
    %32 = arith.truncf %31 : vector<2x16x32xf32> to vector<2x16x32xbf16>
    %33 = vector.extract_strided_slice %4 {offsets = [0, 288], sizes = [32, 32], strides = [1, 1]} : vector<32x384xf32> to vector<32x32xf32>
    %34 = vector.shape_cast %33 : vector<32x32xf32> to vector<2x16x32xf32>
    %35 = arith.truncf %34 : vector<2x16x32xf32> to vector<2x16x32xbf16>
    "tpu.trace_start"() <{level = 10 : i32, message = "bid,bjd->bij"}> : () -> ()
    %cst_8 = arith.constant dense<0.000000e+00> : vector<2x16x16xf32>
    %36 = tpu.matmul %29, %32, %cst_8 {dimension_numbers = #tpu.dot_dimension_numbers<[2], [2], [1], [1], [0, 0, 0, 1, 1, 1], [0], [0]>} : vector<2x16x32xbf16>, vector<2x16x32xbf16>, vector<2x16x16xf32> -> vector<2x16x16xf32>
    "tpu.trace_stop"() : () -> ()
    %cst_9 = arith.constant dense<0xFF800000> : vector<2x16xf32>
    %37 = vector.multi_reduction <maximumf>, %36, %cst_9 [2] : vector<2x16x16xf32> to vector<2x16xf32>
    %38 = vector.shape_cast %37 : vector<2x16xf32> to vector<2x16x1xf32>
    %39 = vector.broadcast %38 : vector<2x16x1xf32> to vector<2x16x16xf32>
    %40 = arith.subf %36, %39 : vector<2x16x16xf32>
    %41 = math.exp %40 : vector<2x16x16xf32>
    %cst_10 = arith.constant dense<0.000000e+00> : vector<2x16xf32>
    %42 = vector.multi_reduction <add>, %41, %cst_10 [2] : vector<2x16x16xf32> to vector<2x16xf32>
    %43 = vector.shape_cast %42 : vector<2x16xf32> to vector<2x16x1xf32>
    %44 = arith.truncf %41 : vector<2x16x16xf32> to vector<2x16x16xbf16>
    "tpu.trace_start"() <{level = 10 : i32, message = "bij,bjd->bid"}> : () -> ()
    %cst_11 = arith.constant dense<0.000000e+00> : vector<2x16x32xf32>
    %45 = tpu.matmul %44, %35, %cst_11 {dimension_numbers = #tpu.dot_dimension_numbers<[2], [1], [1], [2], [0, 0, 0, 1, 1, 2], [0], [0]>} : vector<2x16x16xbf16>, vector<2x16x32xbf16>, vector<2x16x32xf32> -> vector<2x16x32xf32>
    "tpu.trace_stop"() : () -> ()
    %46 = tpu.reciprocal %43 {approx = true} : vector<2x16x1xf32> -> vector<2x16x1xf32>
    %47 = vector.broadcast %46 : vector<2x16x1xf32> to vector<2x16x32xf32>
    %48 = arith.mulf %45, %47 : vector<2x16x32xf32>
    %49 = vector.extract_strided_slice %4 {offsets = [0, 64], sizes = [32, 32], strides = [1, 1]} : vector<32x384xf32> to vector<32x32xf32>
    %50 = vector.shape_cast %49 : vector<32x32xf32> to vector<2x16x32xf32>
    %51 = arith.truncf %50 : vector<2x16x32xf32> to vector<2x16x32xbf16>
    %52 = vector.extract_strided_slice %4 {offsets = [0, 192], sizes = [32, 32], strides = [1, 1]} : vector<32x384xf32> to vector<32x32xf32>
    %53 = vector.shape_cast %52 : vector<32x32xf32> to vector<2x16x32xf32>
    %54 = arith.truncf %53 : vector<2x16x32xf32> to vector<2x16x32xbf16>
    %55 = vector.extract_strided_slice %4 {offsets = [0, 320], sizes = [32, 32], strides = [1, 1]} : vector<32x384xf32> to vector<32x32xf32>
    %56 = vector.shape_cast %55 : vector<32x32xf32> to vector<2x16x32xf32>
    %57 = arith.truncf %56 : vector<2x16x32xf32> to vector<2x16x32xbf16>
    "tpu.trace_start"() <{level = 10 : i32, message = "bid,bjd->bij"}> : () -> ()
    %cst_12 = arith.constant dense<0.000000e+00> : vector<2x16x16xf32>
    %58 = tpu.matmul %51, %54, %cst_12 {dimension_numbers = #tpu.dot_dimension_numbers<[2], [2], [1], [1], [0, 0, 0, 1, 1, 1], [0], [0]>} : vector<2x16x32xbf16>, vector<2x16x32xbf16>, vector<2x16x16xf32> -> vector<2x16x16xf32>
    "tpu.trace_stop"() : () -> ()
    %cst_13 = arith.constant dense<0xFF800000> : vector<2x16xf32>
    %59 = vector.multi_reduction <maximumf>, %58, %cst_13 [2] : vector<2x16x16xf32> to vector<2x16xf32>
    %60 = vector.shape_cast %59 : vector<2x16xf32> to vector<2x16x1xf32>
    %61 = vector.broadcast %60 : vector<2x16x1xf32> to vector<2x16x16xf32>
    %62 = arith.subf %58, %61 : vector<2x16x16xf32>
    %63 = math.exp %62 : vector<2x16x16xf32>
    %cst_14 = arith.constant dense<0.000000e+00> : vector<2x16xf32>
    %64 = vector.multi_reduction <add>, %63, %cst_14 [2] : vector<2x16x16xf32> to vector<2x16xf32>
    %65 = vector.shape_cast %64 : vector<2x16xf32> to vector<2x16x1xf32>
    %66 = arith.truncf %63 : vector<2x16x16xf32> to vector<2x16x16xbf16>
    "tpu.trace_start"() <{level = 10 : i32, message = "bij,bjd->bid"}> : () -> ()
    %cst_15 = arith.constant dense<0.000000e+00> : vector<2x16x32xf32>
    %67 = tpu.matmul %66, %57, %cst_15 {dimension_numbers = #tpu.dot_dimension_numbers<[2], [1], [1], [2], [0, 0, 0, 1, 1, 2], [0], [0]>} : vector<2x16x16xbf16>, vector<2x16x32xbf16>, vector<2x16x32xf32> -> vector<2x16x32xf32>
    "tpu.trace_stop"() : () -> ()
    %68 = tpu.reciprocal %65 {approx = true} : vector<2x16x1xf32> -> vector<2x16x1xf32>
    %69 = vector.broadcast %68 : vector<2x16x1xf32> to vector<2x16x32xf32>
    %70 = arith.mulf %67, %69 : vector<2x16x32xf32>
    %71 = vector.extract_strided_slice %4 {offsets = [0, 96], sizes = [32, 32], strides = [1, 1]} : vector<32x384xf32> to vector<32x32xf32>
    %72 = vector.shape_cast %71 : vector<32x32xf32> to vector<2x16x32xf32>
    %73 = arith.truncf %72 : vector<2x16x32xf32> to vector<2x16x32xbf16>
    %74 = vector.extract_strided_slice %4 {offsets = [0, 224], sizes = [32, 32], strides = [1, 1]} : vector<32x384xf32> to vector<32x32xf32>
    %75 = vector.shape_cast %74 : vector<32x32xf32> to vector<2x16x32xf32>
    %76 = arith.truncf %75 : vector<2x16x32xf32> to vector<2x16x32xbf16>
    %77 = vector.extract_strided_slice %4 {offsets = [0, 352], sizes = [32, 32], strides = [1, 1]} : vector<32x384xf32> to vector<32x32xf32>
    %78 = vector.shape_cast %77 : vector<32x32xf32> to vector<2x16x32xf32>
    %79 = arith.truncf %78 : vector<2x16x32xf32> to vector<2x16x32xbf16>
    "tpu.trace_start"() <{level = 10 : i32, message = "bid,bjd->bij"}> : () -> ()
    %cst_16 = arith.constant dense<0.000000e+00> : vector<2x16x16xf32>
    %80 = tpu.matmul %73, %76, %cst_16 {dimension_numbers = #tpu.dot_dimension_numbers<[2], [2], [1], [1], [0, 0, 0, 1, 1, 1], [0], [0]>} : vector<2x16x32xbf16>, vector<2x16x32xbf16>, vector<2x16x16xf32> -> vector<2x16x16xf32>
    "tpu.trace_stop"() : () -> ()
    %cst_17 = arith.constant dense<0xFF800000> : vector<2x16xf32>
    %81 = vector.multi_reduction <maximumf>, %80, %cst_17 [2] : vector<2x16x16xf32> to vector<2x16xf32>
    %82 = vector.shape_cast %81 : vector<2x16xf32> to vector<2x16x1xf32>
    %83 = vector.broadcast %82 : vector<2x16x1xf32> to vector<2x16x16xf32>
    %84 = arith.subf %80, %83 : vector<2x16x16xf32>
    %85 = math.exp %84 : vector<2x16x16xf32>
    %cst_18 = arith.constant dense<0.000000e+00> : vector<2x16xf32>
    %86 = vector.multi_reduction <add>, %85, %cst_18 [2] : vector<2x16x16xf32> to vector<2x16xf32>
    %87 = vector.shape_cast %86 : vector<2x16xf32> to vector<2x16x1xf32>
    %88 = arith.truncf %85 : vector<2x16x16xf32> to vector<2x16x16xbf16>
    "tpu.trace_start"() <{level = 10 : i32, message = "bij,bjd->bid"}> : () -> ()
    %cst_19 = arith.constant dense<0.000000e+00> : vector<2x16x32xf32>
    %89 = tpu.matmul %88, %79, %cst_19 {dimension_numbers = #tpu.dot_dimension_numbers<[2], [1], [1], [2], [0, 0, 0, 1, 1, 2], [0], [0]>} : vector<2x16x16xbf16>, vector<2x16x32xbf16>, vector<2x16x32xf32> -> vector<2x16x32xf32>
    "tpu.trace_stop"() : () -> ()
    %90 = tpu.reciprocal %87 {approx = true} : vector<2x16x1xf32> -> vector<2x16x1xf32>
    %91 = vector.broadcast %90 : vector<2x16x1xf32> to vector<2x16x32xf32>
    %92 = arith.mulf %89, %91 : vector<2x16x32xf32>
    %93 = tpu.concatenate %26, %48, %70, %92 in 2 : vector<2x16x32xf32>, vector<2x16x32xf32>, vector<2x16x32xf32>, vector<2x16x32xf32> -> vector<2x16x128xf32>
    %94 = vector.shape_cast %93 : vector<2x16x128xf32> to vector<32x128xf32>
    %95 = arith.truncf %94 : vector<32x128xf32> to vector<32x128xbf16>
    %c0_20 = arith.constant 0 : index
    %c0_21 = arith.constant 0 : index
    %96 = vector.load %arg3[%c0_20, %c0_21] : memref<128x32xbf16, #tpu.memory_space<vmem>>, vector<128x32xbf16>
    %cst_22 = arith.constant dense<0.000000e+00> : vector<32x32xf32>
    %97 = tpu.matmul %95, %96, %cst_22 {dimension_numbers = #tpu.dot_dimension_numbers<[1], [0], [0], [1], [0, 0, 1, 1], [], []>} : vector<32x128xbf16>, vector<128x32xbf16>, vector<32x32xf32> -> vector<32x32xf32>
    %c0_23 = arith.constant 0 : index
    %c0_24 = arith.constant 0 : index
    %98 = vector.load %arg4[%c0_23, %c0_24] : memref<1x32xf32, #tpu.memory_space<vmem>>, vector<1x32xf32>
    %99 = vector.broadcast %98 : vector<1x32xf32> to vector<32x32xf32>
    %100 = arith.addf %97, %99 : vector<32x32xf32>
    %101 = vector.shape_cast %100 : vector<32x32xf32> to vector<2x16x32xf32>
    %c0_25 = arith.constant 0 : index
    %c0_26 = arith.constant 0 : index
    %c0_27 = arith.constant 0 : index
    %102 = vector.load %arg5[%c0_25, %c0_26, %c0_27] : memref<2x16x32xf32, #tpu.memory_space<vmem>>, vector<2x16x32xf32>
    tpu.vector_store %arg5[%c0_25, %c0_26, %c0_27], %101 {strides = array<i32>} : memref<2x16x32xf32, #tpu.memory_space<vmem>>, vector<2x16x32xf32>,
    return
  }
  func.func @transform_0(%arg0: i32) -> (i32, i32, i32) {
    %c0_i32 = arith.constant 0 : i32
    %c0_i32_0 = arith.constant 0 : i32
    %c0_i32_1 = arith.constant 0 : i32
    return %arg0, %c0_i32, %c0_i32_0 : i32, i32, i32
  }
  func.func @transform_1(%arg0: i32) -> (i32, i32) {
    %c0_i32 = arith.constant 0 : i32
    %c0_i32_0 = arith.constant 0 : i32
    %c0_i32_1 = arith.constant 0 : i32
    return %c0_i32, %c0_i32_0 : i32, i32
  }
  func.func @transform_2(%arg0: i32) -> (i32, i32) {
    %c0_i32 = arith.constant 0 : i32
    %c0_i32_0 = arith.constant 0 : i32
    %c0_i32_1 = arith.constant 0 : i32
    return %c0_i32, %c0_i32_0 : i32, i32
  }
  func.func @transform_3(%arg0: i32) -> (i32, i32) {
    %c0_i32 = arith.constant 0 : i32
    %c0_i32_0 = arith.constant 0 : i32
    %c0_i32_1 = arith.constant 0 : i32
    return %c0_i32, %c0_i32_0 : i32, i32
  }
  func.func @transform_4(%arg0: i32) -> (i32, i32, i32) {
    %c0_i32 = arith.constant 0 : i32
    %c0_i32_0 = arith.constant 0 : i32
    %c0_i32_1 = arith.constant 0 : i32
    return %arg0, %c0_i32, %c0_i32_0 : i32, i32, i32
  }
}

</mosaic_0001>

<llo_original>
// kernel: tpu_custom_call.1
$region0: #{tpu_custom_call.1}
  #allocation0 [shape = 'u32[]', space=smem, size = 0x4, offset = 0x4, fixed_abs, tag = 'smem constant byte address 0x4 - core index']
  #allocation1 [shape = 'u32[144,128]{1,0:T(1,128)}', space=vmem, size = 0x12000, scoped, tag = 'internal scratch']
  %s0 = inlined_call_operand.vmem [shape: f32[4,32,16], index: 0, kind: input, shape index: {}]
  %s1 = inlined_call_operand.vmem [shape: bf16[32,384], index: 1, kind: input, shape index: {}]
  %s2 = inlined_call_operand.vmem [shape: bf16[128,32], index: 2, kind: input, shape index: {}]
  %s3 = inlined_call_operand.vmem [shape: f32[1,32], index: 3, kind: input, shape index: {}]
  %s4 = inlined_call_operand.vmem [shape: f32[4,32,16], index: 4, kind: output, shape index: {}]
  %s5 = sld [smem:[#allocation0]]
  $region49: #{tpu_custom_call.1} parent=0
    _
  %s7 = ssub.s32 1, %s5
  %s8 = scalar_select 0, %s7, %s5
  loop: start=0, step=1, limit=4
  $region2: #{tpu_custom_call.1} parent=0 // loop_pre_header
    _
  $region3: #{tpu_custom_call.1} parent=0 // loop_header
    %s10 = sphi 0, %s14
    %p11 = scmp.ge.s32.totalorder %s10, 4
    %s20 = sphi 0, %s22
    %s23 = sphi 0, %s20
    %s24 = sphi 0, %s23
    %s40 = sphi 0, %s24
    %s44 = sphi 0, %s44
    %s46 = sphi 0, %s44
    %s47 = sphi 0, %s46
    %s61 = sphi 0, %s47
    %s65 = sphi 0, %s65
    %s67 = sphi 0, %s65
    %s68 = sphi 0, %s67
    %s82 = sphi 0, %s68
    %s86 = sphi 0, %s86
    %s88 = sphi 0, %s86
    %s89 = sphi 0, %s88
    %s103 = sphi 0, %s89
    %s109 = sphi 0, %s111
    %s112 = sphi 0, %s109
    %s113 = sphi 0, %s112
    %s129 = sphi 0, %s113
  $region4: #{tpu_custom_call.1} parent=0 // loop_header_branch
    %13 = sbr.rel (%p11) target = $region8
  $region5: #{tpu_custom_call.1} parent=0 // loop_body
    %s15 = ssub.s32 %s10, 1
    %s16 = ssub.s32 %s10, 2
    %s17 = sadd.s32 %s10, 1
    %s18 = ssub.s32 %s10, %s17
    %p19 = scmp.eq.s32.totalorder %s18, 0
    %s21 = sadd.s32 %s20, 1
    %s22 = scalar_select %p19, %s20, %s21
    %p25 = pneg %p19
    %p26 = scmp.eq.s32.totalorder %s10, 1
    %p27 = por %p25, %p26
    %p28 = scmp.ne.s32.totalorder %s20, %s23
    %p29 = scmp.eq.s32.totalorder %s10, 0
    %p30 = por %p28, %p29
    %p31 = scmp.ne.s32.totalorder %s20, %s23
    %p32 = scmp.eq.s32.totalorder %s15, 1
    %p33 = por %p31, %p32
    %p34 = scmp.ne.s32.totalorder %s23, %s24
    %p35 = scmp.eq.s32.totalorder %s15, 0
    %p36 = por %p34, %p35
    %p37 = scmp.ne.s32.totalorder %s23, %s24
    %p38 = scmp.eq.s32.totalorder %s16, 1
    %p39 = por %p37, %p38
    %p41 = scmp.ne.s32.totalorder %s24, %s40
    %p42 = scmp.eq.s32.totalorder %s16, 0
    %p43 = por %p41, %p42
    %s45 = sadd.s32 %s44, 1
    %p48 = scmp.eq.s32.totalorder %s10, 1
    %p49 = scmp.ne.s32.totalorder %s44, %s46
    %p50 = scmp.eq.s32.totalorder %s10, 0
    %p51 = por %p49, %p50
    %p52 = scmp.ne.s32.totalorder %s44, %s46
    %p53 = scmp.eq.s32.totalorder %s15, 1
    %p54 = por %p52, %p53
    %p55 = scmp.ne.s32.totalorder %s46, %s47
    %p56 = scmp.eq.s32.totalorder %s15, 0
    %p57 = por %p55, %p56
    %p58 = scmp.ne.s32.totalorder %s46, %s47
    %p59 = scmp.eq.s32.totalorder %s16, 1
    %p60 = por %p58, %p59
    %p62 = scmp.ne.s32.totalorder %s47, %s61
    %p63 = scmp.eq.s32.totalorder %s16, 0
    %p64 = por %p62, %p63
    %s66 = sadd.s32 %s65, 1
    %p69 = scmp.eq.s32.totalorder %s10, 1
    %p70 = scmp.ne.s32.totalorder %s65, %s67
    %p71 = scmp.eq.s32.totalorder %s10, 0
    %p72 = por %p70, %p71
    %p73 = scmp.ne.s32.totalorder %s65, %s67
    %p74 = scmp.eq.s32.totalorder %s15, 1
    %p75 = por %p73, %p74
    %p76 = scmp.ne.s32.totalorder %s67, %s68
    %p77 = scmp.eq.s32.totalorder %s15, 0
    %p78 = por %p76, %p77
    %p79 = scmp.ne.s32.totalorder %s67, %s68
    %p80 = scmp.eq.s32.totalorder %s16, 1
    %p81 = por %p79, %p80
    %p83 = scmp.ne.s32.totalorder %s68, %s82
    %p84 = scmp.eq.s32.totalorder %s16, 0
    %p85 = por %p83, %p84
    %s87 = sadd.s32 %s86, 1
    %p90 = scmp.eq.s32.totalorder %s10, 1
    %p91 = scmp.ne.s32.totalorder %s86, %s88
    %p92 = scmp.eq.s32.totalorder %s10, 0
    %p93 = por %p91, %p92
    %p94 = scmp.ne.s32.totalorder %s86, %s88
    %p95 = scmp.eq.s32.totalorder %s15, 1
    %p96 = por %p94, %p95
    %p97 = scmp.ne.s32.totalorder %s88, %s89
    %p98 = scmp.eq.s32.totalorder %s15, 0
    %p99 = por %p97, %p98
    %p100 = scmp.ne.s32.totalorder %s88, %s89
    %p101 = scmp.eq.s32.totalorder %s16, 1
    %p102 = por %p100, %p101
    %p104 = scmp.ne.s32.totalorder %s89, %s103
    %p105 = scmp.eq.s32.totalorder %s16, 0
    %p106 = por %p104, %p105
    %s107 = ssub.s32 %s10, %s17
    %p108 = scmp.eq.s32.totalorder %s107, 0
    %s110 = sadd.s32 %s109, 1
    %s111 = scalar_select %p108, %s109, %s110
    %p114 = pneg %p108
    %p115 = scmp.eq.s32.totalorder %s10, 1
    %p116 = por %p114, %p115
    %p117 = scmp.ne.s32.totalorder %s109, %s112
    %p118 = scmp.eq.s32.totalorder %s10, 0
    %p119 = por %p117, %p118
    %p120 = scmp.ne.s32.totalorder %s109, %s112
    %p121 = scmp.eq.s32.totalorder %s15, 1
    %p122 = por %p120, %p121
    %p123 = scmp.ne.s32.totalorder %s112, %s113
    %p124 = scmp.eq.s32.totalorder %s15, 0
    %p125 = por %p123, %p124
    %p126 = scmp.ne.s32.totalorder %s112, %s113
    %p127 = scmp.eq.s32.totalorder %s16, 1
    %p128 = por %p126, %p127
    %p130 = scmp.ne.s32.totalorder %s113, %s129
    %p131 = scmp.eq.s32.totalorder %s16, 0
    %p132 = por %p130, %p131
    %p133 = scmp.le.s32.totalorder 1, %s10
    %p134 = scmp.lt.s32.totalorder %s10, 3
    %p135 = pnand %p133, %p134
    %p136 = pneg %p135
    // Predicated region
    $region9: #{tpu_custom_call.1} parent=5 // pred_check
      _
    $region10: #{tpu_custom_call.1} parent=5 // pred_check_branch
      %138 = sbr.rel (%p135) target = $region12
    $region11: #{tpu_custom_call.1} parent=5 // pred_region
      %s139 = ssub.s32 %s10, 1
      // Predicated region
      $region13: #{tpu_custom_call.1} parent=11 // pred_check
        %p140 = pneg %p57
      $region14: #{tpu_custom_call.1} parent=11 // pred_check_branch
        %142 = sbr.rel (%p140) target = $region16
      $region15: #{tpu_custom_call.1} parent=11 // pred_region
        _
      $region16: #{tpu_custom_call.1} parent=11 // pred_fallthru
        _
      // Predicated region
      $region17: #{tpu_custom_call.1} parent=11 // pred_check
        %p143 = pneg %p78
      $region18: #{tpu_custom_call.1} parent=11 // pred_check_branch
        %145 = sbr.rel (%p143) target = $region20
      $region19: #{tpu_custom_call.1} parent=11 // pred_region
        _
      $region20: #{tpu_custom_call.1} parent=11 // pred_fallthru
        _
      // Predicated region
      $region21: #{tpu_custom_call.1} parent=11 // pred_check
        %p146 = pneg %p99
      $region22: #{tpu_custom_call.1} parent=11 // pred_check_branch
        %148 = sbr.rel (%p146) target = $region24
      $region23: #{tpu_custom_call.1} parent=11 // pred_region
        _
      $region24: #{tpu_custom_call.1} parent=11 // pred_fallthru
        _
    $region12: #{tpu_custom_call.1} parent=5 // pred_fallthru
      _
    %p149 = scmp.lt.s32.totalorder %s10, 2
    // Predicated region
    $region25: #{tpu_custom_call.1} parent=5 // pred_check
      %p150 = pneg %p149
    $region26: #{tpu_custom_call.1} parent=5 // pred_check_branch
      %152 = sbr.rel (%p150) target = $region28
    $region27: #{tpu_custom_call.1} parent=5 // pred_region
      // Predicated region
      $region29: #{tpu_custom_call.1} parent=27 // pred_check
        %p153 = pneg %p30
      $region30: #{tpu_custom_call.1} parent=27 // pred_check_branch
        %155 = sbr.rel (%p153) target = $region32
      $region31: #{tpu_custom_call.1} parent=27 // pred_region
        %s156 = smul.u32 2, %s10
        %p157 = scmp.lt.s32.totalorder %s156, 3
        %s158 = scalar_select %p157, %s156, 3
        %s159 = smul.addr %s158, 4
        %s160 = smul.addr %s159, 8
        %s161 = scalar_lea.vmem %s0, %s160
        %s162 = smul.u32 2, %s10
      $region32: #{tpu_custom_call.1} parent=27 // pred_fallthru
        _
    $region28: #{tpu_custom_call.1} parent=5 // pred_fallthru
      _
    %p163 = scmp.le.s32.totalorder 1, %s10
    %p164 = scmp.lt.s32.totalorder %s10, 3
    %p165 = pnand %p163, %p164
    %p166 = pneg %p165
    // Predicated region
    $region33: #{tpu_custom_call.1} parent=5 // pred_check
      _
    $region34: #{tpu_custom_call.1} parent=5 // pred_check_branch
      %168 = sbr.rel (%p165) target = $region36
    $region35: #{tpu_custom_call.1} parent=5 // pred_region
      %s169 = ssub.s32 %s10, 1
      %s170 = smul.u32 2, %s15
      %p171 = scmp.lt.s32.totalorder %s170, 3
      %s172 = scalar_select %p171, %s170, 3
      %s173 = smul.addr %s172, 4
      %s174 = smul.addr %s173, 8
      %s175 = scalar_lea.vmem %s0, %s174
      %p176 = pneg %p36
      %p177 = pneg %p33
      %p178 = pneg %p57
      %p179 = pneg %p54
      %p180 = pneg %p78
      %p181 = pneg %p75
      %p182 = pneg %p99
      %p183 = pneg %p96
      %p184 = pneg %p125
      %p185 = pneg %p122
      %s186 = smul.u32 2, %s15
      %p187 = scmp.lt.s32.totalorder %s186, 3
      %s188 = scalar_select %p187, %s186, 3
      %s189 = smul.addr %s188, 4
      %s190 = smul.addr %s189, 8
      %s191 = scalar_lea.vmem %s4, %s190
      %s192 = smul.u32 2, %s15
      %p193 = scmp.lt.s32.totalorder %s192, 3
      %s194 = scalar_select %p193, %s192, 3
      %s195 = smul.addr %s194, 4
      %s196 = smul.addr %s195, 8
      %s197 = scalar_lea.vmem %s0, %s196
      %s198 = smul.u32 2, %s15
      %s199 = smul.u32 2, %s15
      %p200 = scmp.lt.s32.totalorder %s199, 3
      %s201 = scalar_select %p200, %s199, 3
      %s202 = smul.addr %s201, 4
      %s203 = smul.addr %s202, 8
      %s204 = scalar_lea.vmem %s4, %s203
      %s205 = smul.u32 2, %s15
      %v207 = vld [vmem:[%s197] sm:$0xff]
      %v208 = vld [vmem:[%s197 + $0x8] sm:$0xff]
      %v209 = vld [vmem:[%s197 + $0x10] sm:$0xff]
      %v210 = vld [vmem:[%s197 + $0x18] sm:$0xff]
      %v211 = vld [vmem:[%s197 + $0x20] sm:$0xff]
      %v212 = vld [vmem:[%s197 + $0x28] sm:$0xff]
      %v213 = vld [vmem:[%s197 + $0x30] sm:$0xff]
      %v214 = vld [vmem:[%s197 + $0x38] sm:$0xff]
      %215 = vxpose.xlu0.b32.start [1/16] %v207, 128
      %216 = vxpose.xlu0.b32.cont [2/16] %v208, 128
      %217 = vxpose.xlu0.b32.cont [3/16] %v209, 128
      %218 = vxpose.xlu0.b32.cont [4/16] %v210, 128
      %219 = vxpose.xlu0.b32.cont [5/16] 0.0, 128
      %220 = vxpose.xlu0.b32.cont [6/16] 0.0, 128
      %221 = vxpose.xlu0.b32.cont [7/16] 0.0, 128
      %222 = vxpose.xlu0.b32.cont [8/16] 0.0, 128
      %223 = vxpose.xlu0.b32.cont [9/16] 0.0, 128
      %224 = vxpose.xlu0.b32.cont [10/16] 0.0, 128
      %225 = vxpose.xlu0.b32.cont [11/16] 0.0, 128
      %226 = vxpose.xlu0.b32.cont [12/16] 0.0, 128
      %227 = vxpose.xlu0.b32.cont [13/16] 0.0, 128
      %228 = vxpose.xlu0.b32.cont [14/16] 0.0, 128
      %229 = vxpose.xlu0.b32.cont [15/16] 0.0, 128
      %230 = vxpose.xlu0.b32.end [16/16] 0.0, 128
      %v231 = vpop.trf.xlu0
      %v232 = vpop.trf.xlu0
      %v233 = vpop.trf.xlu0
      %v234 = vpop.trf.xlu0
      %v235 = vpop.trf.xlu0
      %v236 = vpop.trf.xlu0
      %v237 = vpop.trf.xlu0
      %v238 = vpop.trf.xlu0
      %v239 = vpop.trf.xlu0
      %v240 = vpop.trf.xlu0
      %v241 = vpop.trf.xlu0
      %v242 = vpop.trf.xlu0
      %v243 = vpop.trf.xlu0
      %v244 = vpop.trf.xlu0
      %v245 = vpop.trf.xlu0
      %v246 = vpop.trf.xlu0
      %247 = vxpose.xlu0.b32.start [1/16] %v211, 128
      %248 = vxpose.xlu0.b32.cont [2/16] %v212, 128
      %249 = vxpose.xlu0.b32.cont [3/16] %v213, 128
      %250 = vxpose.xlu0.b32.cont [4/16] %v214, 128
      %251 = vxpose.xlu0.b32.cont [5/16] 0.0, 128
      %252 = vxpose.xlu0.b32.cont [6/16] 0.0, 128
      %253 = vxpose.xlu0.b32.cont [7/16] 0.0, 128
      %254 = vxpose.xlu0.b32.cont [8/16] 0.0, 128
      %255 = vxpose.xlu0.b32.cont [9/16] 0.0, 128
      %256 = vxpose.xlu0.b32.cont [10/16] 0.0, 128
      %257 = vxpose.xlu0.b32.cont [11/16] 0.0, 128
      %258 = vxpose.xlu0.b32.cont [12/16] 0.0, 128
      %259 = vxpose.xlu0.b32.cont [13/16] 0.0, 128
      %260 = vxpose.xlu0.b32.cont [14/16] 0.0, 128
      %261 = vxpose.xlu0.b32.cont [15/16] 0.0, 128
      %262 = vxpose.xlu0.b32.end [16/16] 0.0, 128
      %v263 = vpop.trf.xlu0
      %v264 = vpop.trf.xlu0
      %v265 = vpop.trf.xlu0
      %v266 = vpop.trf.xlu0
      %v267 = vpop.trf.xlu0
      %v268 = vpop.trf.xlu0
      %v269 = vpop.trf.xlu0
      %v270 = vpop.trf.xlu0
      %v271 = vpop.trf.xlu0
      %v272 = vpop.trf.xlu0
      %v273 = vpop.trf.xlu0
      %v274 = vpop.trf.xlu0
      %v275 = vpop.trf.xlu0
      %v276 = vpop.trf.xlu0
      %v277 = vpop.trf.xlu0
      %v278 = vpop.trf.xlu0
      %v279 = vpack.c.bf16 %v232, %v231
      %v280 = vpack.c.bf16 %v264, %v263
      %v281 = vld [vmem:[%s1] sm:$0xff]
      %v282 = vld [vmem:[%s1 + $0x8] sm:$0xf]
      %v283 = vld [vmem:[%s1 + $0xc] sm:$0xff]
      %v284 = vld [vmem:[%s1 + $0x14] sm:$0xf]
      %v285 = vld [vmem:[%s1 + $0x18] sm:$0xff]
      %v286 = vld [vmem:[%s1 + $0x20] sm:$0xf]
      %v287 = vld [vmem:[%s1 + $0x24] sm:$0xff]
      %v288 = vld [vmem:[%s1 + $0x2c] sm:$0xf]
      %v297 = vunpack.c.l.b16 %v281
      %v298 = vunpack.c.h.b16 %v281
      %v299 = vunpack.c.l.b16 %v282
      %v300 = vunpack.c.l.b16 %v283
      %v301 = vunpack.c.h.b16 %v283
      %v302 = vunpack.c.l.b16 %v284
      %v303 = vunpack.c.l.b16 %v285
      %v304 = vunpack.c.h.b16 %v285
      %v305 = vunpack.c.l.b16 %v286
      %v306 = vunpack.c.l.b16 %v287
      %v307 = vunpack.c.h.b16 %v287
      %v308 = vunpack.c.l.b16 %v288
      %v309 = vpack.c.b16 %v300, %v297
      %v310 = vpack.c.b16 %v301, %v298
      %v311 = vpack.c.b16 %v302, %v299
      %v312 = vpack.c.b16 %v306, %v303
      %v313 = vpack.c.b16 %v307, %v304
      %v314 = vpack.c.b16 %v308, %v305
      %vm321 = vcmask 261120
      %v323 = vsel %vm321, %v279, 0
      %v326 = vsel %vm321, %v280, 0
      %328 = vmatprep.subr.bf16.mxu0 0
      %329 = vmatpush1.bf16.msra.mxu0 0
      %330 = vmatprep.subr.bf16.mxu0 0
      %331 = vmatpush1.bf16.msra.mxu0 0
      %332 = vmatprep.subr.bf16.mxu0 0
      %333 = vmatpush1.bf16.msra.mxu0 0
      %334 = vmatprep.subr.bf16.mxu0 0
      %335 = vmatpush1.bf16.msra.mxu0 0
      %336 = vmatprep.subr.bf16.mxu0 0
      %337 = vmatpush1.bf16.msra.mxu0 0
      %338 = vmatprep.subr.bf16.mxu0 0
      %339 = vmatpush1.bf16.msra.mxu0 0
      %340 = vmatprep.subr.bf16.mxu0 %v313
      %341 = vmatpush1.bf16.msra.mxu0 %v312
      %342 = vmatprep.subr.bf16.mxu0 %v310
      %343 = vmatpush1.bf16.msra.mxu0 %v309
      %344 = vmatprep.subr.bf16.mxu0 0
      %345 = vmatpush2.bf16.msra.mxu0 0
      %346 = vmatprep.subr.bf16.mxu0 0
      %347 = vmatpush2.bf16.msra.mxu0 0
      %348 = vmatprep.subr.bf16.mxu0 0
      %349 = vmatpush2.bf16.msra.mxu0 0
      %350 = vmatprep.subr.bf16.mxu0 0
      %351 = vmatpush2.bf16.msra.mxu0 0
      %352 = vmatprep.subr.bf16.mxu0 0
      %353 = vmatpush2.bf16.msra.mxu0 0
      %354 = vmatprep.subr.bf16.mxu0 0
      %355 = vmatpush2.bf16.msra.mxu0 0
      %356 = vmatprep.subr.bf16.mxu0 0
      %357 = vmatpush2.bf16.msra.mxu0 0
      %358 = vmatprep.subr.bf16.mxu0 0
      %359 = vmatpush2.bf16.msra.mxu0 0
      %360 = vmatprep.mubr.bf16.mxu0 0
      %361 = vmatmul.mubr.bf16.gmra.mxu0 %v323
      %v362 = vpop.f32.mrf.mxu0
      %v363 = vadd.f32 0.0, %v362
      %v364 = vpop.f32.mrf.mxu0
      %v365 = vadd.f32 0.0, %v364
      %v366 = vpop.f32.mrf.mxu0
      %v367 = vadd.f32 0.0, %v366
      %v368 = vpop.f32.mrf.mxu0
      %v369 = vadd.f32 0.0, %v368
      %370 = vmatprep.mubr.bf16.mxu0 0
      %371 = vmatmul.mubr.bf16.gmra.mxu0 %v326
      %v372 = vpop.f32.mrf.mxu0
      %v373 = vadd.f32 0.0, %v372
      %v374 = vpop.f32.mrf.mxu0
      %v375 = vadd.f32 0.0, %v374
      %v376 = vpop.f32.mrf.mxu0
      %v377 = vadd.f32 0.0, %v376
      %v378 = vpop.f32.mrf.mxu0
      %v379 = vadd.f32 0.0, %v378
      %380 = vdwg.mxu0
      %381 = vmatprep.subr.bf16.mxu0 0
      %382 = vmatpush1.bf16.msra.mxu0 0
      %383 = vmatprep.subr.bf16.mxu0 0
      %384 = vmatpush1.bf16.msra.mxu0 0
      %385 = vmatprep.subr.bf16.mxu0 0
      %386 = vmatpush1.bf16.msra.mxu0 0
      %387 = vmatprep.subr.bf16.mxu0 0
      %388 = vmatpush1.bf16.msra.mxu0 0
      %389 = vmatprep.subr.bf16.mxu0 0
      %390 = vmatpush1.bf16.msra.mxu0 0
      %391 = vmatprep.subr.bf16.mxu0 0
      %392 = vmatpush1.bf16.msra.mxu0 0
      %393 = vmatprep.subr.bf16.mxu0 0
      %394 = vmatpush1.bf16.msra.mxu0 %v314
      %395 = vmatprep.subr.bf16.mxu0 0
      %396 = vmatpush1.bf16.msra.mxu0 %v311
      %397 = vmatprep.subr.bf16.mxu0 0
      %398 = vmatpush2.bf16.msra.mxu0 0
      %399 = vmatprep.subr.bf16.mxu0 0
      %400 = vmatpush2.bf16.msra.mxu0 0
      %401 = vmatprep.subr.bf16.mxu0 0
      %402 = vmatpush2.bf16.msra.mxu0 0
      %403 = vmatprep.subr.bf16.mxu0 0
      %404 = vmatpush2.bf16.msra.mxu0 0
      %405 = vmatprep.subr.bf16.mxu0 0
      %406 = vmatpush2.bf16.msra.mxu0 0
      %407 = vmatprep.subr.bf16.mxu0 0
      %408 = vmatpush2.bf16.msra.mxu0 0
      %409 = vmatprep.subr.bf16.mxu0 0
      %410 = vmatpush2.bf16.msra.mxu0 0
      %411 = vmatprep.subr.bf16.mxu0 0
      %412 = vmatpush2.bf16.msra.mxu0 0
      %413 = vmatprep.mubr.bf16.mxu0 0
      %414 = vmatmul.mubr.bf16.gmra.mxu0 %v323
      %v415 = vpop.f32.mrf.mxu0
      %v416 = vadd.f32 0.0, %v415
      %v417 = vpop.f32.mrf.mxu0
      %v418 = vpop.f32.mrf.mxu0
      %v419 = vadd.f32 0.0, %v418
      %v420 = vpop.f32.mrf.mxu0
      %421 = vmatprep.mubr.bf16.mxu0 0
      %422 = vmatmul.mubr.bf16.gmra.mxu0 %v326
      %v423 = vpop.f32.mrf.mxu0
      %v424 = vadd.f32 0.0, %v423
      %v425 = vpop.f32.mrf.mxu0
      %v426 = vpop.f32.mrf.mxu0
      %v427 = vadd.f32 0.0, %v426
      %v428 = vpop.f32.mrf.mxu0
      %429 = vdwg.mxu0
      %v430 = vpack.c.bf16 %v367, %v363
      %v431 = vpack.c.bf16 %v377, %v373
      %v432 = vpack.c.bf16 %v369, %v365
      %v433 = vpack.c.bf16 %v379, %v375
      %v434 = vpack.c.bf16 %v419, %v416
      %v435 = vpack.c.bf16 %v427, %v424
      %v437 = vsel %vm321, %v430, 0
      %v440 = vsel %vm321, %v432, 0
      %442 = vmatprep.subr.bf16.mxu0 0
      %443 = vmatpush1.bf16.xpose.msra.mxu0 0
      %444 = vmatprep.subr.bf16.mxu0 0
      %445 = vmatpush1.bf16.xpose.msra.mxu0 0
      %446 = vmatprep.subr.bf16.mxu0 0
      %447 = vmatpush1.bf16.xpose.msra.mxu0 0
      %448 = vmatprep.subr.bf16.mxu0 0
      %449 = vmatpush1.bf16.xpose.msra.mxu0 0
      %450 = vmatprep.subr.bf16.mxu0 0
      %451 = vmatpush1.bf16.xpose.msra.mxu0 0
      %452 = vmatprep.subr.bf16.mxu0 0
      %453 = vmatpush1.bf16.xpose.msra.mxu0 0
      %454 = vmatprep.subr.bf16.mxu0 0
      %455 = vmatpush1.bf16.xpose.msra.mxu0 0
      %456 = vmatprep.subr.bf16.mxu0 0
      %457 = vmatpush1.bf16.xpose.msra.mxu0 %v440
      %458 = vmatprep.subr.bf16.mxu0 0
      %459 = vmatpush2.bf16.xpose.msra.mxu0 0
      %460 = vmatprep.subr.bf16.mxu0 0
      %461 = vmatpush2.bf16.xpose.msra.mxu0 0
      %462 = vmatprep.subr.bf16.mxu0 0
      %463 = vmatpush2.bf16.xpose.msra.mxu0 0
      %464 = vmatprep.subr.bf16.mxu0 0
      %465 = vmatpush2.bf16.xpose.msra.mxu0 0
      %466 = vmatprep.subr.bf16.mxu0 0
      %467 = vmatpush2.bf16.xpose.msra.mxu0 0
      %468 = vmatprep.subr.bf16.mxu0 0
      %469 = vmatpush2.bf16.xpose.msra.mxu0 0
      %470 = vmatprep.subr.bf16.mxu0 0
      %471 = vmatpush2.bf16.xpose.msra.mxu0 0
      %472 = vmatprep.subr.bf16.mxu0 0
      %473 = vmatpush2.bf16.xpose.msra.mxu0 0
      %474 = vmatprep.mubr.bf16.mxu0 0
      %475 = vmatmul.mubr.bf16.gmra.mxu0 %v437
      %v476 = vpop.f32.mrf.mxu0
      %v477 = vadd.f32 0.0, %v476
      %v478 = vpop.f32.mrf.mxu0
      %v479 = vpop.f32.mrf.mxu0
      %v480 = vadd.f32 0.0, %v479
      %v481 = vpop.f32.mrf.mxu0
      %482 = vdwg.mxu0
      %v484 = vsel %vm321, %v431, 0
      %v487 = vsel %vm321, %v433, 0
      %489 = vmatprep.subr.bf16.mxu0 0
      %490 = vmatpush1.bf16.xpose.msra.mxu0 0
      %491 = vmatprep.subr.bf16.mxu0 0
      %492 = vmatpush1.bf16.xpose.msra.mxu0 0
      %493 = vmatprep.subr.bf16.mxu0 0
      %494 = vmatpush1.bf16.xpose.msra.mxu0 0
      %495 = vmatprep.subr.bf16.mxu0 0
      %496 = vmatpush1.bf16.xpose.msra.mxu0 0
      %497 = vmatprep.subr.bf16.mxu0 0
      %498 = vmatpush1.bf16.xpose.msra.mxu0 0
      %499 = vmatprep.subr.bf16.mxu0 0
      %500 = vmatpush1.bf16.xpose.msra.mxu0 0
      %501 = vmatprep.subr.bf16.mxu0 0
      %502 = vmatpush1.bf16.xpose.msra.mxu0 0
      %503 = vmatprep.subr.bf16.mxu0 0
      %504 = vmatpush1.bf16.xpose.msra.mxu0 %v487
      %505 = vmatprep.subr.bf16.mxu0 0
      %506 = vmatpush2.bf16.xpose.msra.mxu0 0
      %507 = vmatprep.subr.bf16.mxu0 0
      %508 = vmatpush2.bf16.xpose.msra.mxu0 0
      %509 = vmatprep.subr.bf16.mxu0 0
      %510 = vmatpush2.bf16.xpose.msra.mxu0 0
      %511 = vmatprep.subr.bf16.mxu0 0
      %512 = vmatpush2.bf16.xpose.msra.mxu0 0
      %513 = vmatprep.subr.bf16.mxu0 0
      %514 = vmatpush2.bf16.xpose.msra.mxu0 0
      %515 = vmatprep.subr.bf16.mxu0 0
      %516 = vmatpush2.bf16.xpose.msra.mxu0 0
      %517 = vmatprep.subr.bf16.mxu0 0
      %518 = vmatpush2.bf16.xpose.msra.mxu0 0
      %519 = vmatprep.subr.bf16.mxu0 0
      %520 = vmatpush2.bf16.xpose.msra.mxu0 0
      %521 = vmatprep.mubr.bf16.mxu0 0
      %522 = vmatmul.mubr.bf16.gmra.mxu0 %v484
      %v523 = vpop.f32.mrf.mxu0
      %v524 = vadd.f32 0.0, %v523
      %v525 = vpop.f32.mrf.mxu0
      %v526 = vpop.f32.mrf.mxu0
      %v527 = vadd.f32 0.0, %v526
      %v528 = vpop.f32.mrf.mxu0
      %529 = vdwg.mxu0
      %vm530 = vcmask 130048
      %v531 = vsel %vm530, %v477, -inf
      %532 = vmax.xlane.f32.xlu0 %v531
      %v533 = vpop.xlane.xlu0 %532
      %v534 = vsel %vm530, %v480, -inf
      %535 = vmax.xlane.f32.xlu0 %v534
      %v536 = vpop.xlane.xlu0 %535
      %v537 = vsel %vm530, %v524, -inf
      %538 = vmax.xlane.f32.xlu0 %v537
      %v539 = vpop.xlane.xlu0 %538
      %v540 = vsel %vm530, %v527, -inf
      %541 = vmax.xlane.f32.xlu0 %v540
      %v542 = vpop.xlane.xlu0 %541
      %v543 = vsub.f32 %v477, %v533
      %v544 = vsub.f32 %v480, %v536
      %v545 = vsub.f32 %v524, %v539
      %v546 = vsub.f32 %v527, %v542
      %v547 = vmul.f32 %v543, 1.442695
      %v548 = vpow.pop %v547
      %v549 = vmul.f32 %v544, 1.442695
      %v550 = vpow.pop %v549
      %v551 = vmul.f32 %v545, 1.442695
      %v552 = vpow.pop %v551
      %v553 = vmul.f32 %v546, 1.442695
      %v554 = vpow.pop %v553
      %v555 = vsel %vm530, %v548, 0.0
      %556 = vadd.xlane.f32.xlu0 %v555
      %v557 = vpop.xlane.xlu0 %556
      %v558 = vsel %vm530, %v550, 0.0
      %559 = vadd.xlane.f32.xlu0 %v558
      %v560 = vpop.xlane.xlu0 %559
      %v561 = vsel %vm530, %v552, 0.0
      %562 = vadd.xlane.f32.xlu0 %v561
      %v563 = vpop.xlane.xlu0 %562
      %v564 = vsel %vm530, %v554, 0.0
      %565 = vadd.xlane.f32.xlu0 %v564
      %v566 = vpop.xlane.xlu0 %565
      %v567 = vpack.c.bf16 %v550, %v548
      %v568 = vpack.c.bf16 %v554, %v552
      %v570 = vsel %vm530, %v567, 0
      %572 = vmatprep.subr.bf16.mxu0 0
      %573 = vmatpush1.bf16.msra.mxu0 0
      %574 = vmatprep.subr.bf16.mxu0 0
      %575 = vmatpush1.bf16.msra.mxu0 0
      %576 = vmatprep.subr.bf16.mxu0 0
      %577 = vmatpush1.bf16.msra.mxu0 0
      %578 = vmatprep.subr.bf16.mxu0 0
      %579 = vmatpush1.bf16.msra.mxu0 0
      %580 = vmatprep.subr.bf16.mxu0 0
      %581 = vmatpush1.bf16.msra.mxu0 0
      %582 = vmatprep.subr.bf16.mxu0 0
      %583 = vmatpush1.bf16.msra.mxu0 0
      %584 = vmatprep.subr.bf16.mxu0 0
      %585 = vmatpush1.bf16.msra.mxu0 0
      %586 = vmatprep.subr.bf16.mxu0 0
      %587 = vmatpush1.bf16.msra.mxu0 %v434
      %588 = vmatprep.subr.bf16.mxu0 0
      %589 = vmatpush2.bf16.msra.mxu0 0
      %590 = vmatprep.subr.bf16.mxu0 0
      %591 = vmatpush2.bf16.msra.mxu0 0
      %592 = vmatprep.subr.bf16.mxu0 0
      %593 = vmatpush2.bf16.msra.mxu0 0
      %594 = vmatprep.subr.bf16.mxu0 0
      %595 = vmatpush2.bf16.msra.mxu0 0
      %596 = vmatprep.subr.bf16.mxu0 0
      %597 = vmatpush2.bf16.msra.mxu0 0
      %598 = vmatprep.subr.bf16.mxu0 0
      %599 = vmatpush2.bf16.msra.mxu0 0
      %600 = vmatprep.subr.bf16.mxu0 0
      %601 = vmatpush2.bf16.msra.mxu0 0
      %602 = vmatprep.subr.bf16.mxu0 0
      %603 = vmatpush2.bf16.msra.mxu0 0
      %604 = vmatprep.mubr.bf16.mxu0 0
      %605 = vmatmul.mubr.bf16.gmra.mxu0 %v570
      %v606 = vpop.f32.mrf.mxu0
      %v607 = vadd.f32 0.0, %v606
      %v608 = vpop.f32.mrf.mxu0
      %v609 = vpop.f32.mrf.mxu0
      %v610 = vadd.f32 0.0, %v609
      %v611 = vpop.f32.mrf.mxu0
      %612 = vdwg.mxu0
      %v614 = vsel %vm530, %v568, 0
      %616 = vmatprep.subr.bf16.mxu0 0
      %617 = vmatpush1.bf16.msra.mxu0 0
      %618 = vmatprep.subr.bf16.mxu0 0
      %619 = vmatpush1.bf16.msra.mxu0 0
      %620 = vmatprep.subr.bf16.mxu0 0
      %621 = vmatpush1.bf16.msra.mxu0 0
      %622 = vmatprep.subr.bf16.mxu0 0
      %623 = vmatpush1.bf16.msra.mxu0 0
      %624 = vmatprep.subr.bf16.mxu0 0
      %625 = vmatpush1.bf16.msra.mxu0 0
      %626 = vmatprep.subr.bf16.mxu0 0
      %627 = vmatpush1.bf16.msra.mxu0 0
      %628 = vmatprep.subr.bf16.mxu0 0
      %629 = vmatpush1.bf16.msra.mxu0 0
      %630 = vmatprep.subr.bf16.mxu0 0
      %631 = vmatpush1.bf16.msra.mxu0 %v435
      %632 = vmatprep.subr.bf16.mxu0 0
      %633 = vmatpush2.bf16.msra.mxu0 0
      %634 = vmatprep.subr.bf16.mxu0 0
      %635 = vmatpush2.bf16.msra.mxu0 0
      %636 = vmatprep.subr.bf16.mxu0 0
      %637 = vmatpush2.bf16.msra.mxu0 0
      %638 = vmatprep.subr.bf16.mxu0 0
      %639 = vmatpush2.bf16.msra.mxu0 0
      %640 = vmatprep.subr.bf16.mxu0 0
      %641 = vmatpush2.bf16.msra.mxu0 0
      %642 = vmatprep.subr.bf16.mxu0 0
      %643 = vmatpush2.bf16.msra.mxu0 0
      %644 = vmatprep.subr.bf16.mxu0 0
      %645 = vmatpush2.bf16.msra.mxu0 0
      %646 = vmatprep.subr.bf16.mxu0 0
      %647 = vmatpush2.bf16.msra.mxu0 0
      %648 = vmatprep.mubr.bf16.mxu0 0
      %649 = vmatmul.mubr.bf16.gmra.mxu0 %v614
      %v650 = vpop.f32.mrf.mxu0
      %v651 = vadd.f32 0.0, %v650
      %v652 = vpop.f32.mrf.mxu0
      %v653 = vpop.f32.mrf.mxu0
      %v654 = vadd.f32 0.0, %v653
      %v655 = vpop.f32.mrf.mxu0
      %656 = vdwg.mxu0
      %v657 = vrcp.pop %v557
      %v658 = vrcp.pop %v560
      %v659 = vrcp.pop %v563
      %v660 = vrcp.pop %v566
      %v661 = vmul.f32 %v607, %v657
      %v662 = vmul.f32 %v610, %v658
      %v663 = vmul.f32 %v651, %v659
      %v664 = vmul.f32 %v654, %v660
      %666 = vrot.lane.b32.xlu0 %v430, 96
      %v667 = vpop.permute.xlu0 %666
      %669 = vrot.lane.b32.xlu0 %v432, 96
      %v670 = vpop.permute.xlu0 %669
      %v672 = vsel %vm321, %v667, 0
      %v675 = vsel %vm321, %v670, 0
      %677 = vmatprep.subr.bf16.mxu0 0
      %678 = vmatpush1.bf16.xpose.msra.mxu0 0
      %679 = vmatprep.subr.bf16.mxu0 0
      %680 = vmatpush1.bf16.xpose.msra.mxu0 0
      %681 = vmatprep.subr.bf16.mxu0 0
      %682 = vmatpush1.bf16.xpose.msra.mxu0 0
      %683 = vmatprep.subr.bf16.mxu0 0
      %684 = vmatpush1.bf16.xpose.msra.mxu0 0
      %685 = vmatprep.subr.bf16.mxu0 0
      %686 = vmatpush1.bf16.xpose.msra.mxu0 0
      %687 = vmatprep.subr.bf16.mxu0 0
      %688 = vmatpush1.bf16.xpose.msra.mxu0 0
      %689 = vmatprep.subr.bf16.mxu0 0
      %690 = vmatpush1.bf16.xpose.msra.mxu0 0
      %691 = vmatprep.subr.bf16.mxu0 0
      %692 = vmatpush1.bf16.xpose.msra.mxu0 %v675
      %693 = vmatprep.subr.bf16.mxu0 0
      %694 = vmatpush2.bf16.xpose.msra.mxu0 0
      %695 = vmatprep.subr.bf16.mxu0 0
      %696 = vmatpush2.bf16.xpose.msra.mxu0 0
      %697 = vmatprep.subr.bf16.mxu0 0
      %698 = vmatpush2.bf16.xpose.msra.mxu0 0
      %699 = vmatprep.subr.bf16.mxu0 0
      %700 = vmatpush2.bf16.xpose.msra.mxu0 0
      %701 = vmatprep.subr.bf16.mxu0 0
      %702 = vmatpush2.bf16.xpose.msra.mxu0 0
      %703 = vmatprep.subr.bf16.mxu0 0
      %704 = vmatpush2.bf16.xpose.msra.mxu0 0
      %705 = vmatprep.subr.bf16.mxu0 0
      %706 = vmatpush2.bf16.xpose.msra.mxu0 0
      %707 = vmatprep.subr.bf16.mxu0 0
      %708 = vmatpush2.bf16.xpose.msra.mxu0 0
      %709 = vmatprep.mubr.bf16.mxu0 0
      %710 = vmatmul.mubr.bf16.gmra.mxu0 %v672
      %v711 = vpop.f32.mrf.mxu0
      %v712 = vadd.f32 0.0, %v711
      %v713 = vpop.f32.mrf.mxu0
      %v714 = vpop.f32.mrf.mxu0
      %v715 = vadd.f32 0.0, %v714
      %v716 = vpop.f32.mrf.mxu0
      %717 = vdwg.mxu0
      %719 = vrot.lane.b32.xlu0 %v431, 96
      %v720 = vpop.permute.xlu0 %719
      %722 = vrot.lane.b32.xlu0 %v433, 96
      %v723 = vpop.permute.xlu0 %722
      %v725 = vsel %vm321, %v720, 0
      %v728 = vsel %vm321, %v723, 0
      %730 = vmatprep.subr.bf16.mxu0 0
      %731 = vmatpush1.bf16.xpose.msra.mxu0 0
      %732 = vmatprep.subr.bf16.mxu0 0
      %733 = vmatpush1.bf16.xpose.msra.mxu0 0
      %734 = vmatprep.subr.bf16.mxu0 0
      %735 = vmatpush1.bf16.xpose.msra.mxu0 0
      %736 = vmatprep.subr.bf16.mxu0 0
      %737 = vmatpush1.bf16.xpose.msra.mxu0 0
      %738 = vmatprep.subr.bf16.mxu0 0
      %739 = vmatpush1.bf16.xpose.msra.mxu0 0
      %740 = vmatprep.subr.bf16.mxu0 0
      %741 = vmatpush1.bf16.xpose.msra.mxu0 0
      %742 = vmatprep.subr.bf16.mxu0 0
      %743 = vmatpush1.bf16.xpose.msra.mxu0 0
      %744 = vmatprep.subr.bf16.mxu0 0
      %745 = vmatpush1.bf16.xpose.msra.mxu0 %v728
      %746 = vmatprep.subr.bf16.mxu0 0
      %747 = vmatpush2.bf16.xpose.msra.mxu0 0
      %748 = vmatprep.subr.bf16.mxu0 0
      %749 = vmatpush2.bf16.xpose.msra.mxu0 0
      %750 = vmatprep.subr.bf16.mxu0 0
      %751 = vmatpush2.bf16.xpose.msra.mxu0 0
      %752 = vmatprep.subr.bf16.mxu0 0
      %753 = vmatpush2.bf16.xpose.msra.mxu0 0
      %754 = vmatprep.subr.bf16.mxu0 0
      %755 = vmatpush2.bf16.xpose.msra.mxu0 0
      %756 = vmatprep.subr.bf16.mxu0 0
      %757 = vmatpush2.bf16.xpose.msra.mxu0 0
      %758 = vmatprep.subr.bf16.mxu0 0
      %759 = vmatpush2.bf16.xpose.msra.mxu0 0
      %760 = vmatprep.subr.bf16.mxu0 0
      %761 = vmatpush2.bf16.xpose.msra.mxu0 0
      %762 = vmatprep.mubr.bf16.mxu0 0
      %763 = vmatmul.mubr.bf16.gmra.mxu0 %v725
      %v764 = vpop.f32.mrf.mxu0
      %v765 = vadd.f32 0.0, %v764
      %v766 = vpop.f32.mrf.mxu0
      %v767 = vpop.f32.mrf.mxu0
      %v768 = vadd.f32 0.0, %v767
      %v769 = vpop.f32.mrf.mxu0
      %770 = vdwg.mxu0
      %v771 = vsel %vm530, %v712, -inf
      %772 = vmax.xlane.f32.xlu0 %v771
      %v773 = vpop.xlane.xlu0 %772
      %v774 = vsel %vm530, %v715, -inf
      %775 = vmax.xlane.f32.xlu0 %v774
      %v776 = vpop.xlane.xlu0 %775
      %v777 = vsel %vm530, %v765, -inf
      %778 = vmax.xlane.f32.xlu0 %v777
      %v779 = vpop.xlane.xlu0 %778
      %v780 = vsel %vm530, %v768, -inf
      %781 = vmax.xlane.f32.xlu0 %v780
      %v782 = vpop.xlane.xlu0 %781
      %v783 = vsub.f32 %v712, %v773
      %v784 = vsub.f32 %v715, %v776
      %v785 = vsub.f32 %v765, %v779
      %v786 = vsub.f32 %v768, %v782
      %v787 = vmul.f32 %v783, 1.442695
      %v788 = vpow.pop %v787
      %v789 = vmul.f32 %v784, 1.442695
      %v790 = vpow.pop %v789
      %v791 = vmul.f32 %v785, 1.442695
      %v792 = vpow.pop %v791
      %v793 = vmul.f32 %v786, 1.442695
      %v794 = vpow.pop %v793
      %v795 = vsel %vm530, %v788, 0.0
      %796 = vadd.xlane.f32.xlu0 %v795
      %v797 = vpop.xlane.xlu0 %796
      %v798 = vsel %vm530, %v790, 0.0
      %799 = vadd.xlane.f32.xlu0 %v798
      %v800 = vpop.xlane.xlu0 %799
      %v801 = vsel %vm530, %v792, 0.0
      %802 = vadd.xlane.f32.xlu0 %v801
      %v803 = vpop.xlane.xlu0 %802
      %v804 = vsel %vm530, %v794, 0.0
      %805 = vadd.xlane.f32.xlu0 %v804
      %v806 = vpop.xlane.xlu0 %805
      %v807 = vpack.c.bf16 %v790, %v788
      %v808 = vpack.c.bf16 %v794, %v792
      %810 = vrot.lane.b32.xlu0 %v434, 96
      %v811 = vpop.permute.xlu0 %810
      %v814 = vsel %vm530, %v807, 0
      %816 = vmatprep.subr.bf16.mxu0 0
      %817 = vmatpush1.bf16.msra.mxu0 0
      %818 = vmatprep.subr.bf16.mxu0 0
      %819 = vmatpush1.bf16.msra.mxu0 0
      %820 = vmatprep.subr.bf16.mxu0 0
      %821 = vmatpush1.bf16.msra.mxu0 0
      %822 = vmatprep.subr.bf16.mxu0 0
      %823 = vmatpush1.bf16.msra.mxu0 0
      %824 = vmatprep.subr.bf16.mxu0 0
      %825 = vmatpush1.bf16.msra.mxu0 0
      %826 = vmatprep.subr.bf16.mxu0 0
      %827 = vmatpush1.bf16.msra.mxu0 0
      %828 = vmatprep.subr.bf16.mxu0 0
      %829 = vmatpush1.bf16.msra.mxu0 0
      %830 = vmatprep.subr.bf16.mxu0 0
      %831 = vmatpush1.bf16.msra.mxu0 %v811
      %832 = vmatprep.subr.bf16.mxu0 0
      %833 = vmatpush2.bf16.msra.mxu0 0
      %834 = vmatprep.subr.bf16.mxu0 0
      %835 = vmatpush2.bf16.msra.mxu0 0
      %836 = vmatprep.subr.bf16.mxu0 0
      %837 = vmatpush2.bf16.msra.mxu0 0
      %838 = vmatprep.subr.bf16.mxu0 0
      %839 = vmatpush2.bf16.msra.mxu0 0
      %840 = vmatprep.subr.bf16.mxu0 0
      %841 = vmatpush2.bf16.msra.mxu0 0
      %842 = vmatprep.subr.bf16.mxu0 0
      %843 = vmatpush2.bf16.msra.mxu0 0
      %844 = vmatprep.subr.bf16.mxu0 0
      %845 = vmatpush2.bf16.msra.mxu0 0
      %846 = vmatprep.subr.bf16.mxu0 0
      %847 = vmatpush2.bf16.msra.mxu0 0
      %848 = vmatprep.mubr.bf16.mxu0 0
      %849 = vmatmul.mubr.bf16.gmra.mxu0 %v814
      %v850 = vpop.f32.mrf.mxu0
      %v851 = vadd.f32 0.0, %v850
      %v852 = vpop.f32.mrf.mxu0
      %v853 = vpop.f32.mrf.mxu0
      %v854 = vadd.f32 0.0, %v853
      %v855 = vpop.f32.mrf.mxu0
      %856 = vdwg.mxu0
      %858 = vrot.lane.b32.xlu0 %v435, 96
      %v859 = vpop.permute.xlu0 %858
      %v862 = vsel %vm530, %v808, 0
      %864 = vmatprep.subr.bf16.mxu0 0
      %865 = vmatpush1.bf16.msra.mxu0 0
      %866 = vmatprep.subr.bf16.mxu0 0
      %867 = vmatpush1.bf16.msra.mxu0 0
      %868 = vmatprep.subr.bf16.mxu0 0
      %869 = vmatpush1.bf16.msra.mxu0 0
      %870 = vmatprep.subr.bf16.mxu0 0
      %871 = vmatpush1.bf16.msra.mxu0 0
      %872 = vmatprep.subr.bf16.mxu0 0
      %873 = vmatpush1.bf16.msra.mxu0 0
      %874 = vmatprep.subr.bf16.mxu0 0
      %875 = vmatpush1.bf16.msra.mxu0 0
      %876 = vmatprep.subr.bf16.mxu0 0
      %877 = vmatpush1.bf16.msra.mxu0 0
      %878 = vmatprep.subr.bf16.mxu0 0
      %879 = vmatpush1.bf16.msra.mxu0 %v859
      %880 = vmatprep.subr.bf16.mxu0 0
      %881 = vmatpush2.bf16.msra.mxu0 0
      %882 = vmatprep.subr.bf16.mxu0 0
      %883 = vmatpush2.bf16.msra.mxu0 0
      %884 = vmatprep.subr.bf16.mxu0 0
      %885 = vmatpush2.bf16.msra.mxu0 0
      %886 = vmatprep.subr.bf16.mxu0 0
      %887 = vmatpush2.bf16.msra.mxu0 0
      %888 = vmatprep.subr.bf16.mxu0 0
      %889 = vmatpush2.bf16.msra.mxu0 0
      %890 = vmatprep.subr.bf16.mxu0 0
      %891 = vmatpush2.bf16.msra.mxu0 0
      %892 = vmatprep.subr.bf16.mxu0 0
      %893 = vmatpush2.bf16.msra.mxu0 0
      %894 = vmatprep.subr.bf16.mxu0 0
      %895 = vmatpush2.bf16.msra.mxu0 0
      %896 = vmatprep.mubr.bf16.mxu0 0
      %897 = vmatmul.mubr.bf16.gmra.mxu0 %v862
      %v898 = vpop.f32.mrf.mxu0
      %v899 = vadd.f32 0.0, %v898
      %v900 = vpop.f32.mrf.mxu0
      %v901 = vpop.f32.mrf.mxu0
      %v902 = vadd.f32 0.0, %v901
      %v903 = vpop.f32.mrf.mxu0
      %904 = vdwg.mxu0
      %v905 = vrcp.pop %v797
      %v906 = vrcp.pop %v800
      %v907 = vrcp.pop %v803
      %v908 = vrcp.pop %v806
      %v909 = vmul.f32 %v851, %v905
      %v910 = vmul.f32 %v854, %v906
      %v911 = vmul.f32 %v899, %v907
      %v912 = vmul.f32 %v902, %v908
      %913 = vrot.lane.b32.xlu0 %v430, 64
      %v914 = vpop.permute.xlu0 %913
      %915 = vrot.lane.b32.xlu0 %v432, 64
      %v916 = vpop.permute.xlu0 %915
      %v918 = vsel %vm321, %v914, 0
      %v921 = vsel %vm321, %v916, 0
      %923 = vmatprep.subr.bf16.mxu0 0
      %924 = vmatpush1.bf16.xpose.msra.mxu0 0
      %925 = vmatprep.subr.bf16.mxu0 0
      %926 = vmatpush1.bf16.xpose.msra.mxu0 0
      %927 = vmatprep.subr.bf16.mxu0 0
      %928 = vmatpush1.bf16.xpose.msra.mxu0 0
      %929 = vmatprep.subr.bf16.mxu0 0
      %930 = vmatpush1.bf16.xpose.msra.mxu0 0
      %931 = vmatprep.subr.bf16.mxu0 0
      %932 = vmatpush1.bf16.xpose.msra.mxu0 0
      %933 = vmatprep.subr.bf16.mxu0 0
      %934 = vmatpush1.bf16.xpose.msra.mxu0 0
      %935 = vmatprep.subr.bf16.mxu0 0
      %936 = vmatpush1.bf16.xpose.msra.mxu0 0
      %937 = vmatprep.subr.bf16.mxu0 0
      %938 = vmatpush1.bf16.xpose.msra.mxu0 %v921
      %939 = vmatprep.subr.bf16.mxu0 0
      %940 = vmatpush2.bf16.xpose.msra.mxu0 0
      %941 = vmatprep.subr.bf16.mxu0 0
      %942 = vmatpush2.bf16.xpose.msra.mxu0 0
      %943 = vmatprep.subr.bf16.mxu0 0
      %944 = vmatpush2.bf16.xpose.msra.mxu0 0
      %945 = vmatprep.subr.bf16.mxu0 0
      %946 = vmatpush2.bf16.xpose.msra.mxu0 0
      %947 = vmatprep.subr.bf16.mxu0 0
      %948 = vmatpush2.bf16.xpose.msra.mxu0 0
      %949 = vmatprep.subr.bf16.mxu0 0
      %950 = vmatpush2.bf16.xpose.msra.mxu0 0
      %951 = vmatprep.subr.bf16.mxu0 0
      %952 = vmatpush2.bf16.xpose.msra.mxu0 0
      %953 = vmatprep.subr.bf16.mxu0 0
      %954 = vmatpush2.bf16.xpose.msra.mxu0 0
      %955 = vmatprep.mubr.bf16.mxu0 0
      %956 = vmatmul.mubr.bf16.gmra.mxu0 %v918
      %v957 = vpop.f32.mrf.mxu0
      %v958 = vadd.f32 0.0, %v957
      %v959 = vpop.f32.mrf.mxu0
      %v960 = vpop.f32.mrf.mxu0
      %v961 = vadd.f32 0.0, %v960
      %v962 = vpop.f32.mrf.mxu0
      %963 = vdwg.mxu0
      %964 = vrot.lane.b32.xlu0 %v431, 64
      %v965 = vpop.permute.xlu0 %964
      %966 = vrot.lane.b32.xlu0 %v433, 64
      %v967 = vpop.permute.xlu0 %966
      %v969 = vsel %vm321, %v965, 0
      %v972 = vsel %vm321, %v967, 0
      %974 = vmatprep.subr.bf16.mxu0 0
      %975 = vmatpush1.bf16.xpose.msra.mxu0 0
      %976 = vmatprep.subr.bf16.mxu0 0
      %977 = vmatpush1.bf16.xpose.msra.mxu0 0
      %978 = vmatprep.subr.bf16.mxu0 0
      %979 = vmatpush1.bf16.xpose.msra.mxu0 0
      %980 = vmatprep.subr.bf16.mxu0 0
      %981 = vmatpush1.bf16.xpose.msra.mxu0 0
      %982 = vmatprep.subr.bf16.mxu0 0
      %983 = vmatpush1.bf16.xpose.msra.mxu0 0
      %984 = vmatprep.subr.bf16.mxu0 0
      %985 = vmatpush1.bf16.xpose.msra.mxu0 0
      %986 = vmatprep.subr.bf16.mxu0 0
      %987 = vmatpush1.bf16.xpose.msra.mxu0 0
      %988 = vmatprep.subr.bf16.mxu0 0
      %989 = vmatpush1.bf16.xpose.msra.mxu0 %v972
      %990 = vmatprep.subr.bf16.mxu0 0
      %991 = vmatpush2.bf16.xpose.msra.mxu0 0
      %992 = vmatprep.subr.bf16.mxu0 0
      %993 = vmatpush2.bf16.xpose.msra.mxu0 0
      %994 = vmatprep.subr.bf16.mxu0 0
      %995 = vmatpush2.bf16.xpose.msra.mxu0 0
      %996 = vmatprep.subr.bf16.mxu0 0
      %997 = vmatpush2.bf16.xpose.msra.mxu0 0
      %998 = vmatprep.subr.bf16.mxu0 0
      %999 = vmatpush2.bf16.xpose.msra.mxu0 0
      %1000 = vmatprep.subr.bf16.mxu0 0
      %1001 = vmatpush2.bf16.xpose.msra.mxu0 0
      %1002 = vmatprep.subr.bf16.mxu0 0
      %1003 = vmatpush2.bf16.xpose.msra.mxu0 0
      %1004 = vmatprep.subr.bf16.mxu0 0
      %1005 = vmatpush2.bf16.xpose.msra.mxu0 0
      %1006 = vmatprep.mubr.bf16.mxu0 0
      %1007 = vmatmul.mubr.bf16.gmra.mxu0 %v969
      %v1008 = vpop.f32.mrf.mxu0
      %v1009 = vadd.f32 0.0, %v1008
      %v1010 = vpop.f32.mrf.mxu0
      %v1011 = vpop.f32.mrf.mxu0
      %v1012 = vadd.f32 0.0, %v1011
      %v1013 = vpop.f32.mrf.mxu0
      %1014 = vdwg.mxu0
      %v1015 = vsel %vm530, %v958, -inf
      %1016 = vmax.xlane.f32.xlu0 %v1015
      %v1017 = vpop.xlane.xlu0 %1016
      %v1018 = vsel %vm530, %v961, -inf
      %1019 = vmax.xlane.f32.xlu0 %v1018
      %v1020 = vpop.xlane.xlu0 %1019
      %v1021 = vsel %vm530, %v1009, -inf
      %1022 = vmax.xlane.f32.xlu0 %v1021
      %v1023 = vpop.xlane.xlu0 %1022
      %v1024 = vsel %vm530, %v1012, -inf
      %1025 = vmax.xlane.f32.xlu0 %v1024
      %v1026 = vpop.xlane.xlu0 %1025
      %v1027 = vsub.f32 %v958, %v1017
      %v1028 = vsub.f32 %v961, %v1020
      %v1029 = vsub.f32 %v1009, %v1023
      %v1030 = vsub.f32 %v1012, %v1026
      %v1031 = vmul.f32 %v1027, 1.442695
      %v1032 = vpow.pop %v1031
      %v1033 = vmul.f32 %v1028, 1.442695
      %v1034 = vpow.pop %v1033
      %v1035 = vmul.f32 %v1029, 1.442695
      %v1036 = vpow.pop %v1035
      %v1037 = vmul.f32 %v1030, 1.442695
      %v1038 = vpow.pop %v1037
      %v1039 = vsel %vm530, %v1032, 0.0
      %1040 = vadd.xlane.f32.xlu0 %v1039
      %v1041 = vpop.xlane.xlu0 %1040
      %v1042 = vsel %vm530, %v1034, 0.0
      %1043 = vadd.xlane.f32.xlu0 %v1042
      %v1044 = vpop.xlane.xlu0 %1043
      %v1045 = vsel %vm530, %v1036, 0.0
      %1046 = vadd.xlane.f32.xlu0 %v1045
      %v1047 = vpop.xlane.xlu0 %1046
      %v1048 = vsel %vm530, %v1038, 0.0
      %1049 = vadd.xlane.f32.xlu0 %v1048
      %v1050 = vpop.xlane.xlu0 %1049
      %v1051 = vpack.c.bf16 %v1034, %v1032
      %v1052 = vpack.c.bf16 %v1038, %v1036
      %1053 = vrot.lane.b32.xlu0 %v434, 64
      %v1054 = vpop.permute.xlu0 %1053
      %v1057 = vsel %vm530, %v1051, 0
      %1059 = vmatprep.subr.bf16.mxu0 0
      %1060 = vmatpush1.bf16.msra.mxu0 0
      %1061 = vmatprep.subr.bf16.mxu0 0
      %1062 = vmatpush1.bf16.msra.mxu0 0
      %1063 = vmatprep.subr.bf16.mxu0 0
      %1064 = vmatpush1.bf16.msra.mxu0 0
      %1065 = vmatprep.subr.bf16.mxu0 0
      %1066 = vmatpush1.bf16.msra.mxu0 0
      %1067 = vmatprep.subr.bf16.mxu0 0
      %1068 = vmatpush1.bf16.msra.mxu0 0
      %1069 = vmatprep.subr.bf16.mxu0 0
      %1070 = vmatpush1.bf16.msra.mxu0 0
      %1071 = vmatprep.subr.bf16.mxu0 0
      %1072 = vmatpush1.bf16.msra.mxu0 0
      %1073 = vmatprep.subr.bf16.mxu0 0
      %1074 = vmatpush1.bf16.msra.mxu0 %v1054
      %1075 = vmatprep.subr.bf16.mxu0 0
      %1076 = vmatpush2.bf16.msra.mxu0 0
      %1077 = vmatprep.subr.bf16.mxu0 0
      %1078 = vmatpush2.bf16.msra.mxu0 0
      %1079 = vmatprep.subr.bf16.mxu0 0
      %1080 = vmatpush2.bf16.msra.mxu0 0
      %1081 = vmatprep.subr.bf16.mxu0 0
      %1082 = vmatpush2.bf16.msra.mxu0 0
      %1083 = vmatprep.subr.bf16.mxu0 0
      %1084 = vmatpush2.bf16.msra.mxu0 0
      %1085 = vmatprep.subr.bf16.mxu0 0
      %1086 = vmatpush2.bf16.msra.mxu0 0
      %1087 = vmatprep.subr.bf16.mxu0 0
      %1088 = vmatpush2.bf16.msra.mxu0 0
      %1089 = vmatprep.subr.bf16.mxu0 0
      %1090 = vmatpush2.bf16.msra.mxu0 0
      %1091 = vmatprep.mubr.bf16.mxu0 0
      %1092 = vmatmul.mubr.bf16.gmra.mxu0 %v1057
      %v1093 = vpop.f32.mrf.mxu0
      %v1094 = vadd.f32 0.0, %v1093
      %v1095 = vpop.f32.mrf.mxu0
      %v1096 = vpop.f32.mrf.mxu0
      %v1097 = vadd.f32 0.0, %v1096
      %v1098 = vpop.f32.mrf.mxu0
      %1099 = vdwg.mxu0
      %1100 = vrot.lane.b32.xlu0 %v435, 64
      %v1101 = vpop.permute.xlu0 %1100
      %v1104 = vsel %vm530, %v1052, 0
      %1106 = vmatprep.subr.bf16.mxu0 0
      %1107 = vmatpush1.bf16.msra.mxu0 0
      %1108 = vmatprep.subr.bf16.mxu0 0
      %1109 = vmatpush1.bf16.msra.mxu0 0
      %1110 = vmatprep.subr.bf16.mxu0 0
      %1111 = vmatpush1.bf16.msra.mxu0 0
      %1112 = vmatprep.subr.bf16.mxu0 0
      %1113 = vmatpush1.bf16.msra.mxu0 0
      %1114 = vmatprep.subr.bf16.mxu0 0
      %1115 = vmatpush1.bf16.msra.mxu0 0
      %1116 = vmatprep.subr.bf16.mxu0 0
      %1117 = vmatpush1.bf16.msra.mxu0 0
      %1118 = vmatprep.subr.bf16.mxu0 0
      %1119 = vmatpush1.bf16.msra.mxu0 0
      %1120 = vmatprep.subr.bf16.mxu0 0
      %1121 = vmatpush1.bf16.msra.mxu0 %v1101
      %1122 = vmatprep.subr.bf16.mxu0 0
      %1123 = vmatpush2.bf16.msra.mxu0 0
      %1124 = vmatprep.subr.bf16.mxu0 0
      %1125 = vmatpush2.bf16.msra.mxu0 0
      %1126 = vmatprep.subr.bf16.mxu0 0
      %1127 = vmatpush2.bf16.msra.mxu0 0
      %1128 = vmatprep.subr.bf16.mxu0 0
      %1129 = vmatpush2.bf16.msra.mxu0 0
      %1130 = vmatprep.subr.bf16.mxu0 0
      %1131 = vmatpush2.bf16.msra.mxu0 0
      %1132 = vmatprep.subr.bf16.mxu0 0
      %1133 = vmatpush2.bf16.msra.mxu0 0
      %1134 = vmatprep.subr.bf16.mxu0 0
      %1135 = vmatpush2.bf16.msra.mxu0 0
      %1136 = vmatprep.subr.bf16.mxu0 0
      %1137 = vmatpush2.bf16.msra.mxu0 0
      %1138 = vmatprep.mubr.bf16.mxu0 0
      %1139 = vmatmul.mubr.bf16.gmra.mxu0 %v1104
      %v1140 = vpop.f32.mrf.mxu0
      %v1141 = vadd.f32 0.0, %v1140
      %v1142 = vpop.f32.mrf.mxu0
      %v1143 = vpop.f32.mrf.mxu0
      %v1144 = vadd.f32 0.0, %v1143
      %v1145 = vpop.f32.mrf.mxu0
      %1146 = vdwg.mxu0
      %v1147 = vrcp.pop %v1041
      %v1148 = vrcp.pop %v1044
      %v1149 = vrcp.pop %v1047
      %v1150 = vrcp.pop %v1050
      %v1151 = vmul.f32 %v1094, %v1147
      %v1152 = vmul.f32 %v1097, %v1148
      %v1153 = vmul.f32 %v1141, %v1149
      %v1154 = vmul.f32 %v1144, %v1150
      %1155 = vrot.lane.b32.xlu0 %v430, 32
      %v1156 = vpop.permute.xlu0 %1155
      %1157 = vrot.lane.b32.xlu0 %v432, 32
      %v1158 = vpop.permute.xlu0 %1157
      %v1160 = vsel %vm321, %v1156, 0
      %v1163 = vsel %vm321, %v1158, 0
      %1165 = vmatprep.subr.bf16.mxu0 0
      %1166 = vmatpush1.bf16.xpose.msra.mxu0 0
      %1167 = vmatprep.subr.bf16.mxu0 0
      %1168 = vmatpush1.bf16.xpose.msra.mxu0 0
      %1169 = vmatprep.subr.bf16.mxu0 0
      %1170 = vmatpush1.bf16.xpose.msra.mxu0 0
      %1171 = vmatprep.subr.bf16.mxu0 0
      %1172 = vmatpush1.bf16.xpose.msra.mxu0 0
      %1173 = vmatprep.subr.bf16.mxu0 0
      %1174 = vmatpush1.bf16.xpose.msra.mxu0 0
      %1175 = vmatprep.subr.bf16.mxu0 0
      %1176 = vmatpush1.bf16.xpose.msra.mxu0 0
      %1177 = vmatprep.subr.bf16.mxu0 0
      %1178 = vmatpush1.bf16.xpose.msra.mxu0 0
      %1179 = vmatprep.subr.bf16.mxu0 0
      %1180 = vmatpush1.bf16.xpose.msra.mxu0 %v1163
      %1181 = vmatprep.subr.bf16.mxu0 0
      %1182 = vmatpush2.bf16.xpose.msra.mxu0 0
      %1183 = vmatprep.subr.bf16.mxu0 0
      %1184 = vmatpush2.bf16.xpose.msra.mxu0 0
      %1185 = vmatprep.subr.bf16.mxu0 0
      %1186 = vmatpush2.bf16.xpose.msra.mxu0 0
      %1187 = vmatprep.subr.bf16.mxu0 0
      %1188 = vmatpush2.bf16.xpose.msra.mxu0 0
      %1189 = vmatprep.subr.bf16.mxu0 0
      %1190 = vmatpush2.bf16.xpose.msra.mxu0 0
      %1191 = vmatprep.subr.bf16.mxu0 0
      %1192 = vmatpush2.bf16.xpose.msra.mxu0 0
      %1193 = vmatprep.subr.bf16.mxu0 0
      %1194 = vmatpush2.bf16.xpose.msra.mxu0 0
      %1195 = vmatprep.subr.bf16.mxu0 0
      %1196 = vmatpush2.bf16.xpose.msra.mxu0 0
      %1197 = vmatprep.mubr.bf16.mxu0 0
      %1198 = vmatmul.mubr.bf16.gmra.mxu0 %v1160
      %v1199 = vpop.f32.mrf.mxu0
      %v1200 = vadd.f32 0.0, %v1199
      %v1201 = vpop.f32.mrf.mxu0
      %v1202 = vpop.f32.mrf.mxu0
      %v1203 = vadd.f32 0.0, %v1202
      %v1204 = vpop.f32.mrf.mxu0
      %1205 = vdwg.mxu0
      %1206 = vrot.lane.b32.xlu0 %v431, 32
      %v1207 = vpop.permute.xlu0 %1206
      %1208 = vrot.lane.b32.xlu0 %v433, 32
      %v1209 = vpop.permute.xlu0 %1208
      %v1211 = vsel %vm321, %v1207, 0
      %v1214 = vsel %vm321, %v1209, 0
      %1216 = vmatprep.subr.bf16.mxu0 0
      %1217 = vmatpush1.bf16.xpose.msra.mxu0 0
      %1218 = vmatprep.subr.bf16.mxu0 0
      %1219 = vmatpush1.bf16.xpose.msra.mxu0 0
      %1220 = vmatprep.subr.bf16.mxu0 0
      %1221 = vmatpush1.bf16.xpose.msra.mxu0 0
      %1222 = vmatprep.subr.bf16.mxu0 0
      %1223 = vmatpush1.bf16.xpose.msra.mxu0 0
      %1224 = vmatprep.subr.bf16.mxu0 0
      %1225 = vmatpush1.bf16.xpose.msra.mxu0 0
      %1226 = vmatprep.subr.bf16.mxu0 0
      %1227 = vmatpush1.bf16.xpose.msra.mxu0 0
      %1228 = vmatprep.subr.bf16.mxu0 0
      %1229 = vmatpush1.bf16.xpose.msra.mxu0 0
      %1230 = vmatprep.subr.bf16.mxu0 0
      %1231 = vmatpush1.bf16.xpose.msra.mxu0 %v1214
      %1232 = vmatprep.subr.bf16.mxu0 0
      %1233 = vmatpush2.bf16.xpose.msra.mxu0 0
      %1234 = vmatprep.subr.bf16.mxu0 0
      %1235 = vmatpush2.bf16.xpose.msra.mxu0 0
      %1236 = vmatprep.subr.bf16.mxu0 0
      %1237 = vmatpush2.bf16.xpose.msra.mxu0 0
      %1238 = vmatprep.subr.bf16.mxu0 0
      %1239 = vmatpush2.bf16.xpose.msra.mxu0 0
      %1240 = vmatprep.subr.bf16.mxu0 0
      %1241 = vmatpush2.bf16.xpose.msra.mxu0 0
      %1242 = vmatprep.subr.bf16.mxu0 0
      %1243 = vmatpush2.bf16.xpose.msra.mxu0 0
      %1244 = vmatprep.subr.bf16.mxu0 0
      %1245 = vmatpush2.bf16.xpose.msra.mxu0 0
      %1246 = vmatprep.subr.bf16.mxu0 0
      %1247 = vmatpush2.bf16.xpose.msra.mxu0 0
      %1248 = vmatprep.mubr.bf16.mxu0 0
      %1249 = vmatmul.mubr.bf16.gmra.mxu0 %v1211
      %v1250 = vpop.f32.mrf.mxu0
      %v1251 = vadd.f32 0.0, %v1250
      %v1252 = vpop.f32.mrf.mxu0
      %v1253 = vpop.f32.mrf.mxu0
      %v1254 = vadd.f32 0.0, %v1253
      %v1255 = vpop.f32.mrf.mxu0
      %1256 = vdwg.mxu0
      %v1257 = vsel %vm530, %v1200, -inf
      %1258 = vmax.xlane.f32.xlu0 %v1257
      %v1259 = vpop.xlane.xlu0 %1258
      %v1260 = vsel %vm530, %v1203, -inf
      %1261 = vmax.xlane.f32.xlu0 %v1260
      %v1262 = vpop.xlane.xlu0 %1261
      %v1263 = vsel %vm530, %v1251, -inf
      %1264 = vmax.xlane.f32.xlu0 %v1263
      %v1265 = vpop.xlane.xlu0 %1264
      %v1266 = vsel %vm530, %v1254, -inf
      %1267 = vmax.xlane.f32.xlu0 %v1266
      %v1268 = vpop.xlane.xlu0 %1267
      %v1269 = vsub.f32 %v1200, %v1259
      %v1270 = vsub.f32 %v1203, %v1262
      %v1271 = vsub.f32 %v1251, %v1265
      %v1272 = vsub.f32 %v1254, %v1268
      %v1273 = vmul.f32 %v1269, 1.442695
      %v1274 = vpow.pop %v1273
      %v1275 = vmul.f32 %v1270, 1.442695
      %v1276 = vpow.pop %v1275
      %v1277 = vmul.f32 %v1271, 1.442695
      %v1278 = vpow.pop %v1277
      %v1279 = vmul.f32 %v1272, 1.442695
      %v1280 = vpow.pop %v1279
      %v1281 = vsel %vm530, %v1274, 0.0
      %1282 = vadd.xlane.f32.xlu0 %v1281
      %v1283 = vpop.xlane.xlu0 %1282
      %v1284 = vsel %vm530, %v1276, 0.0
      %1285 = vadd.xlane.f32.xlu0 %v1284
      %v1286 = vpop.xlane.xlu0 %1285
      %v1287 = vsel %vm530, %v1278, 0.0
      %1288 = vadd.xlane.f32.xlu0 %v1287
      %v1289 = vpop.xlane.xlu0 %1288
      %v1290 = vsel %vm530, %v1280, 0.0
      %1291 = vadd.xlane.f32.xlu0 %v1290
      %v1292 = vpop.xlane.xlu0 %1291
      %v1293 = vpack.c.bf16 %v1276, %v1274
      %v1294 = vpack.c.bf16 %v1280, %v1278
      %1295 = vrot.lane.b32.xlu0 %v434, 32
      %v1296 = vpop.permute.xlu0 %1295
      %v1299 = vsel %vm530, %v1293, 0
      %1301 = vmatprep.subr.bf16.mxu0 0
      %1302 = vmatpush1.bf16.msra.mxu0 0
      %1303 = vmatprep.subr.bf16.mxu0 0
      %1304 = vmatpush1.bf16.msra.mxu0 0
      %1305 = vmatprep.subr.bf16.mxu0 0
      %1306 = vmatpush1.bf16.msra.mxu0 0
      %1307 = vmatprep.subr.bf16.mxu0 0
      %1308 = vmatpush1.bf16.msra.mxu0 0
      %1309 = vmatprep.subr.bf16.mxu0 0
      %1310 = vmatpush1.bf16.msra.mxu0 0
      %1311 = vmatprep.subr.bf16.mxu0 0
      %1312 = vmatpush1.bf16.msra.mxu0 0
      %1313 = vmatprep.subr.bf16.mxu0 0
      %1314 = vmatpush1.bf16.msra.mxu0 0
      %1315 = vmatprep.subr.bf16.mxu0 0
      %1316 = vmatpush1.bf16.msra.mxu0 %v1296
      %1317 = vmatprep.subr.bf16.mxu0 0
      %1318 = vmatpush2.bf16.msra.mxu0 0
      %1319 = vmatprep.subr.bf16.mxu0 0
      %1320 = vmatpush2.bf16.msra.mxu0 0
      %1321 = vmatprep.subr.bf16.mxu0 0
      %1322 = vmatpush2.bf16.msra.mxu0 0
      %1323 = vmatprep.subr.bf16.mxu0 0
      %1324 = vmatpush2.bf16.msra.mxu0 0
      %1325 = vmatprep.subr.bf16.mxu0 0
      %1326 = vmatpush2.bf16.msra.mxu0 0
      %1327 = vmatprep.subr.bf16.mxu0 0
      %1328 = vmatpush2.bf16.msra.mxu0 0
      %1329 = vmatprep.subr.bf16.mxu0 0
      %1330 = vmatpush2.bf16.msra.mxu0 0
      %1331 = vmatprep.subr.bf16.mxu0 0
      %1332 = vmatpush2.bf16.msra.mxu0 0
      %1333 = vmatprep.mubr.bf16.mxu0 0
      %1334 = vmatmul.mubr.bf16.gmra.mxu0 %v1299
      %v1335 = vpop.f32.mrf.mxu0
      %v1336 = vadd.f32 0.0, %v1335
      %v1337 = vpop.f32.mrf.mxu0
      %v1338 = vpop.f32.mrf.mxu0
      %v1339 = vadd.f32 0.0, %v1338
      %v1340 = vpop.f32.mrf.mxu0
      %1341 = vdwg.mxu0
      %1342 = vrot.lane.b32.xlu0 %v435, 32
      %v1343 = vpop.permute.xlu0 %1342
      %v1346 = vsel %vm530, %v1294, 0
      %1348 = vmatprep.subr.bf16.mxu0 0
      %1349 = vmatpush1.bf16.msra.mxu0 0
      %1350 = vmatprep.subr.bf16.mxu0 0
      %1351 = vmatpush1.bf16.msra.mxu0 0
      %1352 = vmatprep.subr.bf16.mxu0 0
      %1353 = vmatpush1.bf16.msra.mxu0 0
      %1354 = vmatprep.subr.bf16.mxu0 0
      %1355 = vmatpush1.bf16.msra.mxu0 0
      %1356 = vmatprep.subr.bf16.mxu0 0
      %1357 = vmatpush1.bf16.msra.mxu0 0
      %1358 = vmatprep.subr.bf16.mxu0 0
      %1359 = vmatpush1.bf16.msra.mxu0 0
      %1360 = vmatprep.subr.bf16.mxu0 0
      %1361 = vmatpush1.bf16.msra.mxu0 0
      %1362 = vmatprep.subr.bf16.mxu0 0
      %1363 = vmatpush1.bf16.msra.mxu0 %v1343
      %1364 = vmatprep.subr.bf16.mxu0 0
      %1365 = vmatpush2.bf16.msra.mxu0 0
      %1366 = vmatprep.subr.bf16.mxu0 0
      %1367 = vmatpush2.bf16.msra.mxu0 0
      %1368 = vmatprep.subr.bf16.mxu0 0
      %1369 = vmatpush2.bf16.msra.mxu0 0
      %1370 = vmatprep.subr.bf16.mxu0 0
      %1371 = vmatpush2.bf16.msra.mxu0 0
      %1372 = vmatprep.subr.bf16.mxu0 0
      %1373 = vmatpush2.bf16.msra.mxu0 0
      %1374 = vmatprep.subr.bf16.mxu0 0
      %1375 = vmatpush2.bf16.msra.mxu0 0
      %1376 = vmatprep.subr.bf16.mxu0 0
      %1377 = vmatpush2.bf16.msra.mxu0 0
      %1378 = vmatprep.subr.bf16.mxu0 0
      %1379 = vmatpush2.bf16.msra.mxu0 0
      %1380 = vmatprep.mubr.bf16.mxu0 0
      %1381 = vmatmul.mubr.bf16.gmra.mxu0 %v1346
      %v1382 = vpop.f32.mrf.mxu0
      %v1383 = vadd.f32 0.0, %v1382
      %v1384 = vpop.f32.mrf.mxu0
      %v1385 = vpop.f32.mrf.mxu0
      %v1386 = vadd.f32 0.0, %v1385
      %v1387 = vpop.f32.mrf.mxu0
      %1388 = vdwg.mxu0
      %v1389 = vrcp.pop %v1283
      %v1390 = vrcp.pop %v1286
      %v1391 = vrcp.pop %v1289
      %v1392 = vrcp.pop %v1292
      %v1393 = vmul.f32 %v1336, %v1389
      %v1394 = vmul.f32 %v1339, %v1390
      %v1395 = vmul.f32 %v1383, %v1391
      %v1396 = vmul.f32 %v1386, %v1392
      %1401 = vrot.lane.b32.xlu0 %v909, 32
      %v1402 = vpop.permute.xlu0 %1401
      %1403 = vrot.lane.b32.xlu0 %v910, 32
      %v1404 = vpop.permute.xlu0 %1403
      %1405 = vrot.lane.b32.xlu0 %v911, 32
      %v1406 = vpop.permute.xlu0 %1405
      %1407 = vrot.lane.b32.xlu0 %v912, 32
      %v1408 = vpop.permute.xlu0 %1407
      %1417 = vrot.lane.b32.xlu0 %v1151, 64
      %v1418 = vpop.permute.xlu0 %1417
      %1419 = vrot.lane.b32.xlu0 %v1152, 64
      %v1420 = vpop.permute.xlu0 %1419
      %1421 = vrot.lane.b32.xlu0 %v1153, 64
      %v1422 = vpop.permute.xlu0 %1421
      %1423 = vrot.lane.b32.xlu0 %v1154, 64
      %v1424 = vpop.permute.xlu0 %1423
      %1433 = vrot.lane.b32.xlu0 %v1393, 96
      %v1434 = vpop.permute.xlu0 %1433
      %1435 = vrot.lane.b32.xlu0 %v1394, 96
      %v1436 = vpop.permute.xlu0 %1435
      %1437 = vrot.lane.b32.xlu0 %v1395, 96
      %v1438 = vpop.permute.xlu0 %1437
      %1439 = vrot.lane.b32.xlu0 %v1396, 96
      %v1440 = vpop.permute.xlu0 %1439
      %v1445 = vsel %vm321, %v661, %v1402
      %v1446 = vsel %vm321, %v662, %v1404
      %v1447 = vsel %vm321, %v663, %v1406
      %v1448 = vsel %vm321, %v664, %v1408
      %vm1449 = vcmask 523264
      %v1450 = vsel %vm1449, %v1445, %v1418
      %v1451 = vsel %vm1449, %v1446, %v1420
      %v1452 = vsel %vm1449, %v1447, %v1422
      %v1453 = vsel %vm1449, %v1448, %v1424
      %vm1454 = vcmask 785408
      %v1455 = vsel %vm1454, %v1450, %v1434
      %v1456 = vsel %vm1454, %v1451, %v1436
      %v1457 = vsel %vm1454, %v1452, %v1438
      %v1458 = vsel %vm1454, %v1453, %v1440
      %v1459 = vpack.c.bf16 %v1456, %v1455
      %v1460 = vpack.c.bf16 %v1458, %v1457
      %v1461 = vld [vmem:[%s2] sm:$0xf]
      %v1462 = vld [vmem:[%s2 + $0x4] sm:$0xf]
      %v1463 = vld [vmem:[%s2 + $0x8] sm:$0xf]
      %v1464 = vld [vmem:[%s2 + $0xc] sm:$0xf]
      %v1465 = vld [vmem:[%s2 + $0x10] sm:$0xf]
      %v1466 = vld [vmem:[%s2 + $0x14] sm:$0xf]
      %v1467 = vld [vmem:[%s2 + $0x18] sm:$0xf]
      %v1468 = vld [vmem:[%s2 + $0x1c] sm:$0xf]
      %v1469 = vld [vmem:[%s2 + $0x20] sm:$0xf]
      %v1470 = vld [vmem:[%s2 + $0x24] sm:$0xf]
      %v1471 = vld [vmem:[%s2 + $0x28] sm:$0xf]
      %v1472 = vld [vmem:[%s2 + $0x2c] sm:$0xf]
      %v1473 = vld [vmem:[%s2 + $0x30] sm:$0xf]
      %v1474 = vld [vmem:[%s2 + $0x34] sm:$0xf]
      %v1475 = vld [vmem:[%s2 + $0x38] sm:$0xf]
      %v1476 = vld [vmem:[%s2 + $0x3c] sm:$0xf]
      %v1477 = vld [vmem:[%s3] sm:$0x1]
      %v1479 = vlaneseq
      %v1480 = vshrl.u32 %v1479, 7
      %v1481 = vsub.s32 0, %v1480
      %v1482 = vrot.slane %v1477, %v1481
      %v1500 = vunpack.c.l.b16 %v1461
      %v1501 = vunpack.c.l.b16 %v1462
      %v1502 = vunpack.c.l.b16 %v1463
      %v1503 = vunpack.c.l.b16 %v1464
      %v1504 = vunpack.c.l.b16 %v1465
      %v1505 = vunpack.c.l.b16 %v1466
      %v1506 = vunpack.c.l.b16 %v1467
      %v1507 = vunpack.c.l.b16 %v1468
      %v1508 = vunpack.c.l.b16 %v1469
      %v1509 = vunpack.c.l.b16 %v1470
      %v1510 = vunpack.c.l.b16 %v1471
      %v1511 = vunpack.c.l.b16 %v1472
      %v1512 = vunpack.c.l.b16 %v1473
      %v1513 = vunpack.c.l.b16 %v1474
      %v1514 = vunpack.c.l.b16 %v1475
      %v1515 = vunpack.c.l.b16 %v1476
      %v1516 = vpack.c.b16 %v1501, %v1500
      %v1517 = vpack.c.b16 %v1503, %v1502
      %v1518 = vpack.c.b16 %v1505, %v1504
      %v1519 = vpack.c.b16 %v1507, %v1506
      %v1520 = vpack.c.b16 %v1509, %v1508
      %v1521 = vpack.c.b16 %v1511, %v1510
      %v1522 = vpack.c.b16 %v1513, %v1512
      %v1523 = vpack.c.b16 %v1515, %v1514
      %1532 = vmatprep.subr.bf16.mxu0 0
      %1533 = vmatpush1.bf16.msra.mxu0 %v1523
      %1534 = vmatprep.subr.bf16.mxu0 0
      %1535 = vmatpush1.bf16.msra.mxu0 %v1522
      %1536 = vmatprep.subr.bf16.mxu0 0
      %1537 = vmatpush1.bf16.msra.mxu0 %v1521
      %1538 = vmatprep.subr.bf16.mxu0 0
      %1539 = vmatpush1.bf16.msra.mxu0 %v1520
      %1540 = vmatprep.subr.bf16.mxu0 0
      %1541 = vmatpush1.bf16.msra.mxu0 %v1519
      %1542 = vmatprep.subr.bf16.mxu0 0
      %1543 = vmatpush1.bf16.msra.mxu0 %v1518
      %1544 = vmatprep.subr.bf16.mxu0 0
      %1545 = vmatpush1.bf16.msra.mxu0 %v1517
      %1546 = vmatprep.subr.bf16.mxu0 0
      %1547 = vmatpush1.bf16.msra.mxu0 %v1516
      %1548 = vmatprep.subr.bf16.mxu0 0
      %1549 = vmatpush2.bf16.msra.mxu0 0
      %1550 = vmatprep.subr.bf16.mxu0 0
      %1551 = vmatpush2.bf16.msra.mxu0 0
      %1552 = vmatprep.subr.bf16.mxu0 0
      %1553 = vmatpush2.bf16.msra.mxu0 0
      %1554 = vmatprep.subr.bf16.mxu0 0
      %1555 = vmatpush2.bf16.msra.mxu0 0
      %1556 = vmatprep.subr.bf16.mxu0 0
      %1557 = vmatpush2.bf16.msra.mxu0 0
      %1558 = vmatprep.subr.bf16.mxu0 0
      %1559 = vmatpush2.bf16.msra.mxu0 0
      %1560 = vmatprep.subr.bf16.mxu0 0
      %1561 = vmatpush2.bf16.msra.mxu0 0
      %1562 = vmatprep.subr.bf16.mxu0 0
      %1563 = vmatpush2.bf16.msra.mxu0 0
      %1564 = vmatprep.mubr.bf16.mxu0 0
      %1565 = vmatmul.mubr.bf16.gmra.mxu0 %v1459
      %v1566 = vpop.f32.mrf.mxu0
      %v1567 = vadd.f32 %v1482, %v1566
      %v1568 = vpop.f32.mrf.mxu0
      %v1569 = vpop.f32.mrf.mxu0
      %v1570 = vadd.f32 %v1482, %v1569
      %v1571 = vpop.f32.mrf.mxu0
      %1572 = vmatprep.mubr.bf16.mxu0 0
      %1573 = vmatmul.mubr.bf16.gmra.mxu0 %v1460
      %v1574 = vpop.f32.mrf.mxu0
      %v1575 = vadd.f32 %v1482, %v1574
      %v1576 = vpop.f32.mrf.mxu0
      %v1577 = vpop.f32.mrf.mxu0
      %v1578 = vadd.f32 %v1482, %v1577
      %v1579 = vpop.f32.mrf.mxu0
      %1580 = vdwg.mxu0
      %1581 = vxpose.xlu0.b32.start [1/16] %v1567, 128
      %1582 = vxpose.xlu0.b32.cont [2/16] %v1570, 128
      %1583 = vxpose.xlu0.b32.cont [3/16] 0.0, 128
      %1584 = vxpose.xlu0.b32.cont [4/16] 0.0, 128
      %1585 = vxpose.xlu0.b32.cont [5/16] 0.0, 128
      %1586 = vxpose.xlu0.b32.cont [6/16] 0.0, 128
      %1587 = vxpose.xlu0.b32.cont [7/16] 0.0, 128
      %1588 = vxpose.xlu0.b32.cont [8/16] 0.0, 128
      %1589 = vxpose.xlu0.b32.cont [9/16] 0.0, 128
      %1590 = vxpose.xlu0.b32.cont [10/16] 0.0, 128
      %1591 = vxpose.xlu0.b32.cont [11/16] 0.0, 128
      %1592 = vxpose.xlu0.b32.cont [12/16] 0.0, 128
      %1593 = vxpose.xlu0.b32.cont [13/16] 0.0, 128
      %1594 = vxpose.xlu0.b32.cont [14/16] 0.0, 128
      %1595 = vxpose.xlu0.b32.cont [15/16] 0.0, 128
      %1596 = vxpose.xlu0.b32.end [16/16] 0.0, 128
      %v1597 = vpop.trf.xlu0
      %v1598 = vpop.trf.xlu0
      %v1599 = vpop.trf.xlu0
      %v1600 = vpop.trf.xlu0
      %v1601 = vpop.trf.xlu0
      %v1602 = vpop.trf.xlu0
      %v1603 = vpop.trf.xlu0
      %v1604 = vpop.trf.xlu0
      %v1605 = vpop.trf.xlu0
      %v1606 = vpop.trf.xlu0
      %v1607 = vpop.trf.xlu0
      %v1608 = vpop.trf.xlu0
      %v1609 = vpop.trf.xlu0
      %v1610 = vpop.trf.xlu0
      %v1611 = vpop.trf.xlu0
      %v1612 = vpop.trf.xlu0
      %1613 = vxpose.xlu0.b32.start [1/16] %v1575, 128
      %1614 = vxpose.xlu0.b32.cont [2/16] %v1578, 128
      %1615 = vxpose.xlu0.b32.cont [3/16] 0.0, 128
      %1616 = vxpose.xlu0.b32.cont [4/16] 0.0, 128
      %1617 = vxpose.xlu0.b32.cont [5/16] 0.0, 128
      %1618 = vxpose.xlu0.b32.cont [6/16] 0.0, 128
      %1619 = vxpose.xlu0.b32.cont [7/16] 0.0, 128
      %1620 = vxpose.xlu0.b32.cont [8/16] 0.0, 128
      %1621 = vxpose.xlu0.b32.cont [9/16] 0.0, 128
      %1622 = vxpose.xlu0.b32.cont [10/16] 0.0, 128
      %1623 = vxpose.xlu0.b32.cont [11/16] 0.0, 128
      %1624 = vxpose.xlu0.b32.cont [12/16] 0.0, 128
      %1625 = vxpose.xlu0.b32.cont [13/16] 0.0, 128
      %1626 = vxpose.xlu0.b32.cont [14/16] 0.0, 128
      %1627 = vxpose.xlu0.b32.cont [15/16] 0.0, 128
      %1628 = vxpose.xlu0.b32.end [16/16] 0.0, 128
      %v1629 = vpop.trf.xlu0
      %v1630 = vpop.trf.xlu0
      %v1631 = vpop.trf.xlu0
      %v1632 = vpop.trf.xlu0
      %v1633 = vpop.trf.xlu0
      %v1634 = vpop.trf.xlu0
      %v1635 = vpop.trf.xlu0
      %v1636 = vpop.trf.xlu0
      %v1637 = vpop.trf.xlu0
      %v1638 = vpop.trf.xlu0
      %v1639 = vpop.trf.xlu0
      %v1640 = vpop.trf.xlu0
      %v1641 = vpop.trf.xlu0
      %v1642 = vpop.trf.xlu0
      %v1643 = vpop.trf.xlu0
      %v1644 = vpop.trf.xlu0
      %1645 = vst.msk [vmem:[%s204] sm:$0xff] %vm530, %v1597
      %1646 = vst.msk [vmem:[%s204 + $0x8] sm:$0xff] %vm530, %v1598
      %1647 = vst.msk [vmem:[%s204 + $0x10] sm:$0xff] %vm530, %v1599
      %1648 = vst.msk [vmem:[%s204 + $0x18] sm:$0xff] %vm530, %v1600
      %1649 = vst.msk [vmem:[%s204 + $0x20] sm:$0xff] %vm530, %v1629
      %1650 = vst.msk [vmem:[%s204 + $0x28] sm:$0xff] %vm530, %v1630
      %1651 = vst.msk [vmem:[%s204 + $0x30] sm:$0xff] %vm530, %v1631
      %1652 = vst.msk [vmem:[%s204 + $0x38] sm:$0xff] %vm530, %v1632
      %s1653 = smul.u32 2, %s15
      %p1654 = scmp.lt.s32.totalorder %s1653, 3
      %s1655 = scalar_select %p1654, %s1653, 3
      %s1656 = smul.addr %s1655, 4
      %s1657 = smul.addr %s1656, 8
      %s1658 = scalar_lea.vmem %s4, %s1657
      // Predicated region
      $region37: #{tpu_custom_call.1} parent=35 // pred_check
        %p1659 = pneg %p122
      $region38: #{tpu_custom_call.1} parent=35 // pred_check_branch
        %1661 = sbr.rel (%p1659) target = $region40
      $region39: #{tpu_custom_call.1} parent=35 // pred_region
        %s1662 = smul.u32 2, %s15
      $region40: #{tpu_custom_call.1} parent=35 // pred_fallthru
        _
    $region36: #{tpu_custom_call.1} parent=5 // pred_fallthru
      _
    %p1663 = scmp.le.s32.totalorder 2, %s10
    // Predicated region
    $region41: #{tpu_custom_call.1} parent=5 // pred_check
      %p1664 = pneg %p1663
    $region42: #{tpu_custom_call.1} parent=5 // pred_check_branch
      %1666 = sbr.rel (%p1664) target = $region44
    $region43: #{tpu_custom_call.1} parent=5 // pred_region
      %s1667 = ssub.s32 %s10, 2
      // Predicated region
      $region45: #{tpu_custom_call.1} parent=43 // pred_check
        %p1668 = pneg %p128
      $region46: #{tpu_custom_call.1} parent=43 // pred_check_branch
        %1670 = sbr.rel (%p1668) target = $region48
      $region47: #{tpu_custom_call.1} parent=43 // pred_region
        %s1671 = smul.u32 2, %s16
        %p1672 = scmp.lt.s32.totalorder %s1671, 3
        %s1673 = scalar_select %p1672, %s1671, 3
        %s1674 = smul.addr %s1673, 4
        %s1675 = smul.addr %s1674, 8
        %s1676 = scalar_lea.vmem %s4, %s1675
      $region48: #{tpu_custom_call.1} parent=43 // pred_fallthru
        _
    $region44: #{tpu_custom_call.1} parent=5 // pred_fallthru
      _
  $region6: #{tpu_custom_call.1} parent=0 // loop_footer
    %s14 = sadd.s32 1, %s10
  $region7: #{tpu_custom_call.1} parent=0 // loop_footer_branch
    %9 = sbr.rel target = $region3
  $region8: #{tpu_custom_call.1} parent=0 // loop_exit
    _

// kernel: tpu_custom_call.1
$region0: #{tpu_custom_call.1}
  #allocation0 [shape = 'u32[]', space=smem, size = 0x4, offset = 0x4, fixed_abs, tag = 'smem constant byte address 0x4 - core index']
  #allocation1 [shape = 'u32[144,128]{1,0:T(1,128)}', space=vmem, size = 0x12000, scoped, tag = 'internal scratch']
  %s0 = inlined_call_operand.vmem [shape: f32[4,16,32], index: 0, kind: input, shape index: {}]
  %s1 = inlined_call_operand.hbm [shape: bf16[32,384], index: 1, kind: input, shape index: {}]
  %s2 = inlined_call_operand.vmem [shape: bf16[128,32], index: 2, kind: input, shape index: {}]
  %s3 = inlined_call_operand.vmem [shape: f32[1,32], index: 3, kind: input, shape index: {}]
  %s4 = inlined_call_operand.hbm [shape: f32[4,16,32], index: 4, kind: output, shape index: {}]
  %s5 = sld [smem:[#allocation0]]
  $region53: #{tpu_custom_call.1} parent=0
    _
  %s7 = ssub.s32 1, %s5
  %s8 = scalar_select 0, %s7, %s5
  $region1: #{tpu_custom_call.1} parent=0
    #allocation2 [shape = 'u8[24576]{0}', space=vmem, size = 0x6000, scoped, tag = 'input window, operand 1, single buffered']
    #allocation3 [shape = 's32[2]{0}', space=sflag, size = 0x8, scoped, tag = 'scoped memory for tpu_custom_call.1']
    #allocation4 [shape = 's32[2]{0}', space=sflag, size = 0x8, scoped, tag = 'scoped memory for tpu_custom_call.1']
    #allocation5 [shape = 'u8[32768]{0}', space=vmem, size = 0x8000, scoped, tag = 'output window, operand 0']
    %9 = vsyncpa [#allocation3], 0
    %10 = vsyncpa [#allocation4], 0
    %s11 = scalar_lea.sflag [#allocation4], 1
    %12 = vsyncpa %s11, 0
    loop: start=0, step=1, limit=4
    $region2: #{tpu_custom_call.1} parent=1 // loop_pre_header
      _
    $region3: #{tpu_custom_call.1} parent=1 // loop_header
      %s14 = sphi 0, %s18
      %p15 = scmp.ge.s32.totalorder %s14, 4
      %s24 = sphi 0, %s26
      %s27 = sphi 0, %s24
      %s28 = sphi 0, %s27
      %s44 = sphi 0, %s28
      %s48 = sphi 0, %s48
      %s50 = sphi 0, %s48
      %s51 = sphi 0, %s50
      %s65 = sphi 0, %s51
      %s69 = sphi 0, %s69
      %s71 = sphi 0, %s69
      %s72 = sphi 0, %s71
      %s86 = sphi 0, %s72
      %s90 = sphi 0, %s90
      %s92 = sphi 0, %s90
      %s93 = sphi 0, %s92
      %s107 = sphi 0, %s93
      %s113 = sphi 0, %s115
      %s116 = sphi 0, %s113
      %s117 = sphi 0, %s116
      %s133 = sphi 0, %s117
    $region4: #{tpu_custom_call.1} parent=1 // loop_header_branch
      %17 = sbr.rel (%p15) target = $region8
    $region5: #{tpu_custom_call.1} parent=1 // loop_body
      %s19 = ssub.s32 %s14, 1
      %s20 = ssub.s32 %s14, 2
      %s21 = sadd.s32 %s14, 1
      %s22 = ssub.s32 %s14, %s21
      %p23 = scmp.eq.s32.totalorder %s22, 0
      %s25 = sadd.s32 %s24, 1
      %s26 = scalar_select %p23, %s24, %s25
      %p29 = pneg %p23
      %p30 = scmp.eq.s32.totalorder %s14, 1
      %p31 = por %p29, %p30
      %p32 = scmp.ne.s32.totalorder %s24, %s27
      %p33 = scmp.eq.s32.totalorder %s14, 0
      %p34 = por %p32, %p33
      %p35 = scmp.ne.s32.totalorder %s24, %s27
      %p36 = scmp.eq.s32.totalorder %s19, 1
      %p37 = por %p35, %p36
      %p38 = scmp.ne.s32.totalorder %s27, %s28
      %p39 = scmp.eq.s32.totalorder %s19, 0
      %p40 = por %p38, %p39
      %p41 = scmp.ne.s32.totalorder %s27, %s28
      %p42 = scmp.eq.s32.totalorder %s20, 1
      %p43 = por %p41, %p42
      %p45 = scmp.ne.s32.totalorder %s28, %s44
      %p46 = scmp.eq.s32.totalorder %s20, 0
      %p47 = por %p45, %p46
      %s49 = sadd.s32 %s48, 1
      %p52 = scmp.eq.s32.totalorder %s14, 1
      %p53 = scmp.ne.s32.totalorder %s48, %s50
      %p54 = scmp.eq.s32.totalorder %s14, 0
      %p55 = por %p53, %p54
      %p56 = scmp.ne.s32.totalorder %s48, %s50
      %p57 = scmp.eq.s32.totalorder %s19, 1
      %p58 = por %p56, %p57
      %p59 = scmp.ne.s32.totalorder %s50, %s51
      %p60 = scmp.eq.s32.totalorder %s19, 0
      %p61 = por %p59, %p60
      %p62 = scmp.ne.s32.totalorder %s50, %s51
      %p63 = scmp.eq.s32.totalorder %s20, 1
      %p64 = por %p62, %p63
      %p66 = scmp.ne.s32.totalorder %s51, %s65
      %p67 = scmp.eq.s32.totalorder %s20, 0
      %p68 = por %p66, %p67
      %s70 = sadd.s32 %s69, 1
      %p73 = scmp.eq.s32.totalorder %s14, 1
      %p74 = scmp.ne.s32.totalorder %s69, %s71
      %p75 = scmp.eq.s32.totalorder %s14, 0
      %p76 = por %p74, %p75
      %p77 = scmp.ne.s32.totalorder %s69, %s71
      %p78 = scmp.eq.s32.totalorder %s19, 1
      %p79 = por %p77, %p78
      %p80 = scmp.ne.s32.totalorder %s71, %s72
      %p81 = scmp.eq.s32.totalorder %s19, 0
      %p82 = por %p80, %p81
      %p83 = scmp.ne.s32.totalorder %s71, %s72
      %p84 = scmp.eq.s32.totalorder %s20, 1
      %p85 = por %p83, %p84
      %p87 = scmp.ne.s32.totalorder %s72, %s86
      %p88 = scmp.eq.s32.totalorder %s20, 0
      %p89 = por %p87, %p88
      %s91 = sadd.s32 %s90, 1
      %p94 = scmp.eq.s32.totalorder %s14, 1
      %p95 = scmp.ne.s32.totalorder %s90, %s92
      %p96 = scmp.eq.s32.totalorder %s14, 0
      %p97 = por %p95, %p96
      %p98 = scmp.ne.s32.totalorder %s90, %s92
      %p99 = scmp.eq.s32.totalorder %s19, 1
      %p100 = por %p98, %p99
      %p101 = scmp.ne.s32.totalorder %s92, %s93
      %p102 = scmp.eq.s32.totalorder %s19, 0
      %p103 = por %p101, %p102
      %p104 = scmp.ne.s32.totalorder %s92, %s93
      %p105 = scmp.eq.s32.totalorder %s20, 1
      %p106 = por %p104, %p105
      %p108 = scmp.ne.s32.totalorder %s93, %s107
      %p109 = scmp.eq.s32.totalorder %s20, 0
      %p110 = por %p108, %p109
      %s111 = ssub.s32 %s14, %s21
      %p112 = scmp.eq.s32.totalorder %s111, 0
      %s114 = sadd.s32 %s113, 1
      %s115 = scalar_select %p112, %s113, %s114
      %p118 = pneg %p112
      %p119 = scmp.eq.s32.totalorder %s14, 1
      %p120 = por %p118, %p119
      %p121 = scmp.ne.s32.totalorder %s113, %s116
      %p122 = scmp.eq.s32.totalorder %s14, 0
      %p123 = por %p121, %p122
      %p124 = scmp.ne.s32.totalorder %s113, %s116
      %p125 = scmp.eq.s32.totalorder %s19, 1
      %p126 = por %p124, %p125
      %p127 = scmp.ne.s32.totalorder %s116, %s117
      %p128 = scmp.eq.s32.totalorder %s19, 0
      %p129 = por %p127, %p128
      %p130 = scmp.ne.s32.totalorder %s116, %s117
      %p131 = scmp.eq.s32.totalorder %s20, 1
      %p132 = por %p130, %p131
      %p134 = scmp.ne.s32.totalorder %s117, %s133
      %p135 = scmp.eq.s32.totalorder %s20, 0
      %p136 = por %p134, %p135
      %p137 = scmp.le.s32.totalorder 1, %s14
      %p138 = scmp.lt.s32.totalorder %s14, 3
      %p139 = pnand %p137, %p138
      %p140 = pneg %p139
      // Predicated region
      $region9: #{tpu_custom_call.1} parent=5 // pred_check
        _
      $region10: #{tpu_custom_call.1} parent=5 // pred_check_branch
        %142 = sbr.rel (%p139) target = $region12
      $region11: #{tpu_custom_call.1} parent=5 // pred_region
        %s143 = ssub.s32 %s14, 1
        // Predicated region
        $region13: #{tpu_custom_call.1} parent=11 // pred_check
          %p144 = pneg %p61
        $region14: #{tpu_custom_call.1} parent=11 // pred_check_branch
          %146 = sbr.rel (%p144) target = $region16
        $region15: #{tpu_custom_call.1} parent=11 // pred_region
          %s148 = ssub.s32 768, 768
          %149 = vsyncadd [#allocation3], %s148
          %s150 = sshll.u32 [#allocation2], 4
          %s151 = int_to_ptr.vmem [resolvable:$true] %s150
          %156 = dma.hbm_to_vmem [thread:$0]  %s1, 768, %s151, [#allocation3], 192, 192, 12
        $region16: #{tpu_custom_call.1} parent=11 // pred_fallthru
          _
        // Predicated region
        $region17: #{tpu_custom_call.1} parent=11 // pred_check
          %p157 = pneg %p82
        $region18: #{tpu_custom_call.1} parent=11 // pred_check_branch
          %159 = sbr.rel (%p157) target = $region20
        $region19: #{tpu_custom_call.1} parent=11 // pred_region
          _
        $region20: #{tpu_custom_call.1} parent=11 // pred_fallthru
          _
        // Predicated region
        $region21: #{tpu_custom_call.1} parent=11 // pred_check
          %p160 = pneg %p103
        $region22: #{tpu_custom_call.1} parent=11 // pred_check_branch
          %162 = sbr.rel (%p160) target = $region24
        $region23: #{tpu_custom_call.1} parent=11 // pred_region
          _
        $region24: #{tpu_custom_call.1} parent=11 // pred_fallthru
          _
      $region12: #{tpu_custom_call.1} parent=5 // pred_fallthru
        _
      %p163 = scmp.lt.s32.totalorder %s14, 2
      // Predicated region
      $region25: #{tpu_custom_call.1} parent=5 // pred_check
        %p164 = pneg %p163
      $region26: #{tpu_custom_call.1} parent=5 // pred_check_branch
        %166 = sbr.rel (%p164) target = $region28
      $region27: #{tpu_custom_call.1} parent=5 // pred_region
        // Predicated region
        $region29: #{tpu_custom_call.1} parent=27 // pred_check
          %p167 = pneg %p34
        $region30: #{tpu_custom_call.1} parent=27 // pred_check_branch
          %169 = sbr.rel (%p167) target = $region32
        $region31: #{tpu_custom_call.1} parent=27 // pred_region
          %s170 = smul.u32 2, %s14
          %p171 = scmp.lt.s32.totalorder %s170, 3
          %s172 = scalar_select %p171, %s170, 3
          %s173 = smul.addr %s172, 2
          %s174 = smul.addr %s173, 8
          %s175 = scalar_lea.vmem %s0, %s174
          %s176 = smul.u32 2, %s14
        $region32: #{tpu_custom_call.1} parent=27 // pred_fallthru
          _
      $region28: #{tpu_custom_call.1} parent=5 // pred_fallthru
        _
      %p177 = scmp.le.s32.totalorder 1, %s14
      %p178 = scmp.lt.s32.totalorder %s14, 3
      %p179 = pnand %p177, %p178
      %p180 = pneg %p179
      // Predicated region
      $region33: #{tpu_custom_call.1} parent=5 // pred_check
        _
      $region34: #{tpu_custom_call.1} parent=5 // pred_check_branch
        %182 = sbr.rel (%p179) target = $region36
      $region35: #{tpu_custom_call.1} parent=5 // pred_region
        %s183 = ssub.s32 %s14, 1
        // Predicated region
        $region37: #{tpu_custom_call.1} parent=35 // pred_check
          %p184 = pneg %p61
        $region38: #{tpu_custom_call.1} parent=35 // pred_check_branch
          %186 = sbr.rel (%p184) target = $region40
        $region39: #{tpu_custom_call.1} parent=35 // pred_region
          %187 = dma.done [#allocation3], 768
        $region40: #{tpu_custom_call.1} parent=35 // pred_fallthru
          _
        %s188 = smul.u32 2, %s19
        %p189 = scmp.lt.s32.totalorder %s188, 3
        %s190 = scalar_select %p189, %s188, 3
        %s191 = smul.addr %s190, 2
        %s192 = smul.addr %s191, 8
        %s193 = scalar_lea.vmem %s0, %s192
        %p194 = pneg %p40
        %p195 = pneg %p37
        %p196 = pneg %p61
        %p197 = pneg %p58
        %p198 = pneg %p82
        %p199 = pneg %p79
        %p200 = pneg %p103
        %p201 = pneg %p100
        %p202 = pneg %p129
        %p203 = pneg %p126
        %s204 = sand.u32 %s116, 1
        %s205 = scalar_lea.sflag [#allocation4], %s204
        %s206 = sand.u32 %s116, 1
        %s207 = smul.addr %s206, 32
        %s208 = scalar_lea.vmem [#allocation5], %s207
        %s209 = smul.u32 2, %s19
        %p210 = scmp.lt.s32.totalorder %s209, 3
        %s211 = scalar_select %p210, %s209, 3
        %s212 = smul.addr %s211, 2
        %s213 = smul.addr %s212, 8
        %s214 = scalar_lea.vmem %s0, %s213
        %s215 = smul.u32 2, %s19
        %s216 = smul.u32 2, %s19
        %v218 = vld [vmem:[%s214] sm:$0xff]
        %v219 = vld [vmem:[%s214 + $0x8] sm:$0xff]
        %v220 = vld [vmem:[%s214 + $0x10] sm:$0xff]
        %v221 = vld [vmem:[%s214 + $0x18] sm:$0xff]
        %v222 = vpack.c.bf16 %v219, %v218
        %v223 = vpack.c.bf16 %v221, %v220
        %v224 = vld [vmem:[#allocation2] sm:$0xff]
        %v225 = vld [vmem:[#allocation2 + $0x8] sm:$0xf]
        %v226 = vld [vmem:[#allocation2 + $0xc] sm:$0xff]
        %v227 = vld [vmem:[#allocation2 + $0x14] sm:$0xf]
        %v228 = vld [vmem:[#allocation2 + $0x18] sm:$0xff]
        %v229 = vld [vmem:[#allocation2 + $0x20] sm:$0xf]
        %v230 = vld [vmem:[#allocation2 + $0x24] sm:$0xff]
        %v231 = vld [vmem:[#allocation2 + $0x2c] sm:$0xf]
        %v240 = vunpack.c.l.b16 %v224
        %v241 = vunpack.c.h.b16 %v224
        %v242 = vunpack.c.l.b16 %v225
        %v243 = vunpack.c.l.b16 %v226
        %v244 = vunpack.c.h.b16 %v226
        %v245 = vunpack.c.l.b16 %v227
        %v246 = vunpack.c.l.b16 %v228
        %v247 = vunpack.c.h.b16 %v228
        %v248 = vunpack.c.l.b16 %v229
        %v249 = vunpack.c.l.b16 %v230
        %v250 = vunpack.c.h.b16 %v230
        %v251 = vunpack.c.l.b16 %v231
        %v252 = vpack.c.b16 %v243, %v240
        %v253 = vpack.c.b16 %v244, %v241
        %v254 = vpack.c.b16 %v245, %v242
        %v255 = vpack.c.b16 %v249, %v246
        %v256 = vpack.c.b16 %v250, %v247
        %v257 = vpack.c.b16 %v251, %v248
        %vm264 = vcmask 261120
        %v266 = vsel %vm264, %v222, 0
        %v269 = vsel %vm264, %v223, 0
        %271 = vmatprep.subr.bf16.mxu0 0
        %272 = vmatpush1.bf16.msra.mxu0 0
        %273 = vmatprep.subr.bf16.mxu0 0
        %274 = vmatpush1.bf16.msra.mxu0 0
        %275 = vmatprep.subr.bf16.mxu0 0
        %276 = vmatpush1.bf16.msra.mxu0 0
        %277 = vmatprep.subr.bf16.mxu0 0
        %278 = vmatpush1.bf16.msra.mxu0 0
        %279 = vmatprep.subr.bf16.mxu0 0
        %280 = vmatpush1.bf16.msra.mxu0 0
        %281 = vmatprep.subr.bf16.mxu0 0
        %282 = vmatpush1.bf16.msra.mxu0 0
        %283 = vmatprep.subr.bf16.mxu0 %v256
        %284 = vmatpush1.bf16.msra.mxu0 %v255
        %285 = vmatprep.subr.bf16.mxu0 %v253
        %286 = vmatpush1.bf16.msra.mxu0 %v252
        %287 = vmatprep.subr.bf16.mxu0 0
        %288 = vmatpush2.bf16.msra.mxu0 0
        %289 = vmatprep.subr.bf16.mxu0 0
        %290 = vmatpush2.bf16.msra.mxu0 0
        %291 = vmatprep.subr.bf16.mxu0 0
        %292 = vmatpush2.bf16.msra.mxu0 0
        %293 = vmatprep.subr.bf16.mxu0 0
        %294 = vmatpush2.bf16.msra.mxu0 0
        %295 = vmatprep.subr.bf16.mxu0 0
        %296 = vmatpush2.bf16.msra.mxu0 0
        %297 = vmatprep.subr.bf16.mxu0 0
        %298 = vmatpush2.bf16.msra.mxu0 0
        %299 = vmatprep.subr.bf16.mxu0 0
        %300 = vmatpush2.bf16.msra.mxu0 0
        %301 = vmatprep.subr.bf16.mxu0 0
        %302 = vmatpush2.bf16.msra.mxu0 0
        %303 = vmatprep.mubr.bf16.mxu0 0
        %304 = vmatmul.mubr.bf16.gmra.mxu0 %v266
        %v305 = vpop.f32.mrf.mxu0
        %v306 = vadd.f32 0.0, %v305
        %v307 = vpop.f32.mrf.mxu0
        %v308 = vadd.f32 0.0, %v307
        %v309 = vpop.f32.mrf.mxu0
        %v310 = vadd.f32 0.0, %v309
        %v311 = vpop.f32.mrf.mxu0
        %v312 = vadd.f32 0.0, %v311
        %313 = vmatprep.mubr.bf16.mxu0 0
        %314 = vmatmul.mubr.bf16.gmra.mxu0 %v269
        %v315 = vpop.f32.mrf.mxu0
        %v316 = vadd.f32 0.0, %v315
        %v317 = vpop.f32.mrf.mxu0
        %v318 = vadd.f32 0.0, %v317
        %v319 = vpop.f32.mrf.mxu0
        %v320 = vadd.f32 0.0, %v319
        %v321 = vpop.f32.mrf.mxu0
        %v322 = vadd.f32 0.0, %v321
        %323 = vdwg.mxu0
        %324 = vmatprep.subr.bf16.mxu0 0
        %325 = vmatpush1.bf16.msra.mxu0 0
        %326 = vmatprep.subr.bf16.mxu0 0
        %327 = vmatpush1.bf16.msra.mxu0 0
        %328 = vmatprep.subr.bf16.mxu0 0
        %329 = vmatpush1.bf16.msra.mxu0 0
        %330 = vmatprep.subr.bf16.mxu0 0
        %331 = vmatpush1.bf16.msra.mxu0 0
        %332 = vmatprep.subr.bf16.mxu0 0
        %333 = vmatpush1.bf16.msra.mxu0 0
        %334 = vmatprep.subr.bf16.mxu0 0
        %335 = vmatpush1.bf16.msra.mxu0 0
        %336 = vmatprep.subr.bf16.mxu0 0
        %337 = vmatpush1.bf16.msra.mxu0 %v257
        %338 = vmatprep.subr.bf16.mxu0 0
        %339 = vmatpush1.bf16.msra.mxu0 %v254
        %340 = vmatprep.subr.bf16.mxu0 0
        %341 = vmatpush2.bf16.msra.mxu0 0
        %342 = vmatprep.subr.bf16.mxu0 0
        %343 = vmatpush2.bf16.msra.mxu0 0
        %344 = vmatprep.subr.bf16.mxu0 0
        %345 = vmatpush2.bf16.msra.mxu0 0
        %346 = vmatprep.subr.bf16.mxu0 0
        %347 = vmatpush2.bf16.msra.mxu0 0
        %348 = vmatprep.subr.bf16.mxu0 0
        %349 = vmatpush2.bf16.msra.mxu0 0
        %350 = vmatprep.subr.bf16.mxu0 0
        %351 = vmatpush2.bf16.msra.mxu0 0
        %352 = vmatprep.subr.bf16.mxu0 0
        %353 = vmatpush2.bf16.msra.mxu0 0
        %354 = vmatprep.subr.bf16.mxu0 0
        %355 = vmatpush2.bf16.msra.mxu0 0
        %356 = vmatprep.mubr.bf16.mxu0 0
        %357 = vmatmul.mubr.bf16.gmra.mxu0 %v266
        %v358 = vpop.f32.mrf.mxu0
        %v359 = vadd.f32 0.0, %v358
        %v360 = vpop.f32.mrf.mxu0
        %v361 = vpop.f32.mrf.mxu0
        %v362 = vadd.f32 0.0, %v361
        %v363 = vpop.f32.mrf.mxu0
        %364 = vmatprep.mubr.bf16.mxu0 0
        %365 = vmatmul.mubr.bf16.gmra.mxu0 %v269
        %v366 = vpop.f32.mrf.mxu0
        %v367 = vadd.f32 0.0, %v366
        %v368 = vpop.f32.mrf.mxu0
        %v369 = vpop.f32.mrf.mxu0
        %v370 = vadd.f32 0.0, %v369
        %v371 = vpop.f32.mrf.mxu0
        %372 = vdwg.mxu0
        %v373 = vpack.c.bf16 %v310, %v306
        %v374 = vpack.c.bf16 %v320, %v316
        %v375 = vpack.c.bf16 %v312, %v308
        %v376 = vpack.c.bf16 %v322, %v318
        %v377 = vpack.c.bf16 %v362, %v359
        %v378 = vpack.c.bf16 %v370, %v367
        %v380 = vsel %vm264, %v373, 0
        %v383 = vsel %vm264, %v375, 0
        %385 = vmatprep.subr.bf16.mxu0 0
        %386 = vmatpush1.bf16.xpose.msra.mxu0 0
        %387 = vmatprep.subr.bf16.mxu0 0
        %388 = vmatpush1.bf16.xpose.msra.mxu0 0
        %389 = vmatprep.subr.bf16.mxu0 0
        %390 = vmatpush1.bf16.xpose.msra.mxu0 0
        %391 = vmatprep.subr.bf16.mxu0 0
        %392 = vmatpush1.bf16.xpose.msra.mxu0 0
        %393 = vmatprep.subr.bf16.mxu0 0
        %394 = vmatpush1.bf16.xpose.msra.mxu0 0
        %395 = vmatprep.subr.bf16.mxu0 0
        %396 = vmatpush1.bf16.xpose.msra.mxu0 0
        %397 = vmatprep.subr.bf16.mxu0 0
        %398 = vmatpush1.bf16.xpose.msra.mxu0 0
        %399 = vmatprep.subr.bf16.mxu0 0
        %400 = vmatpush1.bf16.xpose.msra.mxu0 %v383
        %401 = vmatprep.subr.bf16.mxu0 0
        %402 = vmatpush2.bf16.xpose.msra.mxu0 0
        %403 = vmatprep.subr.bf16.mxu0 0
        %404 = vmatpush2.bf16.xpose.msra.mxu0 0
        %405 = vmatprep.subr.bf16.mxu0 0
        %406 = vmatpush2.bf16.xpose.msra.mxu0 0
        %407 = vmatprep.subr.bf16.mxu0 0
        %408 = vmatpush2.bf16.xpose.msra.mxu0 0
        %409 = vmatprep.subr.bf16.mxu0 0
        %410 = vmatpush2.bf16.xpose.msra.mxu0 0
        %411 = vmatprep.subr.bf16.mxu0 0
        %412 = vmatpush2.bf16.xpose.msra.mxu0 0
        %413 = vmatprep.subr.bf16.mxu0 0
        %414 = vmatpush2.bf16.xpose.msra.mxu0 0
        %415 = vmatprep.subr.bf16.mxu0 0
        %416 = vmatpush2.bf16.xpose.msra.mxu0 0
        %417 = vmatprep.mubr.bf16.mxu0 0
        %418 = vmatmul.mubr.bf16.gmra.mxu0 %v380
        %v419 = vpop.f32.mrf.mxu0
        %v420 = vadd.f32 0.0, %v419
        %v421 = vpop.f32.mrf.mxu0
        %v422 = vpop.f32.mrf.mxu0
        %v423 = vadd.f32 0.0, %v422
        %v424 = vpop.f32.mrf.mxu0
        %425 = vdwg.mxu0
        %v427 = vsel %vm264, %v374, 0
        %v430 = vsel %vm264, %v376, 0
        %432 = vmatprep.subr.bf16.mxu0 0
        %433 = vmatpush1.bf16.xpose.msra.mxu0 0
        %434 = vmatprep.subr.bf16.mxu0 0
        %435 = vmatpush1.bf16.xpose.msra.mxu0 0
        %436 = vmatprep.subr.bf16.mxu0 0
        %437 = vmatpush1.bf16.xpose.msra.mxu0 0
        %438 = vmatprep.subr.bf16.mxu0 0
        %439 = vmatpush1.bf16.xpose.msra.mxu0 0
        %440 = vmatprep.subr.bf16.mxu0 0
        %441 = vmatpush1.bf16.xpose.msra.mxu0 0
        %442 = vmatprep.subr.bf16.mxu0 0
        %443 = vmatpush1.bf16.xpose.msra.mxu0 0
        %444 = vmatprep.subr.bf16.mxu0 0
        %445 = vmatpush1.bf16.xpose.msra.mxu0 0
        %446 = vmatprep.subr.bf16.mxu0 0
        %447 = vmatpush1.bf16.xpose.msra.mxu0 %v430
        %448 = vmatprep.subr.bf16.mxu0 0
        %449 = vmatpush2.bf16.xpose.msra.mxu0 0
        %450 = vmatprep.subr.bf16.mxu0 0
        %451 = vmatpush2.bf16.xpose.msra.mxu0 0
        %452 = vmatprep.subr.bf16.mxu0 0
        %453 = vmatpush2.bf16.xpose.msra.mxu0 0
        %454 = vmatprep.subr.bf16.mxu0 0
        %455 = vmatpush2.bf16.xpose.msra.mxu0 0
        %456 = vmatprep.subr.bf16.mxu0 0
        %457 = vmatpush2.bf16.xpose.msra.mxu0 0
        %458 = vmatprep.subr.bf16.mxu0 0
        %459 = vmatpush2.bf16.xpose.msra.mxu0 0
        %460 = vmatprep.subr.bf16.mxu0 0
        %461 = vmatpush2.bf16.xpose.msra.mxu0 0
        %462 = vmatprep.subr.bf16.mxu0 0
        %463 = vmatpush2.bf16.xpose.msra.mxu0 0
        %464 = vmatprep.mubr.bf16.mxu0 0
        %465 = vmatmul.mubr.bf16.gmra.mxu0 %v427
        %v466 = vpop.f32.mrf.mxu0
        %v467 = vadd.f32 0.0, %v466
        %v468 = vpop.f32.mrf.mxu0
        %v469 = vpop.f32.mrf.mxu0
        %v470 = vadd.f32 0.0, %v469
        %v471 = vpop.f32.mrf.mxu0
        %472 = vdwg.mxu0
        %vm473 = vcmask 130048
        %v474 = vsel %vm473, %v420, -inf
        %475 = vmax.xlane.f32.xlu0 %v474
        %v476 = vpop.xlane.xlu0 %475
        %v477 = vsel %vm473, %v423, -inf
        %478 = vmax.xlane.f32.xlu0 %v477
        %v479 = vpop.xlane.xlu0 %478
        %v480 = vsel %vm473, %v467, -inf
        %481 = vmax.xlane.f32.xlu0 %v480
        %v482 = vpop.xlane.xlu0 %481
        %v483 = vsel %vm473, %v470, -inf
        %484 = vmax.xlane.f32.xlu0 %v483
        %v485 = vpop.xlane.xlu0 %484
        %v486 = vsub.f32 %v420, %v476
        %v487 = vsub.f32 %v423, %v479
        %v488 = vsub.f32 %v467, %v482
        %v489 = vsub.f32 %v470, %v485
        %v490 = vmul.f32 %v486, 1.442695
        %v491 = vpow.pop %v490
        %v492 = vmul.f32 %v487, 1.442695
        %v493 = vpow.pop %v492
        %v494 = vmul.f32 %v488, 1.442695
        %v495 = vpow.pop %v494
        %v496 = vmul.f32 %v489, 1.442695
        %v497 = vpow.pop %v496
        %v498 = vsel %vm473, %v491, 0.0
        %499 = vadd.xlane.f32.xlu0 %v498
        %v500 = vpop.xlane.xlu0 %499
        %v501 = vsel %vm473, %v493, 0.0
        %502 = vadd.xlane.f32.xlu0 %v501
        %v503 = vpop.xlane.xlu0 %502
        %v504 = vsel %vm473, %v495, 0.0
        %505 = vadd.xlane.f32.xlu0 %v504
        %v506 = vpop.xlane.xlu0 %505
        %v507 = vsel %vm473, %v497, 0.0
        %508 = vadd.xlane.f32.xlu0 %v507
        %v509 = vpop.xlane.xlu0 %508
        %v510 = vpack.c.bf16 %v493, %v491
        %v511 = vpack.c.bf16 %v497, %v495
        %v513 = vsel %vm473, %v510, 0
        %515 = vmatprep.subr.bf16.mxu0 0
        %516 = vmatpush1.bf16.msra.mxu0 0
        %517 = vmatprep.subr.bf16.mxu0 0
        %518 = vmatpush1.bf16.msra.mxu0 0
        %519 = vmatprep.subr.bf16.mxu0 0
        %520 = vmatpush1.bf16.msra.mxu0 0
        %521 = vmatprep.subr.bf16.mxu0 0
        %522 = vmatpush1.bf16.msra.mxu0 0
        %523 = vmatprep.subr.bf16.mxu0 0
        %524 = vmatpush1.bf16.msra.mxu0 0
        %525 = vmatprep.subr.bf16.mxu0 0
        %526 = vmatpush1.bf16.msra.mxu0 0
        %527 = vmatprep.subr.bf16.mxu0 0
        %528 = vmatpush1.bf16.msra.mxu0 0
        %529 = vmatprep.subr.bf16.mxu0 0
        %530 = vmatpush1.bf16.msra.mxu0 %v377
        %531 = vmatprep.subr.bf16.mxu0 0
        %532 = vmatpush2.bf16.msra.mxu0 0
        %533 = vmatprep.subr.bf16.mxu0 0
        %534 = vmatpush2.bf16.msra.mxu0 0
        %535 = vmatprep.subr.bf16.mxu0 0
        %536 = vmatpush2.bf16.msra.mxu0 0
        %537 = vmatprep.subr.bf16.mxu0 0
        %538 = vmatpush2.bf16.msra.mxu0 0
        %539 = vmatprep.subr.bf16.mxu0 0
        %540 = vmatpush2.bf16.msra.mxu0 0
        %541 = vmatprep.subr.bf16.mxu0 0
        %542 = vmatpush2.bf16.msra.mxu0 0
        %543 = vmatprep.subr.bf16.mxu0 0
        %544 = vmatpush2.bf16.msra.mxu0 0
        %545 = vmatprep.subr.bf16.mxu0 0
        %546 = vmatpush2.bf16.msra.mxu0 0
        %547 = vmatprep.mubr.bf16.mxu0 0
        %548 = vmatmul.mubr.bf16.gmra.mxu0 %v513
        %v549 = vpop.f32.mrf.mxu0
        %v550 = vadd.f32 0.0, %v549
        %v551 = vpop.f32.mrf.mxu0
        %v552 = vpop.f32.mrf.mxu0
        %v553 = vadd.f32 0.0, %v552
        %v554 = vpop.f32.mrf.mxu0
        %555 = vdwg.mxu0
        %v557 = vsel %vm473, %v511, 0
        %559 = vmatprep.subr.bf16.mxu0 0
        %560 = vmatpush1.bf16.msra.mxu0 0
        %561 = vmatprep.subr.bf16.mxu0 0
        %562 = vmatpush1.bf16.msra.mxu0 0
        %563 = vmatprep.subr.bf16.mxu0 0
        %564 = vmatpush1.bf16.msra.mxu0 0
        %565 = vmatprep.subr.bf16.mxu0 0
        %566 = vmatpush1.bf16.msra.mxu0 0
        %567 = vmatprep.subr.bf16.mxu0 0
        %568 = vmatpush1.bf16.msra.mxu0 0
        %569 = vmatprep.subr.bf16.mxu0 0
        %570 = vmatpush1.bf16.msra.mxu0 0
        %571 = vmatprep.subr.bf16.mxu0 0
        %572 = vmatpush1.bf16.msra.mxu0 0
        %573 = vmatprep.subr.bf16.mxu0 0
        %574 = vmatpush1.bf16.msra.mxu0 %v378
        %575 = vmatprep.subr.bf16.mxu0 0
        %576 = vmatpush2.bf16.msra.mxu0 0
        %577 = vmatprep.subr.bf16.mxu0 0
        %578 = vmatpush2.bf16.msra.mxu0 0
        %579 = vmatprep.subr.bf16.mxu0 0
        %580 = vmatpush2.bf16.msra.mxu0 0
        %581 = vmatprep.subr.bf16.mxu0 0
        %582 = vmatpush2.bf16.msra.mxu0 0
        %583 = vmatprep.subr.bf16.mxu0 0
        %584 = vmatpush2.bf16.msra.mxu0 0
        %585 = vmatprep.subr.bf16.mxu0 0
        %586 = vmatpush2.bf16.msra.mxu0 0
        %587 = vmatprep.subr.bf16.mxu0 0
        %588 = vmatpush2.bf16.msra.mxu0 0
        %589 = vmatprep.subr.bf16.mxu0 0
        %590 = vmatpush2.bf16.msra.mxu0 0
        %591 = vmatprep.mubr.bf16.mxu0 0
        %592 = vmatmul.mubr.bf16.gmra.mxu0 %v557
        %v593 = vpop.f32.mrf.mxu0
        %v594 = vadd.f32 0.0, %v593
        %v595 = vpop.f32.mrf.mxu0
        %v596 = vpop.f32.mrf.mxu0
        %v597 = vadd.f32 0.0, %v596
        %v598 = vpop.f32.mrf.mxu0
        %599 = vdwg.mxu0
        %v600 = vrcp.pop %v500
        %v601 = vrcp.pop %v503
        %v602 = vrcp.pop %v506
        %v603 = vrcp.pop %v509
        %v604 = vmul.f32 %v550, %v600
        %v605 = vmul.f32 %v553, %v601
        %v606 = vmul.f32 %v594, %v602
        %v607 = vmul.f32 %v597, %v603
        %609 = vrot.lane.b32.xlu0 %v373, 96
        %v610 = vpop.permute.xlu0 %609
        %612 = vrot.lane.b32.xlu0 %v375, 96
        %v613 = vpop.permute.xlu0 %612
        %v615 = vsel %vm264, %v610, 0
        %v618 = vsel %vm264, %v613, 0
        %620 = vmatprep.subr.bf16.mxu0 0
        %621 = vmatpush1.bf16.xpose.msra.mxu0 0
        %622 = vmatprep.subr.bf16.mxu0 0
        %623 = vmatpush1.bf16.xpose.msra.mxu0 0
        %624 = vmatprep.subr.bf16.mxu0 0
        %625 = vmatpush1.bf16.xpose.msra.mxu0 0
        %626 = vmatprep.subr.bf16.mxu0 0
        %627 = vmatpush1.bf16.xpose.msra.mxu0 0
        %628 = vmatprep.subr.bf16.mxu0 0
        %629 = vmatpush1.bf16.xpose.msra.mxu0 0
        %630 = vmatprep.subr.bf16.mxu0 0
        %631 = vmatpush1.bf16.xpose.msra.mxu0 0
        %632 = vmatprep.subr.bf16.mxu0 0
        %633 = vmatpush1.bf16.xpose.msra.mxu0 0
        %634 = vmatprep.subr.bf16.mxu0 0
        %635 = vmatpush1.bf16.xpose.msra.mxu0 %v618
        %636 = vmatprep.subr.bf16.mxu0 0
        %637 = vmatpush2.bf16.xpose.msra.mxu0 0
        %638 = vmatprep.subr.bf16.mxu0 0
        %639 = vmatpush2.bf16.xpose.msra.mxu0 0
        %640 = vmatprep.subr.bf16.mxu0 0
        %641 = vmatpush2.bf16.xpose.msra.mxu0 0
        %642 = vmatprep.subr.bf16.mxu0 0
        %643 = vmatpush2.bf16.xpose.msra.mxu0 0
        %644 = vmatprep.subr.bf16.mxu0 0
        %645 = vmatpush2.bf16.xpose.msra.mxu0 0
        %646 = vmatprep.subr.bf16.mxu0 0
        %647 = vmatpush2.bf16.xpose.msra.mxu0 0
        %648 = vmatprep.subr.bf16.mxu0 0
        %649 = vmatpush2.bf16.xpose.msra.mxu0 0
        %650 = vmatprep.subr.bf16.mxu0 0
        %651 = vmatpush2.bf16.xpose.msra.mxu0 0
        %652 = vmatprep.mubr.bf16.mxu0 0
        %653 = vmatmul.mubr.bf16.gmra.mxu0 %v615
        %v654 = vpop.f32.mrf.mxu0
        %v655 = vadd.f32 0.0, %v654
        %v656 = vpop.f32.mrf.mxu0
        %v657 = vpop.f32.mrf.mxu0
        %v658 = vadd.f32 0.0, %v657
        %v659 = vpop.f32.mrf.mxu0
        %660 = vdwg.mxu0
        %662 = vrot.lane.b32.xlu0 %v374, 96
        %v663 = vpop.permute.xlu0 %662
        %665 = vrot.lane.b32.xlu0 %v376, 96
        %v666 = vpop.permute.xlu0 %665
        %v668 = vsel %vm264, %v663, 0
        %v671 = vsel %vm264, %v666, 0
        %673 = vmatprep.subr.bf16.mxu0 0
        %674 = vmatpush1.bf16.xpose.msra.mxu0 0
        %675 = vmatprep.subr.bf16.mxu0 0
        %676 = vmatpush1.bf16.xpose.msra.mxu0 0
        %677 = vmatprep.subr.bf16.mxu0 0
        %678 = vmatpush1.bf16.xpose.msra.mxu0 0
        %679 = vmatprep.subr.bf16.mxu0 0
        %680 = vmatpush1.bf16.xpose.msra.mxu0 0
        %681 = vmatprep.subr.bf16.mxu0 0
        %682 = vmatpush1.bf16.xpose.msra.mxu0 0
        %683 = vmatprep.subr.bf16.mxu0 0
        %684 = vmatpush1.bf16.xpose.msra.mxu0 0
        %685 = vmatprep.subr.bf16.mxu0 0
        %686 = vmatpush1.bf16.xpose.msra.mxu0 0
        %687 = vmatprep.subr.bf16.mxu0 0
        %688 = vmatpush1.bf16.xpose.msra.mxu0 %v671
        %689 = vmatprep.subr.bf16.mxu0 0
        %690 = vmatpush2.bf16.xpose.msra.mxu0 0
        %691 = vmatprep.subr.bf16.mxu0 0
        %692 = vmatpush2.bf16.xpose.msra.mxu0 0
        %693 = vmatprep.subr.bf16.mxu0 0
        %694 = vmatpush2.bf16.xpose.msra.mxu0 0
        %695 = vmatprep.subr.bf16.mxu0 0
        %696 = vmatpush2.bf16.xpose.msra.mxu0 0
        %697 = vmatprep.subr.bf16.mxu0 0
        %698 = vmatpush2.bf16.xpose.msra.mxu0 0
        %699 = vmatprep.subr.bf16.mxu0 0
        %700 = vmatpush2.bf16.xpose.msra.mxu0 0
        %701 = vmatprep.subr.bf16.mxu0 0
        %702 = vmatpush2.bf16.xpose.msra.mxu0 0
        %703 = vmatprep.subr.bf16.mxu0 0
        %704 = vmatpush2.bf16.xpose.msra.mxu0 0
        %705 = vmatprep.mubr.bf16.mxu0 0
        %706 = vmatmul.mubr.bf16.gmra.mxu0 %v668
        %v707 = vpop.f32.mrf.mxu0
        %v708 = vadd.f32 0.0, %v707
        %v709 = vpop.f32.mrf.mxu0
        %v710 = vpop.f32.mrf.mxu0
        %v711 = vadd.f32 0.0, %v710
        %v712 = vpop.f32.mrf.mxu0
        %713 = vdwg.mxu0
        %v714 = vsel %vm473, %v655, -inf
        %715 = vmax.xlane.f32.xlu0 %v714
        %v716 = vpop.xlane.xlu0 %715
        %v717 = vsel %vm473, %v658, -inf
        %718 = vmax.xlane.f32.xlu0 %v717
        %v719 = vpop.xlane.xlu0 %718
        %v720 = vsel %vm473, %v708, -inf
        %721 = vmax.xlane.f32.xlu0 %v720
        %v722 = vpop.xlane.xlu0 %721
        %v723 = vsel %vm473, %v711, -inf
        %724 = vmax.xlane.f32.xlu0 %v723
        %v725 = vpop.xlane.xlu0 %724
        %v726 = vsub.f32 %v655, %v716
        %v727 = vsub.f32 %v658, %v719
        %v728 = vsub.f32 %v708, %v722
        %v729 = vsub.f32 %v711, %v725
        %v730 = vmul.f32 %v726, 1.442695
        %v731 = vpow.pop %v730
        %v732 = vmul.f32 %v727, 1.442695
        %v733 = vpow.pop %v732
        %v734 = vmul.f32 %v728, 1.442695
        %v735 = vpow.pop %v734
        %v736 = vmul.f32 %v729, 1.442695
        %v737 = vpow.pop %v736
        %v738 = vsel %vm473, %v731, 0.0
        %739 = vadd.xlane.f32.xlu0 %v738
        %v740 = vpop.xlane.xlu0 %739
        %v741 = vsel %vm473, %v733, 0.0
        %742 = vadd.xlane.f32.xlu0 %v741
        %v743 = vpop.xlane.xlu0 %742
        %v744 = vsel %vm473, %v735, 0.0
        %745 = vadd.xlane.f32.xlu0 %v744
        %v746 = vpop.xlane.xlu0 %745
        %v747 = vsel %vm473, %v737, 0.0
        %748 = vadd.xlane.f32.xlu0 %v747
        %v749 = vpop.xlane.xlu0 %748
        %v750 = vpack.c.bf16 %v733, %v731
        %v751 = vpack.c.bf16 %v737, %v735
        %753 = vrot.lane.b32.xlu0 %v377, 96
        %v754 = vpop.permute.xlu0 %753
        %v757 = vsel %vm473, %v750, 0
        %759 = vmatprep.subr.bf16.mxu0 0
        %760 = vmatpush1.bf16.msra.mxu0 0
        %761 = vmatprep.subr.bf16.mxu0 0
        %762 = vmatpush1.bf16.msra.mxu0 0
        %763 = vmatprep.subr.bf16.mxu0 0
        %764 = vmatpush1.bf16.msra.mxu0 0
        %765 = vmatprep.subr.bf16.mxu0 0
        %766 = vmatpush1.bf16.msra.mxu0 0
        %767 = vmatprep.subr.bf16.mxu0 0
        %768 = vmatpush1.bf16.msra.mxu0 0
        %769 = vmatprep.subr.bf16.mxu0 0
        %770 = vmatpush1.bf16.msra.mxu0 0
        %771 = vmatprep.subr.bf16.mxu0 0
        %772 = vmatpush1.bf16.msra.mxu0 0
        %773 = vmatprep.subr.bf16.mxu0 0
        %774 = vmatpush1.bf16.msra.mxu0 %v754
        %775 = vmatprep.subr.bf16.mxu0 0
        %776 = vmatpush2.bf16.msra.mxu0 0
        %777 = vmatprep.subr.bf16.mxu0 0
        %778 = vmatpush2.bf16.msra.mxu0 0
        %779 = vmatprep.subr.bf16.mxu0 0
        %780 = vmatpush2.bf16.msra.mxu0 0
        %781 = vmatprep.subr.bf16.mxu0 0
        %782 = vmatpush2.bf16.msra.mxu0 0
        %783 = vmatprep.subr.bf16.mxu0 0
        %784 = vmatpush2.bf16.msra.mxu0 0
        %785 = vmatprep.subr.bf16.mxu0 0
        %786 = vmatpush2.bf16.msra.mxu0 0
        %787 = vmatprep.subr.bf16.mxu0 0
        %788 = vmatpush2.bf16.msra.mxu0 0
        %789 = vmatprep.subr.bf16.mxu0 0
        %790 = vmatpush2.bf16.msra.mxu0 0
        %791 = vmatprep.mubr.bf16.mxu0 0
        %792 = vmatmul.mubr.bf16.gmra.mxu0 %v757
        %v793 = vpop.f32.mrf.mxu0
        %v794 = vadd.f32 0.0, %v793
        %v795 = vpop.f32.mrf.mxu0
        %v796 = vpop.f32.mrf.mxu0
        %v797 = vadd.f32 0.0, %v796
        %v798 = vpop.f32.mrf.mxu0
        %799 = vdwg.mxu0
        %801 = vrot.lane.b32.xlu0 %v378, 96
        %v802 = vpop.permute.xlu0 %801
        %v805 = vsel %vm473, %v751, 0
        %807 = vmatprep.subr.bf16.mxu0 0
        %808 = vmatpush1.bf16.msra.mxu0 0
        %809 = vmatprep.subr.bf16.mxu0 0
        %810 = vmatpush1.bf16.msra.mxu0 0
        %811 = vmatprep.subr.bf16.mxu0 0
        %812 = vmatpush1.bf16.msra.mxu0 0
        %813 = vmatprep.subr.bf16.mxu0 0
        %814 = vmatpush1.bf16.msra.mxu0 0
        %815 = vmatprep.subr.bf16.mxu0 0
        %816 = vmatpush1.bf16.msra.mxu0 0
        %817 = vmatprep.subr.bf16.mxu0 0
        %818 = vmatpush1.bf16.msra.mxu0 0
        %819 = vmatprep.subr.bf16.mxu0 0
        %820 = vmatpush1.bf16.msra.mxu0 0
        %821 = vmatprep.subr.bf16.mxu0 0
        %822 = vmatpush1.bf16.msra.mxu0 %v802
        %823 = vmatprep.subr.bf16.mxu0 0
        %824 = vmatpush2.bf16.msra.mxu0 0
        %825 = vmatprep.subr.bf16.mxu0 0
        %826 = vmatpush2.bf16.msra.mxu0 0
        %827 = vmatprep.subr.bf16.mxu0 0
        %828 = vmatpush2.bf16.msra.mxu0 0
        %829 = vmatprep.subr.bf16.mxu0 0
        %830 = vmatpush2.bf16.msra.mxu0 0
        %831 = vmatprep.subr.bf16.mxu0 0
        %832 = vmatpush2.bf16.msra.mxu0 0
        %833 = vmatprep.subr.bf16.mxu0 0
        %834 = vmatpush2.bf16.msra.mxu0 0
        %835 = vmatprep.subr.bf16.mxu0 0
        %836 = vmatpush2.bf16.msra.mxu0 0
        %837 = vmatprep.subr.bf16.mxu0 0
        %838 = vmatpush2.bf16.msra.mxu0 0
        %839 = vmatprep.mubr.bf16.mxu0 0
        %840 = vmatmul.mubr.bf16.gmra.mxu0 %v805
        %v841 = vpop.f32.mrf.mxu0
        %v842 = vadd.f32 0.0, %v841
        %v843 = vpop.f32.mrf.mxu0
        %v844 = vpop.f32.mrf.mxu0
        %v845 = vadd.f32 0.0, %v844
        %v846 = vpop.f32.mrf.mxu0
        %847 = vdwg.mxu0
        %v848 = vrcp.pop %v740
        %v849 = vrcp.pop %v743
        %v850 = vrcp.pop %v746
        %v851 = vrcp.pop %v749
        %v852 = vmul.f32 %v794, %v848
        %v853 = vmul.f32 %v797, %v849
        %v854 = vmul.f32 %v842, %v850
        %v855 = vmul.f32 %v845, %v851
        %856 = vrot.lane.b32.xlu0 %v373, 64
        %v857 = vpop.permute.xlu0 %856
        %858 = vrot.lane.b32.xlu0 %v375, 64
        %v859 = vpop.permute.xlu0 %858
        %v861 = vsel %vm264, %v857, 0
        %v864 = vsel %vm264, %v859, 0
        %866 = vmatprep.subr.bf16.mxu0 0
        %867 = vmatpush1.bf16.xpose.msra.mxu0 0
        %868 = vmatprep.subr.bf16.mxu0 0
        %869 = vmatpush1.bf16.xpose.msra.mxu0 0
        %870 = vmatprep.subr.bf16.mxu0 0
        %871 = vmatpush1.bf16.xpose.msra.mxu0 0
        %872 = vmatprep.subr.bf16.mxu0 0
        %873 = vmatpush1.bf16.xpose.msra.mxu0 0
        %874 = vmatprep.subr.bf16.mxu0 0
        %875 = vmatpush1.bf16.xpose.msra.mxu0 0
        %876 = vmatprep.subr.bf16.mxu0 0
        %877 = vmatpush1.bf16.xpose.msra.mxu0 0
        %878 = vmatprep.subr.bf16.mxu0 0
        %879 = vmatpush1.bf16.xpose.msra.mxu0 0
        %880 = vmatprep.subr.bf16.mxu0 0
        %881 = vmatpush1.bf16.xpose.msra.mxu0 %v864
        %882 = vmatprep.subr.bf16.mxu0 0
        %883 = vmatpush2.bf16.xpose.msra.mxu0 0
        %884 = vmatprep.subr.bf16.mxu0 0
        %885 = vmatpush2.bf16.xpose.msra.mxu0 0
        %886 = vmatprep.subr.bf16.mxu0 0
        %887 = vmatpush2.bf16.xpose.msra.mxu0 0
        %888 = vmatprep.subr.bf16.mxu0 0
        %889 = vmatpush2.bf16.xpose.msra.mxu0 0
        %890 = vmatprep.subr.bf16.mxu0 0
        %891 = vmatpush2.bf16.xpose.msra.mxu0 0
        %892 = vmatprep.subr.bf16.mxu0 0
        %893 = vmatpush2.bf16.xpose.msra.mxu0 0
        %894 = vmatprep.subr.bf16.mxu0 0
        %895 = vmatpush2.bf16.xpose.msra.mxu0 0
        %896 = vmatprep.subr.bf16.mxu0 0
        %897 = vmatpush2.bf16.xpose.msra.mxu0 0
        %898 = vmatprep.mubr.bf16.mxu0 0
        %899 = vmatmul.mubr.bf16.gmra.mxu0 %v861
        %v900 = vpop.f32.mrf.mxu0
        %v901 = vadd.f32 0.0, %v900
        %v902 = vpop.f32.mrf.mxu0
        %v903 = vpop.f32.mrf.mxu0
        %v904 = vadd.f32 0.0, %v903
        %v905 = vpop.f32.mrf.mxu0
        %906 = vdwg.mxu0
        %907 = vrot.lane.b32.xlu0 %v374, 64
        %v908 = vpop.permute.xlu0 %907
        %909 = vrot.lane.b32.xlu0 %v376, 64
        %v910 = vpop.permute.xlu0 %909
        %v912 = vsel %vm264, %v908, 0
        %v915 = vsel %vm264, %v910, 0
        %917 = vmatprep.subr.bf16.mxu0 0
        %918 = vmatpush1.bf16.xpose.msra.mxu0 0
        %919 = vmatprep.subr.bf16.mxu0 0
        %920 = vmatpush1.bf16.xpose.msra.mxu0 0
        %921 = vmatprep.subr.bf16.mxu0 0
        %922 = vmatpush1.bf16.xpose.msra.mxu0 0
        %923 = vmatprep.subr.bf16.mxu0 0
        %924 = vmatpush1.bf16.xpose.msra.mxu0 0
        %925 = vmatprep.subr.bf16.mxu0 0
        %926 = vmatpush1.bf16.xpose.msra.mxu0 0
        %927 = vmatprep.subr.bf16.mxu0 0
        %928 = vmatpush1.bf16.xpose.msra.mxu0 0
        %929 = vmatprep.subr.bf16.mxu0 0
        %930 = vmatpush1.bf16.xpose.msra.mxu0 0
        %931 = vmatprep.subr.bf16.mxu0 0
        %932 = vmatpush1.bf16.xpose.msra.mxu0 %v915
        %933 = vmatprep.subr.bf16.mxu0 0
        %934 = vmatpush2.bf16.xpose.msra.mxu0 0
        %935 = vmatprep.subr.bf16.mxu0 0
        %936 = vmatpush2.bf16.xpose.msra.mxu0 0
        %937 = vmatprep.subr.bf16.mxu0 0
        %938 = vmatpush2.bf16.xpose.msra.mxu0 0
        %939 = vmatprep.subr.bf16.mxu0 0
        %940 = vmatpush2.bf16.xpose.msra.mxu0 0
        %941 = vmatprep.subr.bf16.mxu0 0
        %942 = vmatpush2.bf16.xpose.msra.mxu0 0
        %943 = vmatprep.subr.bf16.mxu0 0
        %944 = vmatpush2.bf16.xpose.msra.mxu0 0
        %945 = vmatprep.subr.bf16.mxu0 0
        %946 = vmatpush2.bf16.xpose.msra.mxu0 0
        %947 = vmatprep.subr.bf16.mxu0 0
        %948 = vmatpush2.bf16.xpose.msra.mxu0 0
        %949 = vmatprep.mubr.bf16.mxu0 0
        %950 = vmatmul.mubr.bf16.gmra.mxu0 %v912
        %v951 = vpop.f32.mrf.mxu0
        %v952 = vadd.f32 0.0, %v951
        %v953 = vpop.f32.mrf.mxu0
        %v954 = vpop.f32.mrf.mxu0
        %v955 = vadd.f32 0.0, %v954
        %v956 = vpop.f32.mrf.mxu0
        %957 = vdwg.mxu0
        %v958 = vsel %vm473, %v901, -inf
        %959 = vmax.xlane.f32.xlu0 %v958
        %v960 = vpop.xlane.xlu0 %959
        %v961 = vsel %vm473, %v904, -inf
        %962 = vmax.xlane.f32.xlu0 %v961
        %v963 = vpop.xlane.xlu0 %962
        %v964 = vsel %vm473, %v952, -inf
        %965 = vmax.xlane.f32.xlu0 %v964
        %v966 = vpop.xlane.xlu0 %965
        %v967 = vsel %vm473, %v955, -inf
        %968 = vmax.xlane.f32.xlu0 %v967
        %v969 = vpop.xlane.xlu0 %968
        %v970 = vsub.f32 %v901, %v960
        %v971 = vsub.f32 %v904, %v963
        %v972 = vsub.f32 %v952, %v966
        %v973 = vsub.f32 %v955, %v969
        %v974 = vmul.f32 %v970, 1.442695
        %v975 = vpow.pop %v974
        %v976 = vmul.f32 %v971, 1.442695
        %v977 = vpow.pop %v976
        %v978 = vmul.f32 %v972, 1.442695
        %v979 = vpow.pop %v978
        %v980 = vmul.f32 %v973, 1.442695
        %v981 = vpow.pop %v980
        %v982 = vsel %vm473, %v975, 0.0
        %983 = vadd.xlane.f32.xlu0 %v982
        %v984 = vpop.xlane.xlu0 %983
        %v985 = vsel %vm473, %v977, 0.0
        %986 = vadd.xlane.f32.xlu0 %v985
        %v987 = vpop.xlane.xlu0 %986
        %v988 = vsel %vm473, %v979, 0.0
        %989 = vadd.xlane.f32.xlu0 %v988
        %v990 = vpop.xlane.xlu0 %989
        %v991 = vsel %vm473, %v981, 0.0
        %992 = vadd.xlane.f32.xlu0 %v991
        %v993 = vpop.xlane.xlu0 %992
        %v994 = vpack.c.bf16 %v977, %v975
        %v995 = vpack.c.bf16 %v981, %v979
        %996 = vrot.lane.b32.xlu0 %v377, 64
        %v997 = vpop.permute.xlu0 %996
        %v1000 = vsel %vm473, %v994, 0
        %1002 = vmatprep.subr.bf16.mxu0 0
        %1003 = vmatpush1.bf16.msra.mxu0 0
        %1004 = vmatprep.subr.bf16.mxu0 0
        %1005 = vmatpush1.bf16.msra.mxu0 0
        %1006 = vmatprep.subr.bf16.mxu0 0
        %1007 = vmatpush1.bf16.msra.mxu0 0
        %1008 = vmatprep.subr.bf16.mxu0 0
        %1009 = vmatpush1.bf16.msra.mxu0 0
        %1010 = vmatprep.subr.bf16.mxu0 0
        %1011 = vmatpush1.bf16.msra.mxu0 0
        %1012 = vmatprep.subr.bf16.mxu0 0
        %1013 = vmatpush1.bf16.msra.mxu0 0
        %1014 = vmatprep.subr.bf16.mxu0 0
        %1015 = vmatpush1.bf16.msra.mxu0 0
        %1016 = vmatprep.subr.bf16.mxu0 0
        %1017 = vmatpush1.bf16.msra.mxu0 %v997
        %1018 = vmatprep.subr.bf16.mxu0 0
        %1019 = vmatpush2.bf16.msra.mxu0 0
        %1020 = vmatprep.subr.bf16.mxu0 0
        %1021 = vmatpush2.bf16.msra.mxu0 0
        %1022 = vmatprep.subr.bf16.mxu0 0
        %1023 = vmatpush2.bf16.msra.mxu0 0
        %1024 = vmatprep.subr.bf16.mxu0 0
        %1025 = vmatpush2.bf16.msra.mxu0 0
        %1026 = vmatprep.subr.bf16.mxu0 0
        %1027 = vmatpush2.bf16.msra.mxu0 0
        %1028 = vmatprep.subr.bf16.mxu0 0
        %1029 = vmatpush2.bf16.msra.mxu0 0
        %1030 = vmatprep.subr.bf16.mxu0 0
        %1031 = vmatpush2.bf16.msra.mxu0 0
        %1032 = vmatprep.subr.bf16.mxu0 0
        %1033 = vmatpush2.bf16.msra.mxu0 0
        %1034 = vmatprep.mubr.bf16.mxu0 0
        %1035 = vmatmul.mubr.bf16.gmra.mxu0 %v1000
        %v1036 = vpop.f32.mrf.mxu0
        %v1037 = vadd.f32 0.0, %v1036
        %v1038 = vpop.f32.mrf.mxu0
        %v1039 = vpop.f32.mrf.mxu0
        %v1040 = vadd.f32 0.0, %v1039
        %v1041 = vpop.f32.mrf.mxu0
        %1042 = vdwg.mxu0
        %1043 = vrot.lane.b32.xlu0 %v378, 64
        %v1044 = vpop.permute.xlu0 %1043
        %v1047 = vsel %vm473, %v995, 0
        %1049 = vmatprep.subr.bf16.mxu0 0
        %1050 = vmatpush1.bf16.msra.mxu0 0
        %1051 = vmatprep.subr.bf16.mxu0 0
        %1052 = vmatpush1.bf16.msra.mxu0 0
        %1053 = vmatprep.subr.bf16.mxu0 0
        %1054 = vmatpush1.bf16.msra.mxu0 0
        %1055 = vmatprep.subr.bf16.mxu0 0
        %1056 = vmatpush1.bf16.msra.mxu0 0
        %1057 = vmatprep.subr.bf16.mxu0 0
        %1058 = vmatpush1.bf16.msra.mxu0 0
        %1059 = vmatprep.subr.bf16.mxu0 0
        %1060 = vmatpush1.bf16.msra.mxu0 0
        %1061 = vmatprep.subr.bf16.mxu0 0
        %1062 = vmatpush1.bf16.msra.mxu0 0
        %1063 = vmatprep.subr.bf16.mxu0 0
        %1064 = vmatpush1.bf16.msra.mxu0 %v1044
        %1065 = vmatprep.subr.bf16.mxu0 0
        %1066 = vmatpush2.bf16.msra.mxu0 0
        %1067 = vmatprep.subr.bf16.mxu0 0
        %1068 = vmatpush2.bf16.msra.mxu0 0
        %1069 = vmatprep.subr.bf16.mxu0 0
        %1070 = vmatpush2.bf16.msra.mxu0 0
        %1071 = vmatprep.subr.bf16.mxu0 0
        %1072 = vmatpush2.bf16.msra.mxu0 0
        %1073 = vmatprep.subr.bf16.mxu0 0
        %1074 = vmatpush2.bf16.msra.mxu0 0
        %1075 = vmatprep.subr.bf16.mxu0 0
        %1076 = vmatpush2.bf16.msra.mxu0 0
        %1077 = vmatprep.subr.bf16.mxu0 0
        %1078 = vmatpush2.bf16.msra.mxu0 0
        %1079 = vmatprep.subr.bf16.mxu0 0
        %1080 = vmatpush2.bf16.msra.mxu0 0
        %1081 = vmatprep.mubr.bf16.mxu0 0
        %1082 = vmatmul.mubr.bf16.gmra.mxu0 %v1047
        %v1083 = vpop.f32.mrf.mxu0
        %v1084 = vadd.f32 0.0, %v1083
        %v1085 = vpop.f32.mrf.mxu0
        %v1086 = vpop.f32.mrf.mxu0
        %v1087 = vadd.f32 0.0, %v1086
        %v1088 = vpop.f32.mrf.mxu0
        %1089 = vdwg.mxu0
        %v1090 = vrcp.pop %v984
        %v1091 = vrcp.pop %v987
        %v1092 = vrcp.pop %v990
        %v1093 = vrcp.pop %v993
        %v1094 = vmul.f32 %v1037, %v1090
        %v1095 = vmul.f32 %v1040, %v1091
        %v1096 = vmul.f32 %v1084, %v1092
        %v1097 = vmul.f32 %v1087, %v1093
        %1098 = vrot.lane.b32.xlu0 %v373, 32
        %v1099 = vpop.permute.xlu0 %1098
        %1100 = vrot.lane.b32.xlu0 %v375, 32
        %v1101 = vpop.permute.xlu0 %1100
        %v1103 = vsel %vm264, %v1099, 0
        %v1106 = vsel %vm264, %v1101, 0
        %1108 = vmatprep.subr.bf16.mxu0 0
        %1109 = vmatpush1.bf16.xpose.msra.mxu0 0
        %1110 = vmatprep.subr.bf16.mxu0 0
        %1111 = vmatpush1.bf16.xpose.msra.mxu0 0
        %1112 = vmatprep.subr.bf16.mxu0 0
        %1113 = vmatpush1.bf16.xpose.msra.mxu0 0
        %1114 = vmatprep.subr.bf16.mxu0 0
        %1115 = vmatpush1.bf16.xpose.msra.mxu0 0
        %1116 = vmatprep.subr.bf16.mxu0 0
        %1117 = vmatpush1.bf16.xpose.msra.mxu0 0
        %1118 = vmatprep.subr.bf16.mxu0 0
        %1119 = vmatpush1.bf16.xpose.msra.mxu0 0
        %1120 = vmatprep.subr.bf16.mxu0 0
        %1121 = vmatpush1.bf16.xpose.msra.mxu0 0
        %1122 = vmatprep.subr.bf16.mxu0 0
        %1123 = vmatpush1.bf16.xpose.msra.mxu0 %v1106
        %1124 = vmatprep.subr.bf16.mxu0 0
        %1125 = vmatpush2.bf16.xpose.msra.mxu0 0
        %1126 = vmatprep.subr.bf16.mxu0 0
        %1127 = vmatpush2.bf16.xpose.msra.mxu0 0
        %1128 = vmatprep.subr.bf16.mxu0 0
        %1129 = vmatpush2.bf16.xpose.msra.mxu0 0
        %1130 = vmatprep.subr.bf16.mxu0 0
        %1131 = vmatpush2.bf16.xpose.msra.mxu0 0
        %1132 = vmatprep.subr.bf16.mxu0 0
        %1133 = vmatpush2.bf16.xpose.msra.mxu0 0
        %1134 = vmatprep.subr.bf16.mxu0 0
        %1135 = vmatpush2.bf16.xpose.msra.mxu0 0
        %1136 = vmatprep.subr.bf16.mxu0 0
        %1137 = vmatpush2.bf16.xpose.msra.mxu0 0
        %1138 = vmatprep.subr.bf16.mxu0 0
        %1139 = vmatpush2.bf16.xpose.msra.mxu0 0
        %1140 = vmatprep.mubr.bf16.mxu0 0
        %1141 = vmatmul.mubr.bf16.gmra.mxu0 %v1103
        %v1142 = vpop.f32.mrf.mxu0
        %v1143 = vadd.f32 0.0, %v1142
        %v1144 = vpop.f32.mrf.mxu0
        %v1145 = vpop.f32.mrf.mxu0
        %v1146 = vadd.f32 0.0, %v1145
        %v1147 = vpop.f32.mrf.mxu0
        %1148 = vdwg.mxu0
        %1149 = vrot.lane.b32.xlu0 %v374, 32
        %v1150 = vpop.permute.xlu0 %1149
        %1151 = vrot.lane.b32.xlu0 %v376, 32
        %v1152 = vpop.permute.xlu0 %1151
        %v1154 = vsel %vm264, %v1150, 0
        %v1157 = vsel %vm264, %v1152, 0
        %1159 = vmatprep.subr.bf16.mxu0 0
        %1160 = vmatpush1.bf16.xpose.msra.mxu0 0
        %1161 = vmatprep.subr.bf16.mxu0 0
        %1162 = vmatpush1.bf16.xpose.msra.mxu0 0
        %1163 = vmatprep.subr.bf16.mxu0 0
        %1164 = vmatpush1.bf16.xpose.msra.mxu0 0
        %1165 = vmatprep.subr.bf16.mxu0 0
        %1166 = vmatpush1.bf16.xpose.msra.mxu0 0
        %1167 = vmatprep.subr.bf16.mxu0 0
        %1168 = vmatpush1.bf16.xpose.msra.mxu0 0
        %1169 = vmatprep.subr.bf16.mxu0 0
        %1170 = vmatpush1.bf16.xpose.msra.mxu0 0
        %1171 = vmatprep.subr.bf16.mxu0 0
        %1172 = vmatpush1.bf16.xpose.msra.mxu0 0
        %1173 = vmatprep.subr.bf16.mxu0 0
        %1174 = vmatpush1.bf16.xpose.msra.mxu0 %v1157
        %1175 = vmatprep.subr.bf16.mxu0 0
        %1176 = vmatpush2.bf16.xpose.msra.mxu0 0
        %1177 = vmatprep.subr.bf16.mxu0 0
        %1178 = vmatpush2.bf16.xpose.msra.mxu0 0
        %1179 = vmatprep.subr.bf16.mxu0 0
        %1180 = vmatpush2.bf16.xpose.msra.mxu0 0
        %1181 = vmatprep.subr.bf16.mxu0 0
        %1182 = vmatpush2.bf16.xpose.msra.mxu0 0
        %1183 = vmatprep.subr.bf16.mxu0 0
        %1184 = vmatpush2.bf16.xpose.msra.mxu0 0
        %1185 = vmatprep.subr.bf16.mxu0 0
        %1186 = vmatpush2.bf16.xpose.msra.mxu0 0
        %1187 = vmatprep.subr.bf16.mxu0 0
        %1188 = vmatpush2.bf16.xpose.msra.mxu0 0
        %1189 = vmatprep.subr.bf16.mxu0 0
        %1190 = vmatpush2.bf16.xpose.msra.mxu0 0
        %1191 = vmatprep.mubr.bf16.mxu0 0
        %1192 = vmatmul.mubr.bf16.gmra.mxu0 %v1154
        %v1193 = vpop.f32.mrf.mxu0
        %v1194 = vadd.f32 0.0, %v1193
        %v1195 = vpop.f32.mrf.mxu0
        %v1196 = vpop.f32.mrf.mxu0
        %v1197 = vadd.f32 0.0, %v1196
        %v1198 = vpop.f32.mrf.mxu0
        %1199 = vdwg.mxu0
        %v1200 = vsel %vm473, %v1143, -inf
        %1201 = vmax.xlane.f32.xlu0 %v1200
        %v1202 = vpop.xlane.xlu0 %1201
        %v1203 = vsel %vm473, %v1146, -inf
        %1204 = vmax.xlane.f32.xlu0 %v1203
        %v1205 = vpop.xlane.xlu0 %1204
        %v1206 = vsel %vm473, %v1194, -inf
        %1207 = vmax.xlane.f32.xlu0 %v1206
        %v1208 = vpop.xlane.xlu0 %1207
        %v1209 = vsel %vm473, %v1197, -inf
        %1210 = vmax.xlane.f32.xlu0 %v1209
        %v1211 = vpop.xlane.xlu0 %1210
        %v1212 = vsub.f32 %v1143, %v1202
        %v1213 = vsub.f32 %v1146, %v1205
        %v1214 = vsub.f32 %v1194, %v1208
        %v1215 = vsub.f32 %v1197, %v1211
        %v1216 = vmul.f32 %v1212, 1.442695
        %v1217 = vpow.pop %v1216
        %v1218 = vmul.f32 %v1213, 1.442695
        %v1219 = vpow.pop %v1218
        %v1220 = vmul.f32 %v1214, 1.442695
        %v1221 = vpow.pop %v1220
        %v1222 = vmul.f32 %v1215, 1.442695
        %v1223 = vpow.pop %v1222
        %v1224 = vsel %vm473, %v1217, 0.0
        %1225 = vadd.xlane.f32.xlu0 %v1224
        %v1226 = vpop.xlane.xlu0 %1225
        %v1227 = vsel %vm473, %v1219, 0.0
        %1228 = vadd.xlane.f32.xlu0 %v1227
        %v1229 = vpop.xlane.xlu0 %1228
        %v1230 = vsel %vm473, %v1221, 0.0
        %1231 = vadd.xlane.f32.xlu0 %v1230
        %v1232 = vpop.xlane.xlu0 %1231
        %v1233 = vsel %vm473, %v1223, 0.0
        %1234 = vadd.xlane.f32.xlu0 %v1233
        %v1235 = vpop.xlane.xlu0 %1234
        %v1236 = vpack.c.bf16 %v1219, %v1217
        %v1237 = vpack.c.bf16 %v1223, %v1221
        %1238 = vrot.lane.b32.xlu0 %v377, 32
        %v1239 = vpop.permute.xlu0 %1238
        %v1242 = vsel %vm473, %v1236, 0
        %1244 = vmatprep.subr.bf16.mxu0 0
        %1245 = vmatpush1.bf16.msra.mxu0 0
        %1246 = vmatprep.subr.bf16.mxu0 0
        %1247 = vmatpush1.bf16.msra.mxu0 0
        %1248 = vmatprep.subr.bf16.mxu0 0
        %1249 = vmatpush1.bf16.msra.mxu0 0
        %1250 = vmatprep.subr.bf16.mxu0 0
        %1251 = vmatpush1.bf16.msra.mxu0 0
        %1252 = vmatprep.subr.bf16.mxu0 0
        %1253 = vmatpush1.bf16.msra.mxu0 0
        %1254 = vmatprep.subr.bf16.mxu0 0
        %1255 = vmatpush1.bf16.msra.mxu0 0
        %1256 = vmatprep.subr.bf16.mxu0 0
        %1257 = vmatpush1.bf16.msra.mxu0 0
        %1258 = vmatprep.subr.bf16.mxu0 0
        %1259 = vmatpush1.bf16.msra.mxu0 %v1239
        %1260 = vmatprep.subr.bf16.mxu0 0
        %1261 = vmatpush2.bf16.msra.mxu0 0
        %1262 = vmatprep.subr.bf16.mxu0 0
        %1263 = vmatpush2.bf16.msra.mxu0 0
        %1264 = vmatprep.subr.bf16.mxu0 0
        %1265 = vmatpush2.bf16.msra.mxu0 0
        %1266 = vmatprep.subr.bf16.mxu0 0
        %1267 = vmatpush2.bf16.msra.mxu0 0
        %1268 = vmatprep.subr.bf16.mxu0 0
        %1269 = vmatpush2.bf16.msra.mxu0 0
        %1270 = vmatprep.subr.bf16.mxu0 0
        %1271 = vmatpush2.bf16.msra.mxu0 0
        %1272 = vmatprep.subr.bf16.mxu0 0
        %1273 = vmatpush2.bf16.msra.mxu0 0
        %1274 = vmatprep.subr.bf16.mxu0 0
        %1275 = vmatpush2.bf16.msra.mxu0 0
        %1276 = vmatprep.mubr.bf16.mxu0 0
        %1277 = vmatmul.mubr.bf16.gmra.mxu0 %v1242
        %v1278 = vpop.f32.mrf.mxu0
        %v1279 = vadd.f32 0.0, %v1278
        %v1280 = vpop.f32.mrf.mxu0
        %v1281 = vpop.f32.mrf.mxu0
        %v1282 = vadd.f32 0.0, %v1281
        %v1283 = vpop.f32.mrf.mxu0
        %1284 = vdwg.mxu0
        %1285 = vrot.lane.b32.xlu0 %v378, 32
        %v1286 = vpop.permute.xlu0 %1285
        %v1289 = vsel %vm473, %v1237, 0
        %1291 = vmatprep.subr.bf16.mxu0 0
        %1292 = vmatpush1.bf16.msra.mxu0 0
        %1293 = vmatprep.subr.bf16.mxu0 0
        %1294 = vmatpush1.bf16.msra.mxu0 0
        %1295 = vmatprep.subr.bf16.mxu0 0
        %1296 = vmatpush1.bf16.msra.mxu0 0
        %1297 = vmatprep.subr.bf16.mxu0 0
        %1298 = vmatpush1.bf16.msra.mxu0 0
        %1299 = vmatprep.subr.bf16.mxu0 0
        %1300 = vmatpush1.bf16.msra.mxu0 0
        %1301 = vmatprep.subr.bf16.mxu0 0
        %1302 = vmatpush1.bf16.msra.mxu0 0
        %1303 = vmatprep.subr.bf16.mxu0 0
        %1304 = vmatpush1.bf16.msra.mxu0 0
        %1305 = vmatprep.subr.bf16.mxu0 0
        %1306 = vmatpush1.bf16.msra.mxu0 %v1286
        %1307 = vmatprep.subr.bf16.mxu0 0
        %1308 = vmatpush2.bf16.msra.mxu0 0
        %1309 = vmatprep.subr.bf16.mxu0 0
        %1310 = vmatpush2.bf16.msra.mxu0 0
        %1311 = vmatprep.subr.bf16.mxu0 0
        %1312 = vmatpush2.bf16.msra.mxu0 0
        %1313 = vmatprep.subr.bf16.mxu0 0
        %1314 = vmatpush2.bf16.msra.mxu0 0
        %1315 = vmatprep.subr.bf16.mxu0 0
        %1316 = vmatpush2.bf16.msra.mxu0 0
        %1317 = vmatprep.subr.bf16.mxu0 0
        %1318 = vmatpush2.bf16.msra.mxu0 0
        %1319 = vmatprep.subr.bf16.mxu0 0
        %1320 = vmatpush2.bf16.msra.mxu0 0
        %1321 = vmatprep.subr.bf16.mxu0 0
        %1322 = vmatpush2.bf16.msra.mxu0 0
        %1323 = vmatprep.mubr.bf16.mxu0 0
        %1324 = vmatmul.mubr.bf16.gmra.mxu0 %v1289
        %v1325 = vpop.f32.mrf.mxu0
        %v1326 = vadd.f32 0.0, %v1325
        %v1327 = vpop.f32.mrf.mxu0
        %v1328 = vpop.f32.mrf.mxu0
        %v1329 = vadd.f32 0.0, %v1328
        %v1330 = vpop.f32.mrf.mxu0
        %1331 = vdwg.mxu0
        %v1332 = vrcp.pop %v1226
        %v1333 = vrcp.pop %v1229
        %v1334 = vrcp.pop %v1232
        %v1335 = vrcp.pop %v1235
        %v1336 = vmul.f32 %v1279, %v1332
        %v1337 = vmul.f32 %v1282, %v1333
        %v1338 = vmul.f32 %v1326, %v1334
        %v1339 = vmul.f32 %v1329, %v1335
        %1344 = vrot.lane.b32.xlu0 %v852, 32
        %v1345 = vpop.permute.xlu0 %1344
        %1346 = vrot.lane.b32.xlu0 %v853, 32
        %v1347 = vpop.permute.xlu0 %1346
        %1348 = vrot.lane.b32.xlu0 %v854, 32
        %v1349 = vpop.permute.xlu0 %1348
        %1350 = vrot.lane.b32.xlu0 %v855, 32
        %v1351 = vpop.permute.xlu0 %1350
        %1360 = vrot.lane.b32.xlu0 %v1094, 64
        %v1361 = vpop.permute.xlu0 %1360
        %1362 = vrot.lane.b32.xlu0 %v1095, 64
        %v1363 = vpop.permute.xlu0 %1362
        %1364 = vrot.lane.b32.xlu0 %v1096, 64
        %v1365 = vpop.permute.xlu0 %1364
        %1366 = vrot.lane.b32.xlu0 %v1097, 64
        %v1367 = vpop.permute.xlu0 %1366
        %1376 = vrot.lane.b32.xlu0 %v1336, 96
        %v1377 = vpop.permute.xlu0 %1376
        %1378 = vrot.lane.b32.xlu0 %v1337, 96
        %v1379 = vpop.permute.xlu0 %1378
        %1380 = vrot.lane.b32.xlu0 %v1338, 96
        %v1381 = vpop.permute.xlu0 %1380
        %1382 = vrot.lane.b32.xlu0 %v1339, 96
        %v1383 = vpop.permute.xlu0 %1382
        %v1388 = vsel %vm264, %v604, %v1345
        %v1389 = vsel %vm264, %v605, %v1347
        %v1390 = vsel %vm264, %v606, %v1349
        %v1391 = vsel %vm264, %v607, %v1351
        %vm1392 = vcmask 523264
        %v1393 = vsel %vm1392, %v1388, %v1361
        %v1394 = vsel %vm1392, %v1389, %v1363
        %v1395 = vsel %vm1392, %v1390, %v1365
        %v1396 = vsel %vm1392, %v1391, %v1367
        %vm1397 = vcmask 785408
        %v1398 = vsel %vm1397, %v1393, %v1377
        %v1399 = vsel %vm1397, %v1394, %v1379
        %v1400 = vsel %vm1397, %v1395, %v1381
        %v1401 = vsel %vm1397, %v1396, %v1383
        %v1402 = vpack.c.bf16 %v1399, %v1398
        %v1403 = vpack.c.bf16 %v1401, %v1400
        %v1404 = vld [vmem:[%s2] sm:$0xf]
        %v1405 = vld [vmem:[%s2 + $0x4] sm:$0xf]
        %v1406 = vld [vmem:[%s2 + $0x8] sm:$0xf]
        %v1407 = vld [vmem:[%s2 + $0xc] sm:$0xf]
        %v1408 = vld [vmem:[%s2 + $0x10] sm:$0xf]
        %v1409 = vld [vmem:[%s2 + $0x14] sm:$0xf]
        %v1410 = vld [vmem:[%s2 + $0x18] sm:$0xf]
        %v1411 = vld [vmem:[%s2 + $0x1c] sm:$0xf]
        %v1412 = vld [vmem:[%s2 + $0x20] sm:$0xf]
        %v1413 = vld [vmem:[%s2 + $0x24] sm:$0xf]
        %v1414 = vld [vmem:[%s2 + $0x28] sm:$0xf]
        %v1415 = vld [vmem:[%s2 + $0x2c] sm:$0xf]
        %v1416 = vld [vmem:[%s2 + $0x30] sm:$0xf]
        %v1417 = vld [vmem:[%s2 + $0x34] sm:$0xf]
        %v1418 = vld [vmem:[%s2 + $0x38] sm:$0xf]
        %v1419 = vld [vmem:[%s2 + $0x3c] sm:$0xf]
        %v1420 = vld [vmem:[%s3] sm:$0x1]
        %v1422 = vlaneseq
        %v1423 = vshrl.u32 %v1422, 7
        %v1424 = vsub.s32 0, %v1423
        %v1425 = vrot.slane %v1420, %v1424
        %v1443 = vunpack.c.l.b16 %v1404
        %v1444 = vunpack.c.l.b16 %v1405
        %v1445 = vunpack.c.l.b16 %v1406
        %v1446 = vunpack.c.l.b16 %v1407
        %v1447 = vunpack.c.l.b16 %v1408
        %v1448 = vunpack.c.l.b16 %v1409
        %v1449 = vunpack.c.l.b16 %v1410
        %v1450 = vunpack.c.l.b16 %v1411
        %v1451 = vunpack.c.l.b16 %v1412
        %v1452 = vunpack.c.l.b16 %v1413
        %v1453 = vunpack.c.l.b16 %v1414
        %v1454 = vunpack.c.l.b16 %v1415
        %v1455 = vunpack.c.l.b16 %v1416
        %v1456 = vunpack.c.l.b16 %v1417
        %v1457 = vunpack.c.l.b16 %v1418
        %v1458 = vunpack.c.l.b16 %v1419
        %v1459 = vpack.c.b16 %v1444, %v1443
        %v1460 = vpack.c.b16 %v1446, %v1445
        %v1461 = vpack.c.b16 %v1448, %v1447
        %v1462 = vpack.c.b16 %v1450, %v1449
        %v1463 = vpack.c.b16 %v1452, %v1451
        %v1464 = vpack.c.b16 %v1454, %v1453
        %v1465 = vpack.c.b16 %v1456, %v1455
        %v1466 = vpack.c.b16 %v1458, %v1457
        %1475 = vmatprep.subr.bf16.mxu0 0
        %1476 = vmatpush1.bf16.msra.mxu0 %v1466
        %1477 = vmatprep.subr.bf16.mxu0 0
        %1478 = vmatpush1.bf16.msra.mxu0 %v1465
        %1479 = vmatprep.subr.bf16.mxu0 0
        %1480 = vmatpush1.bf16.msra.mxu0 %v1464
        %1481 = vmatprep.subr.bf16.mxu0 0
        %1482 = vmatpush1.bf16.msra.mxu0 %v1463
        %1483 = vmatprep.subr.bf16.mxu0 0
        %1484 = vmatpush1.bf16.msra.mxu0 %v1462
        %1485 = vmatprep.subr.bf16.mxu0 0
        %1486 = vmatpush1.bf16.msra.mxu0 %v1461
        %1487 = vmatprep.subr.bf16.mxu0 0
        %1488 = vmatpush1.bf16.msra.mxu0 %v1460
        %1489 = vmatprep.subr.bf16.mxu0 0
        %1490 = vmatpush1.bf16.msra.mxu0 %v1459
        %1491 = vmatprep.subr.bf16.mxu0 0
        %1492 = vmatpush2.bf16.msra.mxu0 0
        %1493 = vmatprep.subr.bf16.mxu0 0
        %1494 = vmatpush2.bf16.msra.mxu0 0
        %1495 = vmatprep.subr.bf16.mxu0 0
        %1496 = vmatpush2.bf16.msra.mxu0 0
        %1497 = vmatprep.subr.bf16.mxu0 0
        %1498 = vmatpush2.bf16.msra.mxu0 0
        %1499 = vmatprep.subr.bf16.mxu0 0
        %1500 = vmatpush2.bf16.msra.mxu0 0
        %1501 = vmatprep.subr.bf16.mxu0 0
        %1502 = vmatpush2.bf16.msra.mxu0 0
        %1503 = vmatprep.subr.bf16.mxu0 0
        %1504 = vmatpush2.bf16.msra.mxu0 0
        %1505 = vmatprep.subr.bf16.mxu0 0
        %1506 = vmatpush2.bf16.msra.mxu0 0
        %1507 = vmatprep.mubr.bf16.mxu0 0
        %1508 = vmatmul.mubr.bf16.gmra.mxu0 %v1402
        %v1509 = vpop.f32.mrf.mxu0
        %v1510 = vadd.f32 %v1425, %v1509
        %v1511 = vpop.f32.mrf.mxu0
        %v1512 = vpop.f32.mrf.mxu0
        %v1513 = vadd.f32 %v1425, %v1512
        %v1514 = vpop.f32.mrf.mxu0
        %1515 = vmatprep.mubr.bf16.mxu0 0
        %1516 = vmatmul.mubr.bf16.gmra.mxu0 %v1403
        %v1517 = vpop.f32.mrf.mxu0
        %v1518 = vadd.f32 %v1425, %v1517
        %v1519 = vpop.f32.mrf.mxu0
        %v1520 = vpop.f32.mrf.mxu0
        %v1521 = vadd.f32 %v1425, %v1520
        %v1522 = vpop.f32.mrf.mxu0
        %1523 = vdwg.mxu0
        %1524 = vst.msk [vmem:[%s208] sm:$0xff] %vm264, %v1510
        %1525 = vst.msk [vmem:[%s208 + $0x8] sm:$0xff] %vm264, %v1513
        %1526 = vst.msk [vmem:[%s208 + $0x10] sm:$0xff] %vm264, %v1518
        %1527 = vst.msk [vmem:[%s208 + $0x18] sm:$0xff] %vm264, %v1521
        %s1528 = sand.u32 %s116, 1
        %s1529 = scalar_lea.sflag [#allocation4], %s1528
        %s1530 = sand.u32 %s116, 1
        %s1531 = smul.addr %s1530, 32
        %s1532 = scalar_lea.vmem [#allocation5], %s1531
        // Predicated region
        $region41: #{tpu_custom_call.1} parent=35 // pred_check
          %p1533 = pneg %p126
        $region42: #{tpu_custom_call.1} parent=35 // pred_check_branch
          %1535 = sbr.rel (%p1533) target = $region44
        $region43: #{tpu_custom_call.1} parent=35 // pred_region
          %s1536 = smul.u32 2, %s19
          %s1538 = ssub.s32 512, 512
          %1539 = vsyncadd %s1529, %s1538
          %s1540 = smul.addr %s1536, 2
          %s1541 = smul.addr %s1540, 128
          %s1542 = scalar_lea.hbm %s4, %s1541
          %s1543 = sshll.u32 %s1532, 4
          %s1544 = int_to_ptr.vmem [resolvable:$true] %s1543
          %1549 = dma.vmem_to_hbm [thread:$0]  %s1544, 512, %s1542, %s1529, 128, 128, 8
        $region44: #{tpu_custom_call.1} parent=35 // pred_fallthru
          _
      $region36: #{tpu_custom_call.1} parent=5 // pred_fallthru
        _
      %p1550 = scmp.le.s32.totalorder 2, %s14
      // Predicated region
      $region45: #{tpu_custom_call.1} parent=5 // pred_check
        %p1551 = pneg %p1550
      $region46: #{tpu_custom_call.1} parent=5 // pred_check_branch
        %1553 = sbr.rel (%p1551) target = $region48
      $region47: #{tpu_custom_call.1} parent=5 // pred_region
        %s1554 = ssub.s32 %s14, 2
        // Predicated region
        $region49: #{tpu_custom_call.1} parent=47 // pred_check
          %p1555 = pneg %p132
        $region50: #{tpu_custom_call.1} parent=47 // pred_check_branch
          %1557 = sbr.rel (%p1555) target = $region52
        $region51: #{tpu_custom_call.1} parent=47 // pred_region
          %s1558 = sand.u32 %s117, 1
          %s1559 = scalar_lea.sflag [#allocation4], %s1558
          %s1560 = sand.u32 %s117, 1
          %s1561 = smul.addr %s1560, 32
          %s1562 = scalar_lea.vmem [#allocation5], %s1561
          %1563 = dma.done %s1559, 512
        $region52: #{tpu_custom_call.1} parent=47 // pred_fallthru
          _
      $region48: #{tpu_custom_call.1} parent=5 // pred_fallthru
        _
    $region6: #{tpu_custom_call.1} parent=1 // loop_footer
      %s18 = sadd.s32 1, %s14
    $region7: #{tpu_custom_call.1} parent=1 // loop_footer_branch
      %13 = sbr.rel target = $region3
    $region8: #{tpu_custom_call.1} parent=1 // loop_exit
      _
    %1564 = vsyncpa [#allocation3], 1
    %s1565 = scalar_lea.sflag [#allocation3], 1
    %1566 = vsyncpa %s1565, 1
    %1567 = vsyncpa [#allocation4], 1
    %s1568 = scalar_lea.sflag [#allocation4], 1
    %1569 = vsyncpa %s1568, 1

</llo_original>
